<compile_context>
chip_gen: v6e
topology: v6e:2x2x1
jax: 0.10.0
libtpu: 0.0.40
codegen_flags: <defaults>
</compile_context>

<pallas_src>
import functools

import jax
import jax.numpy as jnp
from jax import lax
from jax.experimental import pallas as pl
from jax.experimental.pallas import tpu as pltpu

EPS = 1e-5


# --------------------------- hardware-aware sizing --------------------------


def _vmem_budget_bytes():
    """vmem_limit: 48 MiB on 128-MiB-VMEM parts, ~32 MiB on v7x (64 MiB)."""
    cap = 128 * 1024 * 1024
    try:
        cap = int(pltpu.get_tpu_info().vmem_capacity_bytes)
    except Exception:
        pass                                   # non-TPU trace / older jax: keep default
    return int(min(48 * 1024 * 1024, max(cap // 2, 16 * 1024 * 1024)))


def _target_rows_per_tile(vmem_budget):
    # Pass C holds an (R, 1024) f32 conv3 temporary (~4 KiB/row) plus small
    # h1/h2 temps; 2048 rows is comfortable under a 48 MiB budget, 1024 under
    # v7x's tighter one.
    return 2048 if vmem_budget >= 40 * 1024 * 1024 else 1024


def _choose_clouds_per_tile(B, N, target_rows):
    """Whole point clouds per grid step.

    Constraints: B % k == 0 and the row block k*N is sublane-aligned
    ((k*N) % 8 == 0) unless k == B (block == full array dims).  Prefer the
    largest k whose tile fits the row target while keeping >= 2 grid steps
    (so v7x's two TensorCores both get work); relax if impossible.
    """
    divisors = [k for k in range(1, B + 1) if B % k == 0]
    valid = [k for k in divisors if (k * N) % 8 == 0 or k == B]
    fit_par = [k for k in valid if k * N <= target_rows and B // k >= 2]
    if fit_par:
        return max(fit_par)
    fit = [k for k in valid if k * N <= target_rows]
    if fit:
        return max(fit)
    # Nothing fits the row target: take the smallest valid tile.
    # TODO(synk): if N is not a multiple of 8 this can degrade to k == B (one
    # huge tile); masked row padding would be needed to stream it safely.
    return min(valid)


# --------------------------------- kernels ----------------------------------


def _store_col_stats(a, s1_ref, s2_ref):
    """Per-tile column sum and sum-of-squares (one-pass BN statistics)."""
    s1_ref[...] = jnp.sum(a, axis=0, keepdims=True).reshape(1, 1, -1)
    s2_ref[...] = jnp.sum(a * a, axis=0, keepdims=True).reshape(1, 1, -1)


def stats1_kernel(x_ref, w1_ref, s1_ref, s2_ref):
    # conv1 stats only (activation is recomputed downstream, never stored).
    # K = D = 4 -> keep f32 operands; no MXU win at K=4.
    a1 = jnp.dot(x_ref[...], w1_ref[...], preferred_element_type=jnp.float32)
    _store_col_stats(a1, s1_ref, s2_ref)


def stats2_kernel(bn1_ref, x_ref, w1_ref, w2_ref, s1_ref, s2_ref):
    # Recompute conv1, apply global BN1 (scalar scale/shift) + ReLU in f32,
    # conv2 in bf16 with f32 accumulation, emit BN2 stats only.
    a1 = jnp.dot(x_ref[...], w1_ref[...], preferred_element_type=jnp.float32)
    h1 = jnp.maximum(a1 * bn1_ref[0] + bn1_ref[1], 0.0)
    a2 = jnp.dot(h1.astype(jnp.bfloat16), w2_ref[...],
                 preferred_element_type=jnp.float32)
    _store_col_stats(a2, s1_ref, s2_ref)


def conv_pool_kernel(bn1_ref, bn2_ref, x_ref, w1_ref, w2_ref, w3_ref,
                     g_ref, s1_ref, s2_ref, *, clouds_per_tile, points_per_cloud):
    # Full conv1 -> conv2 -> conv3 recompute on the streamed x tile.
    a1 = jnp.dot(x_ref[...], w1_ref[...], preferred_element_type=jnp.float32)
    h1 = jnp.maximum(a1 * bn1_ref[0] + bn1_ref[1], 0.0)
    a2 = jnp.dot(h1.astype(jnp.bfloat16), w2_ref[...],
                 preferred_element_type=jnp.float32)
    h2 = jnp.maximum(a2 * bn2_ref[0] + bn2_ref[1], 0.0)
    a3 = jnp.dot(h2.astype(jnp.bfloat16), w3_ref[...],
                 preferred_element_type=jnp.float32)          # raw conv3 (R, 1024)
    _store_col_stats(a3, s1_ref, s2_ref)
    # MaxPool2d((N, 1)) over each cloud's points on the *raw* conv3 output:
    # BN3 + ReLU are monotone affine with positive scale, so
    # max(relu(bn(a))) == relu(bn(max(a))); BN3/ReLU are deferred to the head.
    c = a3.shape[-1]
    pooled = jnp.max(a3.reshape(clouds_per_tile, points_per_cloud, c), axis=1)
    g_ref[...] = pooled.reshape(1, clouds_per_tile, c)


def fc_head_kernel(bn3_ref, g_ref, fc1w_ref, fc2w_ref, fc3w_ref, const_ref,
                   out_ref):
    def bn_feature(z):
        # BatchNorm1d (train mode): per-feature stats over the batch, one-pass
        # biased variance, gamma=1 / beta=0.
        mu = jnp.mean(z, axis=0, keepdims=True)
        var = jnp.maximum(jnp.mean(z * z, axis=0, keepdims=True) - mu * mu, 0.0)
        return (z - mu) * lax.rsqrt(var + EPS)

    g = jnp.maximum(g_ref[...] * bn3_ref[0] + bn3_ref[1], 0.0)   # deferred BN3+ReLU
    # fc1/fc2 biases omitted: exactly cancelled by train-mode BatchNorm1d
    # (beta=0) mean subtraction.
    z = jnp.dot(g.astype(jnp.bfloat16), fc1w_ref[...],
                preferred_element_type=jnp.float32)
    z = jnp.maximum(bn_feature(z), 0.0)                          # (B, 512)
    z = jnp.dot(z.astype(jnp.bfloat16), fc2w_ref[...],
                preferred_element_type=jnp.float32)
    z = jnp.maximum(bn_feature(z), 0.0)                          # (B, 256)
    z = jnp.dot(z.astype(jnp.bfloat16), fc3w_ref[...],
                preferred_element_type=jnp.float32)
    out_ref[...] = z + const_ref[...]                            # identity + fc3 bias, lane-dense


# --------------------------------- wrapper ----------------------------------


def _bn_scalars(col_sum, col_sumsq, count):
    """Fold per-tile column sums into a global BN scale/shift pair (f32[2])."""
    mean = jnp.sum(col_sum) / count
    var = jnp.maximum(jnp.sum(col_sumsq) / count - mean * mean, 0.0)
    scale = lax.rsqrt(var + EPS)
    return jnp.stack([scale, -mean * scale])                     # y = x*scale + shift


def init_params(key, output_size):
    D = output_size
    P = max(128, ((D * D + 127) // 128) * 128)                   # lane-dense padded head width
    ks = jax.random.split(key, 5)
    # Conv2d weights (Cout, 1, 1, Cin) stored in matmul form (Cin, Cout).
    w1 = jax.random.normal(ks[0], (D, 64), jnp.float32) * 0.10               # f32 (K tiny)
    w2 = (jax.random.normal(ks[1], (64, 128), jnp.float32) * 0.10).astype(jnp.bfloat16)
    w3 = (jax.random.normal(ks[2], (128, 1024), jnp.float32) * 0.05).astype(jnp.bfloat16)
    fc1w = (jax.random.normal(ks[3], (1024, 512), jnp.float32) * 0.02).astype(jnp.bfloat16)
    fc2w = (jax.random.normal(ks[4], (512, 256), jnp.float32) * 0.02).astype(jnp.bfloat16)
    # fc1/fc2 biases are dropped: a per-feature constant immediately followed
    # by train-mode BatchNorm1d (gamma=1, beta=0) is cancelled exactly by the
    # batch-mean subtraction, so they cannot affect the forward output.
    # fc3 weight/bias are zero-filled in the module __init__; the (zero) fc3
    # bias is folded, together with the flattened identity, into head_const.
    fc3w = jnp.zeros((256, P), jnp.bfloat16)
    fc3b_pad = jnp.zeros((1, P), jnp.float32)
    eye_pad = jnp.zeros((1, P), jnp.float32).at[0, :D * D].set(
        jnp.eye(D, dtype=jnp.float32).reshape(-1))
    head_const = eye_pad + fc3b_pad
    return (w1, w2, w3, fc1w, fc2w, fc3w, head_const)


@functools.partial(jax.jit, static_argnums=(2, 3))
def t_net_forward(x_nchw, params, sym_size, output_size):
    """x_nchw: (B, 1, sym_size, output_size) float32 -> (B, 1, D, D)."""
    B, C, N, D = x_nchw.shape
    assert C == 1 and N == sym_size and D == output_size
    w1, w2, w3, fc1w, fc2w, fc3w, head_const = params
    P = head_const.shape[1]

    x_rows = x_nchw.reshape(B * N, D)                     # points-as-rows

    vmem_limit = _vmem_budget_bytes()
    k = _choose_clouds_per_tile(B, N, _target_rows_per_tile(vmem_limit))
    R = k * N                                             # rows per grid step
    T = B // k                                            # grid size

    conv_cparams = pltpu.CompilerParams(
        dimension_semantics=("parallel",),                # row tiles are independent
        vmem_limit_bytes=vmem_limit)
    head_cparams = pltpu.CompilerParams(vmem_limit_bytes=vmem_limit)

    vmem = pl.BlockSpec(memory_space=pltpu.MemorySpace.VMEM)
    smem = pl.BlockSpec(memory_space=pltpu.MemorySpace.SMEM)

    # --- pass A: stream x, emit conv1 column sums only (no activation) ---
    c1_s1, c1_s2 = pl.pallas_call(
        stats1_kernel,
        grid=(T,),
        in_specs=[pl.BlockSpec((R, D), lambda t: (t, 0)),
                  pl.BlockSpec((D, 64), lambda t: (0, 0))],
        out_specs=[pl.BlockSpec((1, 1, 64), lambda t: (t, 0, 0)),
                   pl.BlockSpec((1, 1, 64), lambda t: (t, 0, 0))],
        out_shape=[jax.ShapeDtypeStruct((T, 1, 64), jnp.float32),
                   jax.ShapeDtypeStruct((T, 1, 64), jnp.float32)],
        compiler_params=conv_cparams,
    )(x_rows, w1)
    bn1 = _bn_scalars(c1_s1, c1_s2, float(B * N * 64))

    # --- pass B: recompute conv1, BN1+ReLU, conv2 -> BN2 stats only ---
    c2_s1, c2_s2 = pl.pallas_call(
        stats2_kernel,
        grid=(T,),
        in_specs=[smem,
                  pl.BlockSpec((R, D), lambda t: (t, 0)),
                  pl.BlockSpec((D, 64), lambda t: (0, 0)),
                  pl.BlockSpec((64, 128), lambda t: (0, 0))],
        out_specs=[pl.BlockSpec((1, 1, 128), lambda t: (t, 0, 0)),
                   pl.BlockSpec((1, 1, 128), lambda t: (t, 0, 0))],
        out_shape=[jax.ShapeDtypeStruct((T, 1, 128), jnp.float32),
                   jax.ShapeDtypeStruct((T, 1, 128), jnp.float32)],
        compiler_params=conv_cparams,
    )(bn1, x_rows, w1, w2)
    bn2 = _bn_scalars(c2_s1, c2_s2, float(B * N * 128))

    # --- pass C: full conv chain recompute + fused per-cloud max-pool + BN3 stats ---
    g3, c3_s1, c3_s2 = pl.pallas_call(
        functools.partial(conv_pool_kernel,
                          clouds_per_tile=k, points_per_cloud=N),
        grid=(T,),
        in_specs=[smem, smem,
                  pl.BlockSpec((R, D), lambda t: (t, 0)),
                  pl.BlockSpec((D, 64), lambda t: (0, 0)),
                  pl.BlockSpec((64, 128), lambda t: (0, 0)),
                  pl.BlockSpec((128, 1024), lambda t: (0, 0))],
        out_specs=[pl.BlockSpec((1, k, 1024), lambda t: (t, 0, 0)),
                   pl.BlockSpec((1, 1, 1024), lambda t: (t, 0, 0)),
                   pl.BlockSpec((1, 1, 1024), lambda t: (t, 0, 0))],
        out_shape=[jax.ShapeDtypeStruct((T, k, 1024), jnp.float32),
                   jax.ShapeDtypeStruct((T, 1, 1024), jnp.float32),
                   jax.ShapeDtypeStruct((T, 1, 1024), jnp.float32)],
        compiler_params=conv_cparams,
    )(bn1, bn2, x_rows, w1, w2, w3)
    bn3 = _bn_scalars(c3_s1, c3_s2, float(B * N * 1024))
    g = g3.reshape(B, 1024)                               # raw pooled features

    # --- FC head: deferred BN3+ReLU, fc1/bn/relu, fc2/bn/relu, fc3 + identity ---
    out_pad = pl.pallas_call(
        fc_head_kernel,
        in_specs=[smem] + [vmem] * 5,
        out_specs=vmem,
        out_shape=jax.ShapeDtypeStruct((B, P), jnp.float32),
        compiler_params=head_cparams,
    )(bn3, g, fc1w, fc2w, fc3w, head_const)

    return out_pad[:, :D * D].reshape(B, 1, D, D)         # .unsqueeze(1) equivalent


if __name__ == "__main__":
    B, sym_size, output_size = 2, 16, 4
    key = jax.random.PRNGKey(0)
    kx, kp = jax.random.split(key)

    # PyTorch-style NCHW input: (B, 1, num_points, point_dim)
    x = jax.random.normal(kx, (B, 1, sym_size, output_size), jnp.float32)
    params = init_params(kp, output_size)

    out = t_net_forward(x, params, sym_size, output_size)
    out = jax.block_until_ready(out)

    assert out.shape == (B, 1, output_size, output_size), out.shape
    assert bool(jnp.all(jnp.isfinite(out))), "non-finite output"
    # fc3 weight/bias are zero-filled in the module, so the forward must yield
    # identity matrices regardless of the earlier layers.
    ref = jnp.broadcast_to(jnp.eye(output_size, dtype=jnp.float32),
                           (B, 1, output_size, output_size))
    assert jnp.allclose(out, ref, atol=1e-5), "T_Net output mismatch"
    print("KERNEL_OK")
</pallas_src>

<mosaic_0001>
module attributes {stable_mosaic.version = 11 : i64} {
  func.func @stats1_kernel(%arg0: i32, %arg1: memref<16x4xf32, #tpu.memory_space<vmem>>, %arg2: memref<4x64xf32, #tpu.memory_space<vmem>>, %arg3: memref<1x1x64xf32, #tpu.memory_space<vmem>>, %arg4: memref<1x1x64xf32, #tpu.memory_space<vmem>>) attributes {dimension_semantics = [#tpu.dimension_semantics<parallel>], iteration_bounds = array<i64: 2>, scalar_prefetch = 0 : i64, scratch_operands = 0 : i64, tpu.core_type = #tpu.core_type<tc>, window_params = [{transform_indices = @transform_0, window_bounds = array<i64: 16, 4>}, {pipeline_mode = #tpu.pipeline_mode<synchronous>, transform_indices = @transform_1, window_bounds = array<i64: 4, 64>}, {transform_indices = @transform_2, window_bounds = array<i64: 1, 1, 64>}, {transform_indices = @transform_3, window_bounds = array<i64: 1, 1, 64>}]} {
    %c0 = arith.constant 0 : index
    %c0_0 = arith.constant 0 : index
    %0 = vector.load %arg1[%c0, %c0_0] : memref<16x4xf32, #tpu.memory_space<vmem>>, vector<16x4xf32>
    %c0_1 = arith.constant 0 : index
    %c0_2 = arith.constant 0 : index
    %1 = vector.load %arg2[%c0_1, %c0_2] : memref<4x64xf32, #tpu.memory_space<vmem>>, vector<4x64xf32>
    %cst = arith.constant dense<0.000000e+00> : vector<16x64xf32>
    %2 = tpu.matmul %0, %1, %cst {dimension_numbers = #tpu.dot_dimension_numbers<[1], [0], [0], [1], [0, 0, 1, 1], [], []>} : vector<16x4xf32>, vector<4x64xf32>, vector<16x64xf32> -> vector<16x64xf32>
    %cst_3 = arith.constant dense<0.000000e+00> : vector<64xf32>
    %3 = vector.multi_reduction <add>, %2, %cst_3 [0] : vector<16x64xf32> to vector<64xf32>
    %4 = vector.shape_cast %3 : vector<64xf32> to vector<1x64xf32>
    %5 = vector.shape_cast %4 : vector<1x64xf32> to vector<1x1x64xf32>
    %c0_4 = arith.constant 0 : index
    %c0_5 = arith.constant 0 : index
    %c0_6 = arith.constant 0 : index
    %6 = vector.load %arg3[%c0_4, %c0_5, %c0_6] : memref<1x1x64xf32, #tpu.memory_space<vmem>>, vector<1x1x64xf32>
    tpu.vector_store %arg3[%c0_4, %c0_5, %c0_6], %5 {strides = array<i32>} : memref<1x1x64xf32, #tpu.memory_space<vmem>>, vector<1x1x64xf32>,
    %7 = arith.mulf %2, %2 : vector<16x64xf32>
    %cst_7 = arith.constant dense<0.000000e+00> : vector<64xf32>
    %8 = vector.multi_reduction <add>, %7, %cst_7 [0] : vector<16x64xf32> to vector<64xf32>
    %9 = vector.shape_cast %8 : vector<64xf32> to vector<1x64xf32>
    %10 = vector.shape_cast %9 : vector<1x64xf32> to vector<1x1x64xf32>
    %c0_8 = arith.constant 0 : index
    %c0_9 = arith.constant 0 : index
    %c0_10 = arith.constant 0 : index
    %11 = vector.load %arg4[%c0_8, %c0_9, %c0_10] : memref<1x1x64xf32, #tpu.memory_space<vmem>>, vector<1x1x64xf32>
    tpu.vector_store %arg4[%c0_8, %c0_9, %c0_10], %10 {strides = array<i32>} : memref<1x1x64xf32, #tpu.memory_space<vmem>>, vector<1x1x64xf32>,
    return
  }
  func.func @transform_0(%arg0: i32) -> (i32, i32) {
    %c0_i32 = arith.constant 0 : i32
    %c0_i32_0 = arith.constant 0 : i32
    return %arg0, %c0_i32 : i32, i32
  }
  func.func @transform_1(%arg0: i32) -> (i32, i32) {
    %c0_i32 = arith.constant 0 : i32
    %c0_i32_0 = arith.constant 0 : i32
    %c0_i32_1 = arith.constant 0 : i32
    return %c0_i32, %c0_i32_0 : i32, i32
  }
  func.func @transform_2(%arg0: i32) -> (i32, i32, i32) {
    %c0_i32 = arith.constant 0 : i32
    %c0_i32_0 = arith.constant 0 : i32
    %c0_i32_1 = arith.constant 0 : i32
    return %arg0, %c0_i32, %c0_i32_0 : i32, i32, i32
  }
  func.func @transform_3(%arg0: i32) -> (i32, i32, i32) {
    %c0_i32 = arith.constant 0 : i32
    %c0_i32_0 = arith.constant 0 : i32
    %c0_i32_1 = arith.constant 0 : i32
    return %arg0, %c0_i32, %c0_i32_0 : i32, i32, i32
  }
}

module attributes {stable_mosaic.version = 11 : i64} {
  func.func @stats2_kernel(%arg0: i32, %arg1: memref<2xf32, #tpu.memory_space<smem>>, %arg2: memref<16x4xf32, #tpu.memory_space<vmem>>, %arg3: memref<4x64xf32, #tpu.memory_space<vmem>>, %arg4: memref<64x128xbf16, #tpu.memory_space<vmem>>, %arg5: memref<1x1x128xf32, #tpu.memory_space<vmem>>, %arg6: memref<1x1x128xf32, #tpu.memory_space<vmem>>) attributes {dimension_semantics = [#tpu.dimension_semantics<parallel>], iteration_bounds = array<i64: 2>, scalar_prefetch = 0 : i64, scratch_operands = 0 : i64, tpu.core_type = #tpu.core_type<tc>, window_params = [{transform_indices = @transform_0, window_bounds = array<i64: 2>}, {transform_indices = @transform_1, window_bounds = array<i64: 16, 4>}, {pipeline_mode = #tpu.pipeline_mode<synchronous>, transform_indices = @transform_2, window_bounds = array<i64: 4, 64>}, {pipeline_mode = #tpu.pipeline_mode<synchronous>, transform_indices = @transform_3, window_bounds = array<i64: 64, 128>}, {transform_indices = @transform_4, window_bounds = array<i64: 1, 1, 128>}, {transform_indices = @transform_5, window_bounds = array<i64: 1, 1, 128>}]} {
    %c0 = arith.constant 0 : index
    %c0_0 = arith.constant 0 : index
    %0 = vector.load %arg2[%c0, %c0_0] : memref<16x4xf32, #tpu.memory_space<vmem>>, vector<16x4xf32>
    %c0_1 = arith.constant 0 : index
    %c0_2 = arith.constant 0 : index
    %1 = vector.load %arg3[%c0_1, %c0_2] : memref<4x64xf32, #tpu.memory_space<vmem>>, vector<4x64xf32>
    %cst = arith.constant dense<0.000000e+00> : vector<16x64xf32>
    %2 = tpu.matmul %0, %1, %cst {dimension_numbers = #tpu.dot_dimension_numbers<[1], [0], [0], [1], [0, 0, 1, 1], [], []>} : vector<16x4xf32>, vector<4x64xf32>, vector<16x64xf32> -> vector<16x64xf32>
    %c0_3 = arith.constant 0 : index
    %3 = memref.load %arg1[%c0_3] : memref<2xf32, #tpu.memory_space<smem>>
    %4 = vector.broadcast %3 : f32 to vector<16x64xf32>
    %5 = arith.mulf %2, %4 : vector<16x64xf32>
    %c1 = arith.constant 1 : index
    %6 = memref.load %arg1[%c1] : memref<2xf32, #tpu.memory_space<smem>>
    %7 = vector.broadcast %6 : f32 to vector<16x64xf32>
    %8 = arith.addf %5, %7 : vector<16x64xf32>
    %cst_4 = arith.constant 0.000000e+00 : f32
    %9 = vector.broadcast %cst_4 : f32 to vector<16x64xf32>
    %10 = arith.maximumf %8, %9 : vector<16x64xf32>
    %11 = arith.truncf %10 : vector<16x64xf32> to vector<16x64xbf16>
    %c0_5 = arith.constant 0 : index
    %c0_6 = arith.constant 0 : index
    %12 = vector.load %arg4[%c0_5, %c0_6] : memref<64x128xbf16, #tpu.memory_space<vmem>>, vector<64x128xbf16>
    %cst_7 = arith.constant dense<0.000000e+00> : vector<16x128xf32>
    %13 = tpu.matmul %11, %12, %cst_7 {dimension_numbers = #tpu.dot_dimension_numbers<[1], [0], [0], [1], [0, 0, 1, 1], [], []>} : vector<16x64xbf16>, vector<64x128xbf16>, vector<16x128xf32> -> vector<16x128xf32>
    %cst_8 = arith.constant dense<0.000000e+00> : vector<128xf32>
    %14 = vector.multi_reduction <add>, %13, %cst_8 [0] : vector<16x128xf32> to vector<128xf32>
    %15 = vector.shape_cast %14 : vector<128xf32> to vector<1x128xf32>
    %16 = vector.shape_cast %15 : vector<1x128xf32> to vector<1x1x128xf32>
    %c0_9 = arith.constant 0 : index
    %c0_10 = arith.constant 0 : index
    %c0_11 = arith.constant 0 : index
    %17 = vector.load %arg5[%c0_9, %c0_10, %c0_11] : memref<1x1x128xf32, #tpu.memory_space<vmem>>, vector<1x1x128xf32>
    tpu.vector_store %arg5[%c0_9, %c0_10, %c0_11], %16 {strides = array<i32>} : memref<1x1x128xf32, #tpu.memory_space<vmem>>, vector<1x1x128xf32>,
    %18 = arith.mulf %13, %13 : vector<16x128xf32>
    %cst_12 = arith.constant dense<0.000000e+00> : vector<128xf32>
    %19 = vector.multi_reduction <add>, %18, %cst_12 [0] : vector<16x128xf32> to vector<128xf32>
    %20 = vector.shape_cast %19 : vector<128xf32> to vector<1x128xf32>
    %21 = vector.shape_cast %20 : vector<1x128xf32> to vector<1x1x128xf32>
    %c0_13 = arith.constant 0 : index
    %c0_14 = arith.constant 0 : index
    %c0_15 = arith.constant 0 : index
    %22 = vector.load %arg6[%c0_13, %c0_14, %c0_15] : memref<1x1x128xf32, #tpu.memory_space<vmem>>, vector<1x1x128xf32>
    tpu.vector_store %arg6[%c0_13, %c0_14, %c0_15], %21 {strides = array<i32>} : memref<1x1x128xf32, #tpu.memory_space<vmem>>, vector<1x1x128xf32>,
    return
  }
  func.func @transform_0(%arg0: i32) -> i32 {
    %c0_i32 = arith.constant 0 : i32
    %c0_i32_0 = arith.constant 0 : i32
    return %c0_i32 : i32
  }
  func.func @transform_1(%arg0: i32) -> (i32, i32) {
    %c0_i32 = arith.constant 0 : i32
    %c0_i32_0 = arith.constant 0 : i32
    return %arg0, %c0_i32 : i32, i32
  }
  func.func @transform_2(%arg0: i32) -> (i32, i32) {
    %c0_i32 = arith.constant 0 : i32
    %c0_i32_0 = arith.constant 0 : i32
    %c0_i32_1 = arith.constant 0 : i32
    return %c0_i32, %c0_i32_0 : i32, i32
  }
  func.func @transform_3(%arg0: i32) -> (i32, i32) {
    %c0_i32 = arith.constant 0 : i32
    %c0_i32_0 = arith.constant 0 : i32
    %c0_i32_1 = arith.constant 0 : i32
    return %c0_i32, %c0_i32_0 : i32, i32
  }
  func.func @transform_4(%arg0: i32) -> (i32, i32, i32) {
    %c0_i32 = arith.constant 0 : i32
    %c0_i32_0 = arith.constant 0 : i32
    %c0_i32_1 = arith.constant 0 : i32
    return %arg0, %c0_i32, %c0_i32_0 : i32, i32, i32
  }
  func.func @transform_5(%arg0: i32) -> (i32, i32, i32) {
    %c0_i32 = arith.constant 0 : i32
    %c0_i32_0 = arith.constant 0 : i32
    %c0_i32_1 = arith.constant 0 : i32
    return %arg0, %c0_i32, %c0_i32_0 : i32, i32, i32
  }
}

module attributes {stable_mosaic.version = 11 : i64} {
  func.func @conv_pool_kernel(%arg0: i32, %arg1: memref<2xf32, #tpu.memory_space<smem>>, %arg2: memref<2xf32, #tpu.memory_space<smem>>, %arg3: memref<16x4xf32, #tpu.memory_space<vmem>>, %arg4: memref<4x64xf32, #tpu.memory_space<vmem>>, %arg5: memref<64x128xbf16, #tpu.memory_space<vmem>>, %arg6: memref<128x1024xbf16, #tpu.memory_space<vmem>>, %arg7: memref<1x1x1024xf32, #tpu.memory_space<vmem>>, %arg8: memref<1x1x1024xf32, #tpu.memory_space<vmem>>, %arg9: memref<1x1x1024xf32, #tpu.memory_space<vmem>>) attributes {dimension_semantics = [#tpu.dimension_semantics<parallel>], iteration_bounds = array<i64: 2>, scalar_prefetch = 0 : i64, scratch_operands = 0 : i64, tpu.core_type = #tpu.core_type<tc>, window_params = [{transform_indices = @transform_0, window_bounds = array<i64: 2>}, {transform_indices = @transform_1, window_bounds = array<i64: 2>}, {transform_indices = @transform_2, window_bounds = array<i64: 16, 4>}, {pipeline_mode = #tpu.pipeline_mode<synchronous>, transform_indices = @transform_3, window_bounds = array<i64: 4, 64>}, {pipeline_mode = #tpu.pipeline_mode<synchronous>, transform_indices = @transform_4, window_bounds = array<i64: 64, 128>}, {pipeline_mode = #tpu.pipeline_mode<synchronous>, transform_indices = @transform_5, window_bounds = array<i64: 128, 1024>}, {transform_indices = @transform_6, window_bounds = array<i64: 1, 1, 1024>}, {transform_indices = @transform_7, window_bounds = array<i64: 1, 1, 1024>}, {transform_indices = @transform_8, window_bounds = array<i64: 1, 1, 1024>}]} {
    %c0 = arith.constant 0 : index
    %c0_0 = arith.constant 0 : index
    %0 = vector.load %arg3[%c0, %c0_0] : memref<16x4xf32, #tpu.memory_space<vmem>>, vector<16x4xf32>
    %c0_1 = arith.constant 0 : index
    %c0_2 = arith.constant 0 : index
    %1 = vector.load %arg4[%c0_1, %c0_2] : memref<4x64xf32, #tpu.memory_space<vmem>>, vector<4x64xf32>
    %cst = arith.constant dense<0.000000e+00> : vector<16x64xf32>
    %2 = tpu.matmul %0, %1, %cst {dimension_numbers = #tpu.dot_dimension_numbers<[1], [0], [0], [1], [0, 0, 1, 1], [], []>} : vector<16x4xf32>, vector<4x64xf32>, vector<16x64xf32> -> vector<16x64xf32>
    %c0_3 = arith.constant 0 : index
    %3 = memref.load %arg1[%c0_3] : memref<2xf32, #tpu.memory_space<smem>>
    %4 = vector.broadcast %3 : f32 to vector<16x64xf32>
    %5 = arith.mulf %2, %4 : vector<16x64xf32>
    %c1 = arith.constant 1 : index
    %6 = memref.load %arg1[%c1] : memref<2xf32, #tpu.memory_space<smem>>
    %7 = vector.broadcast %6 : f32 to vector<16x64xf32>
    %8 = arith.addf %5, %7 : vector<16x64xf32>
    %cst_4 = arith.constant 0.000000e+00 : f32
    %9 = vector.broadcast %cst_4 : f32 to vector<16x64xf32>
    %10 = arith.maximumf %8, %9 : vector<16x64xf32>
    %11 = arith.truncf %10 : vector<16x64xf32> to vector<16x64xbf16>
    %c0_5 = arith.constant 0 : index
    %c0_6 = arith.constant 0 : index
    %12 = vector.load %arg5[%c0_5, %c0_6] : memref<64x128xbf16, #tpu.memory_space<vmem>>, vector<64x128xbf16>
    %cst_7 = arith.constant dense<0.000000e+00> : vector<16x128xf32>
    %13 = tpu.matmul %11, %12, %cst_7 {dimension_numbers = #tpu.dot_dimension_numbers<[1], [0], [0], [1], [0, 0, 1, 1], [], []>} : vector<16x64xbf16>, vector<64x128xbf16>, vector<16x128xf32> -> vector<16x128xf32>
    %c0_8 = arith.constant 0 : index
    %14 = memref.load %arg2[%c0_8] : memref<2xf32, #tpu.memory_space<smem>>
    %15 = vector.broadcast %14 : f32 to vector<16x128xf32>
    %16 = arith.mulf %13, %15 : vector<16x128xf32>
    %c1_9 = arith.constant 1 : index
    %17 = memref.load %arg2[%c1_9] : memref<2xf32, #tpu.memory_space<smem>>
    %18 = vector.broadcast %17 : f32 to vector<16x128xf32>
    %19 = arith.addf %16, %18 : vector<16x128xf32>
    %cst_10 = arith.constant 0.000000e+00 : f32
    %20 = vector.broadcast %cst_10 : f32 to vector<16x128xf32>
    %21 = arith.maximumf %19, %20 : vector<16x128xf32>
    %22 = arith.truncf %21 : vector<16x128xf32> to vector<16x128xbf16>
    %c0_11 = arith.constant 0 : index
    %c0_12 = arith.constant 0 : index
    %23 = vector.load %arg6[%c0_11, %c0_12] : memref<128x1024xbf16, #tpu.memory_space<vmem>>, vector<128x1024xbf16>
    %cst_13 = arith.constant dense<0.000000e+00> : vector<16x1024xf32>
    %24 = tpu.matmul %22, %23, %cst_13 {dimension_numbers = #tpu.dot_dimension_numbers<[1], [0], [0], [1], [0, 0, 1, 1], [], []>} : vector<16x128xbf16>, vector<128x1024xbf16>, vector<16x1024xf32> -> vector<16x1024xf32>
    %cst_14 = arith.constant dense<0.000000e+00> : vector<1024xf32>
    %25 = vector.multi_reduction <add>, %24, %cst_14 [0] : vector<16x1024xf32> to vector<1024xf32>
    %26 = vector.shape_cast %25 : vector<1024xf32> to vector<1x1024xf32>
    %27 = vector.shape_cast %26 : vector<1x1024xf32> to vector<1x1x1024xf32>
    %c0_15 = arith.constant 0 : index
    %c0_16 = arith.constant 0 : index
    %c0_17 = arith.constant 0 : index
    %28 = vector.load %arg8[%c0_15, %c0_16, %c0_17] : memref<1x1x1024xf32, #tpu.memory_space<vmem>>, vector<1x1x1024xf32>
    tpu.vector_store %arg8[%c0_15, %c0_16, %c0_17], %27 {strides = array<i32>} : memref<1x1x1024xf32, #tpu.memory_space<vmem>>, vector<1x1x1024xf32>,
    %29 = arith.mulf %24, %24 : vector<16x1024xf32>
    %cst_18 = arith.constant dense<0.000000e+00> : vector<1024xf32>
    %30 = vector.multi_reduction <add>, %29, %cst_18 [0] : vector<16x1024xf32> to vector<1024xf32>
    %31 = vector.shape_cast %30 : vector<1024xf32> to vector<1x1024xf32>
    %32 = vector.shape_cast %31 : vector<1x1024xf32> to vector<1x1x1024xf32>
    %c0_19 = arith.constant 0 : index
    %c0_20 = arith.constant 0 : index
    %c0_21 = arith.constant 0 : index
    %33 = vector.load %arg9[%c0_19, %c0_20, %c0_21] : memref<1x1x1024xf32, #tpu.memory_space<vmem>>, vector<1x1x1024xf32>
    tpu.vector_store %arg9[%c0_19, %c0_20, %c0_21], %32 {strides = array<i32>} : memref<1x1x1024xf32, #tpu.memory_space<vmem>>, vector<1x1x1024xf32>,
    %34 = vector.shape_cast %24 : vector<16x1024xf32> to vector<1x16x1024xf32>
    %cst_22 = arith.constant dense<0xFF800000> : vector<1x1024xf32>
    %35 = vector.multi_reduction <maximumf>, %34, %cst_22 [1] : vector<1x16x1024xf32> to vector<1x1024xf32>
    %36 = vector.shape_cast %35 : vector<1x1024xf32> to vector<1x1x1024xf32>
    %c0_23 = arith.constant 0 : index
    %c0_24 = arith.constant 0 : index
    %c0_25 = arith.constant 0 : index
    %37 = vector.load %arg7[%c0_23, %c0_24, %c0_25] : memref<1x1x1024xf32, #tpu.memory_space<vmem>>, vector<1x1x1024xf32>
    tpu.vector_store %arg7[%c0_23, %c0_24, %c0_25], %36 {strides = array<i32>} : memref<1x1x1024xf32, #tpu.memory_space<vmem>>, vector<1x1x1024xf32>,
    return
  }
  func.func @transform_0(%arg0: i32) -> i32 {
    %c0_i32 = arith.constant 0 : i32
    %c0_i32_0 = arith.constant 0 : i32
    return %c0_i32 : i32
  }
  func.func @transform_1(%arg0: i32) -> i32 {
    %c0_i32 = arith.constant 0 : i32
    %c0_i32_0 = arith.constant 0 : i32
    return %c0_i32 : i32
  }
  func.func @transform_2(%arg0: i32) -> (i32, i32) {
    %c0_i32 = arith.constant 0 : i32
    %c0_i32_0 = arith.constant 0 : i32
    return %arg0, %c0_i32 : i32, i32
  }
  func.func @transform_3(%arg0: i32) -> (i32, i32) {
    %c0_i32 = arith.constant 0 : i32
    %c0_i32_0 = arith.constant 0 : i32
    %c0_i32_1 = arith.constant 0 : i32
    return %c0_i32, %c0_i32_0 : i32, i32
  }
  func.func @transform_4(%arg0: i32) -> (i32, i32) {
    %c0_i32 = arith.constant 0 : i32
    %c0_i32_0 = arith.constant 0 : i32
    %c0_i32_1 = arith.constant 0 : i32
    return %c0_i32, %c0_i32_0 : i32, i32
  }
  func.func @transform_5(%arg0: i32) -> (i32, i32) {
    %c0_i32 = arith.constant 0 : i32
    %c0_i32_0 = arith.constant 0 : i32
    %c0_i32_1 = arith.constant 0 : i32
    return %c0_i32, %c0_i32_0 : i32, i32
  }
  func.func @transform_6(%arg0: i32) -> (i32, i32, i32) {
    %c0_i32 = arith.constant 0 : i32
    %c0_i32_0 = arith.constant 0 : i32
    %c0_i32_1 = arith.constant 0 : i32
    return %arg0, %c0_i32, %c0_i32_0 : i32, i32, i32
  }
  func.func @transform_7(%arg0: i32) -> (i32, i32, i32) {
    %c0_i32 = arith.constant 0 : i32
    %c0_i32_0 = arith.constant 0 : i32
    %c0_i32_1 = arith.constant 0 : i32
    return %arg0, %c0_i32, %c0_i32_0 : i32, i32, i32
  }
  func.func @transform_8(%arg0: i32) -> (i32, i32, i32) {
    %c0_i32 = arith.constant 0 : i32
    %c0_i32_0 = arith.constant 0 : i32
    %c0_i32_1 = arith.constant 0 : i32
    return %arg0, %c0_i32, %c0_i32_0 : i32, i32, i32
  }
}

module attributes {stable_mosaic.version = 11 : i64} {
  func.func @fc_head_kernel(%arg0: memref<2xf32, #tpu.memory_space<smem>>, %arg1: memref<2x1024xf32, #tpu.memory_space<vmem>>, %arg2: memref<1024x512xbf16, #tpu.memory_space<vmem>>, %arg3: memref<512x256xbf16, #tpu.memory_space<vmem>>, %arg4: memref<256x128xbf16, #tpu.memory_space<vmem>>, %arg5: memref<1x128xf32, #tpu.memory_space<vmem>>, %arg6: memref<2x128xf32, #tpu.memory_space<vmem>>) attributes {dimension_semantics = [], scalar_prefetch = 0 : i64, scratch_operands = 0 : i64, tpu.core_type = #tpu.core_type<tc>} {
    %c0 = arith.constant 0 : index
    %c0_0 = arith.constant 0 : index
    %0 = vector.load %arg1[%c0, %c0_0] : memref<2x1024xf32, #tpu.memory_space<vmem>>, vector<2x1024xf32>
    %c0_1 = arith.constant 0 : index
    %1 = memref.load %arg0[%c0_1] : memref<2xf32, #tpu.memory_space<smem>>
    %2 = vector.broadcast %1 : f32 to vector<2x1024xf32>
    %3 = arith.mulf %0, %2 : vector<2x1024xf32>
    %c1 = arith.constant 1 : index
    %4 = memref.load %arg0[%c1] : memref<2xf32, #tpu.memory_space<smem>>
    %5 = vector.broadcast %4 : f32 to vector<2x1024xf32>
    %6 = arith.addf %3, %5 : vector<2x1024xf32>
    %cst = arith.constant 0.000000e+00 : f32
    %7 = vector.broadcast %cst : f32 to vector<2x1024xf32>
    %8 = arith.maximumf %6, %7 : vector<2x1024xf32>
    %9 = arith.truncf %8 : vector<2x1024xf32> to vector<2x1024xbf16>
    %c0_2 = arith.constant 0 : index
    %c0_3 = arith.constant 0 : index
    %10 = vector.load %arg2[%c0_2, %c0_3] : memref<1024x512xbf16, #tpu.memory_space<vmem>>, vector<1024x512xbf16>
    %cst_4 = arith.constant dense<0.000000e+00> : vector<2x512xf32>
    %11 = tpu.matmul %9, %10, %cst_4 {dimension_numbers = #tpu.dot_dimension_numbers<[1], [0], [0], [1], [0, 0, 1, 1], [], []>} : vector<2x1024xbf16>, vector<1024x512xbf16>, vector<2x512xf32> -> vector<2x512xf32>
    %cst_5 = arith.constant dense<0.000000e+00> : vector<512xf32>
    %12 = vector.multi_reduction <add>, %11, %cst_5 [0] : vector<2x512xf32> to vector<512xf32>
    %13 = vector.shape_cast %12 : vector<512xf32> to vector<1x512xf32>
    %cst_6 = arith.constant 2.000000e+00 : f32
    %14 = vector.broadcast %cst_6 : f32 to vector<1x512xf32>
    %15 = arith.divf %13, %14 : vector<1x512xf32>
    %16 = arith.mulf %11, %11 : vector<2x512xf32>
    %cst_7 = arith.constant dense<0.000000e+00> : vector<512xf32>
    %17 = vector.multi_reduction <add>, %16, %cst_7 [0] : vector<2x512xf32> to vector<512xf32>
    %18 = vector.shape_cast %17 : vector<512xf32> to vector<1x512xf32>
    %cst_8 = arith.constant 2.000000e+00 : f32
    %19 = vector.broadcast %cst_8 : f32 to vector<1x512xf32>
    %20 = arith.divf %18, %19 : vector<1x512xf32>
    %21 = arith.mulf %15, %15 : vector<1x512xf32>
    %22 = arith.subf %20, %21 : vector<1x512xf32>
    %cst_9 = arith.constant 0.000000e+00 : f32
    %23 = vector.broadcast %cst_9 : f32 to vector<1x512xf32>
    %24 = arith.maximumf %22, %23 : vector<1x512xf32>
    %25 = vector.broadcast %15 : vector<1x512xf32> to vector<2x512xf32>
    %26 = arith.subf %11, %25 : vector<2x512xf32>
    %cst_10 = arith.constant 9.99999974E-6 : f32
    %27 = vector.broadcast %cst_10 : f32 to vector<1x512xf32>
    %28 = arith.addf %24, %27 : vector<1x512xf32>
    %29 = math.rsqrt %28 : vector<1x512xf32>
    %30 = vector.broadcast %29 : vector<1x512xf32> to vector<2x512xf32>
    %31 = arith.mulf %26, %30 : vector<2x512xf32>
    %cst_11 = arith.constant 0.000000e+00 : f32
    %32 = vector.broadcast %cst_11 : f32 to vector<2x512xf32>
    %33 = arith.maximumf %31, %32 : vector<2x512xf32>
    %34 = arith.truncf %33 : vector<2x512xf32> to vector<2x512xbf16>
    %c0_12 = arith.constant 0 : index
    %c0_13 = arith.constant 0 : index
    %35 = vector.load %arg3[%c0_12, %c0_13] : memref<512x256xbf16, #tpu.memory_space<vmem>>, vector<512x256xbf16>
    %cst_14 = arith.constant dense<0.000000e+00> : vector<2x256xf32>
    %36 = tpu.matmul %34, %35, %cst_14 {dimension_numbers = #tpu.dot_dimension_numbers<[1], [0], [0], [1], [0, 0, 1, 1], [], []>} : vector<2x512xbf16>, vector<512x256xbf16>, vector<2x256xf32> -> vector<2x256xf32>
    %cst_15 = arith.constant dense<0.000000e+00> : vector<256xf32>
    %37 = vector.multi_reduction <add>, %36, %cst_15 [0] : vector<2x256xf32> to vector<256xf32>
    %38 = vector.shape_cast %37 : vector<256xf32> to vector<1x256xf32>
    %cst_16 = arith.constant 2.000000e+00 : f32
    %39 = vector.broadcast %cst_16 : f32 to vector<1x256xf32>
    %40 = arith.divf %38, %39 : vector<1x256xf32>
    %41 = arith.mulf %36, %36 : vector<2x256xf32>
    %cst_17 = arith.constant dense<0.000000e+00> : vector<256xf32>
    %42 = vector.multi_reduction <add>, %41, %cst_17 [0] : vector<2x256xf32> to vector<256xf32>
    %43 = vector.shape_cast %42 : vector<256xf32> to vector<1x256xf32>
    %cst_18 = arith.constant 2.000000e+00 : f32
    %44 = vector.broadcast %cst_18 : f32 to vector<1x256xf32>
    %45 = arith.divf %43, %44 : vector<1x256xf32>
    %46 = arith.mulf %40, %40 : vector<1x256xf32>
    %47 = arith.subf %45, %46 : vector<1x256xf32>
    %cst_19 = arith.constant 0.000000e+00 : f32
    %48 = vector.broadcast %cst_19 : f32 to vector<1x256xf32>
    %49 = arith.maximumf %47, %48 : vector<1x256xf32>
    %50 = vector.broadcast %40 : vector<1x256xf32> to vector<2x256xf32>
    %51 = arith.subf %36, %50 : vector<2x256xf32>
    %cst_20 = arith.constant 9.99999974E-6 : f32
    %52 = vector.broadcast %cst_20 : f32 to vector<1x256xf32>
    %53 = arith.addf %49, %52 : vector<1x256xf32>
    %54 = math.rsqrt %53 : vector<1x256xf32>
    %55 = vector.broadcast %54 : vector<1x256xf32> to vector<2x256xf32>
    %56 = arith.mulf %51, %55 : vector<2x256xf32>
    %cst_21 = arith.constant 0.000000e+00 : f32
    %57 = vector.broadcast %cst_21 : f32 to vector<2x256xf32>
    %58 = arith.maximumf %56, %57 : vector<2x256xf32>
    %59 = arith.truncf %58 : vector<2x256xf32> to vector<2x256xbf16>
    %c0_22 = arith.constant 0 : index
    %c0_23 = arith.constant 0 : index
    %60 = vector.load %arg4[%c0_22, %c0_23] : memref<256x128xbf16, #tpu.memory_space<vmem>>, vector<256x128xbf16>
    %cst_24 = arith.constant dense<0.000000e+00> : vector<2x128xf32>
    %61 = tpu.matmul %59, %60, %cst_24 {dimension_numbers = #tpu.dot_dimension_numbers<[1], [0], [0], [1], [0, 0, 1, 1], [], []>} : vector<2x256xbf16>, vector<256x128xbf16>, vector<2x128xf32> -> vector<2x128xf32>
    %c0_25 = arith.constant 0 : index
    %c0_26 = arith.constant 0 : index
    %62 = vector.load %arg5[%c0_25, %c0_26] : memref<1x128xf32, #tpu.memory_space<vmem>>, vector<1x128xf32>
    %63 = vector.broadcast %62 : vector<1x128xf32> to vector<2x128xf32>
    %64 = arith.addf %61, %63 : vector<2x128xf32>
    %c0_27 = arith.constant 0 : index
    %c0_28 = arith.constant 0 : index
    %65 = vector.load %arg6[%c0_27, %c0_28] : memref<2x128xf32, #tpu.memory_space<vmem>>, vector<2x128xf32>
    tpu.vector_store %arg6[%c0_27, %c0_28], %64 {strides = array<i32>} : memref<2x128xf32, #tpu.memory_space<vmem>>, vector<2x128xf32>,
    return
  }
}

</mosaic_0001>

<llo_original>
// kernel: t_net_forward.4
$region0: #{t_net_forward.4}
  #allocation0 [shape = 'u32[]', space=smem, size = 0x4, offset = 0x4, fixed_abs, tag = 'smem constant byte address 0x4 - core index']
  #allocation1 [shape = 'u32[144,128]{1,0:T(1,128)}', space=vmem, size = 0x12000, scoped, tag = 'internal scratch']
  %s0 = inlined_call_operand.vmem [shape: f32[32,4], index: 0, kind: input, shape index: {}]
  %s1 = inlined_call_operand.vmem [shape: f32[4,64], index: 1, kind: input, shape index: {}]
  %s2 = inlined_call_operand.vmem [shape: f32[2,1,64], index: 2, kind: output, shape index: {0}]
  %s3 = inlined_call_operand.vmem [shape: f32[2,1,64], index: 3, kind: output, shape index: {1}]
  %4 = xla_tuple %s2, %s3
  %s5 = sld [smem:[#allocation0]]
  $region49: #{t_net_forward.4} parent=0
    _
  %s7 = ssub.s32 1, %s5
  %s8 = scalar_select 0, %s7, %s5
  loop: start=0, step=1, limit=4
  $region2: #{t_net_forward.4} parent=0 // loop_pre_header
    _
  $region3: #{t_net_forward.4} parent=0 // loop_header
    %s10 = sphi 0, %s14
    %p11 = scmp.ge.s32.totalorder %s10, 4
    %s20 = sphi 0, %s22
    %s23 = sphi 0, %s20
    %s24 = sphi 0, %s23
    %s40 = sphi 0, %s24
    %s44 = sphi 0, %s44
    %s46 = sphi 0, %s44
    %s47 = sphi 0, %s46
    %s61 = sphi 0, %s47
    %s67 = sphi 0, %s69
    %s70 = sphi 0, %s67
    %s71 = sphi 0, %s70
    %s87 = sphi 0, %s71
    %s93 = sphi 0, %s95
    %s96 = sphi 0, %s93
    %s97 = sphi 0, %s96
    %s113 = sphi 0, %s97
  $region4: #{t_net_forward.4} parent=0 // loop_header_branch
    %13 = sbr.rel (%p11) target = $region8
  $region5: #{t_net_forward.4} parent=0 // loop_body
    %s15 = ssub.s32 %s10, 1
    %s16 = ssub.s32 %s10, 2
    %s17 = sadd.s32 %s10, 1
    %s18 = ssub.s32 %s10, %s17
    %p19 = scmp.eq.s32.totalorder %s18, 0
    %s21 = sadd.s32 %s20, 1
    %s22 = scalar_select %p19, %s20, %s21
    %p25 = pneg %p19
    %p26 = scmp.eq.s32.totalorder %s10, 1
    %p27 = por %p25, %p26
    %p28 = scmp.ne.s32.totalorder %s20, %s23
    %p29 = scmp.eq.s32.totalorder %s10, 0
    %p30 = por %p28, %p29
    %p31 = scmp.ne.s32.totalorder %s20, %s23
    %p32 = scmp.eq.s32.totalorder %s15, 1
    %p33 = por %p31, %p32
    %p34 = scmp.ne.s32.totalorder %s23, %s24
    %p35 = scmp.eq.s32.totalorder %s15, 0
    %p36 = por %p34, %p35
    %p37 = scmp.ne.s32.totalorder %s23, %s24
    %p38 = scmp.eq.s32.totalorder %s16, 1
    %p39 = por %p37, %p38
    %p41 = scmp.ne.s32.totalorder %s24, %s40
    %p42 = scmp.eq.s32.totalorder %s16, 0
    %p43 = por %p41, %p42
    %s45 = sadd.s32 %s44, 1
    %p48 = scmp.eq.s32.totalorder %s10, 1
    %p49 = scmp.ne.s32.totalorder %s44, %s46
    %p50 = scmp.eq.s32.totalorder %s10, 0
    %p51 = por %p49, %p50
    %p52 = scmp.ne.s32.totalorder %s44, %s46
    %p53 = scmp.eq.s32.totalorder %s15, 1
    %p54 = por %p52, %p53
    %p55 = scmp.ne.s32.totalorder %s46, %s47
    %p56 = scmp.eq.s32.totalorder %s15, 0
    %p57 = por %p55, %p56
    %p58 = scmp.ne.s32.totalorder %s46, %s47
    %p59 = scmp.eq.s32.totalorder %s16, 1
    %p60 = por %p58, %p59
    %p62 = scmp.ne.s32.totalorder %s47, %s61
    %p63 = scmp.eq.s32.totalorder %s16, 0
    %p64 = por %p62, %p63
    %s65 = ssub.s32 %s10, %s17
    %p66 = scmp.eq.s32.totalorder %s65, 0
    %s68 = sadd.s32 %s67, 1
    %s69 = scalar_select %p66, %s67, %s68
    %p72 = pneg %p66
    %p73 = scmp.eq.s32.totalorder %s10, 1
    %p74 = por %p72, %p73
    %p75 = scmp.ne.s32.totalorder %s67, %s70
    %p76 = scmp.eq.s32.totalorder %s10, 0
    %p77 = por %p75, %p76
    %p78 = scmp.ne.s32.totalorder %s67, %s70
    %p79 = scmp.eq.s32.totalorder %s15, 1
    %p80 = por %p78, %p79
    %p81 = scmp.ne.s32.totalorder %s70, %s71
    %p82 = scmp.eq.s32.totalorder %s15, 0
    %p83 = por %p81, %p82
    %p84 = scmp.ne.s32.totalorder %s70, %s71
    %p85 = scmp.eq.s32.totalorder %s16, 1
    %p86 = por %p84, %p85
    %p88 = scmp.ne.s32.totalorder %s71, %s87
    %p89 = scmp.eq.s32.totalorder %s16, 0
    %p90 = por %p88, %p89
    %s91 = ssub.s32 %s10, %s17
    %p92 = scmp.eq.s32.totalorder %s91, 0
    %s94 = sadd.s32 %s93, 1
    %s95 = scalar_select %p92, %s93, %s94
    %p98 = pneg %p92
    %p99 = scmp.eq.s32.totalorder %s10, 1
    %p100 = por %p98, %p99
    %p101 = scmp.ne.s32.totalorder %s93, %s96
    %p102 = scmp.eq.s32.totalorder %s10, 0
    %p103 = por %p101, %p102
    %p104 = scmp.ne.s32.totalorder %s93, %s96
    %p105 = scmp.eq.s32.totalorder %s15, 1
    %p106 = por %p104, %p105
    %p107 = scmp.ne.s32.totalorder %s96, %s97
    %p108 = scmp.eq.s32.totalorder %s15, 0
    %p109 = por %p107, %p108
    %p110 = scmp.ne.s32.totalorder %s96, %s97
    %p111 = scmp.eq.s32.totalorder %s16, 1
    %p112 = por %p110, %p111
    %p114 = scmp.ne.s32.totalorder %s97, %s113
    %p115 = scmp.eq.s32.totalorder %s16, 0
    %p116 = por %p114, %p115
    %p117 = scmp.le.s32.totalorder 1, %s10
    %p118 = scmp.lt.s32.totalorder %s10, 3
    %p119 = pnand %p117, %p118
    %p120 = pneg %p119
    // Predicated region
    $region9: #{t_net_forward.4} parent=5 // pred_check
      _
    $region10: #{t_net_forward.4} parent=5 // pred_check_branch
      %122 = sbr.rel (%p119) target = $region12
    $region11: #{t_net_forward.4} parent=5 // pred_region
      %s123 = ssub.s32 %s10, 1
      // Predicated region
      $region13: #{t_net_forward.4} parent=11 // pred_check
        %p124 = pneg %p57
      $region14: #{t_net_forward.4} parent=11 // pred_check_branch
        %126 = sbr.rel (%p124) target = $region16
      $region15: #{t_net_forward.4} parent=11 // pred_region
        _
      $region16: #{t_net_forward.4} parent=11 // pred_fallthru
        _
    $region12: #{t_net_forward.4} parent=5 // pred_fallthru
      _
    %p127 = scmp.lt.s32.totalorder %s10, 2
    // Predicated region
    $region17: #{t_net_forward.4} parent=5 // pred_check
      %p128 = pneg %p127
    $region18: #{t_net_forward.4} parent=5 // pred_check_branch
      %130 = sbr.rel (%p128) target = $region20
    $region19: #{t_net_forward.4} parent=5 // pred_region
      // Predicated region
      $region21: #{t_net_forward.4} parent=19 // pred_check
        %p131 = pneg %p30
      $region22: #{t_net_forward.4} parent=19 // pred_check_branch
        %133 = sbr.rel (%p131) target = $region24
      $region23: #{t_net_forward.4} parent=19 // pred_region
        %s134 = smul.u32 2, %s10
        %p135 = scmp.lt.s32.totalorder %s134, 3
        %s136 = scalar_select %p135, %s134, 3
        %s137 = smul.addr %s136, 8
        %s138 = scalar_lea.vmem %s0, %s137
        %s139 = smul.u32 2, %s10
      $region24: #{t_net_forward.4} parent=19 // pred_fallthru
        _
    $region20: #{t_net_forward.4} parent=5 // pred_fallthru
      _
    %p140 = scmp.le.s32.totalorder 1, %s10
    %p141 = scmp.lt.s32.totalorder %s10, 3
    %p142 = pnand %p140, %p141
    %p143 = pneg %p142
    // Predicated region
    $region25: #{t_net_forward.4} parent=5 // pred_check
      _
    $region26: #{t_net_forward.4} parent=5 // pred_check_branch
      %145 = sbr.rel (%p142) target = $region28
    $region27: #{t_net_forward.4} parent=5 // pred_region
      %s146 = ssub.s32 %s10, 1
      %s147 = smul.u32 2, %s15
      %p148 = scmp.lt.s32.totalorder %s147, 3
      %s149 = scalar_select %p148, %s147, 3
      %s150 = smul.addr %s149, 8
      %s151 = scalar_lea.vmem %s0, %s150
      %p152 = pneg %p36
      %p153 = pneg %p33
      %p154 = pneg %p57
      %p155 = pneg %p54
      %p156 = pneg %p83
      %p157 = pneg %p80
      %p158 = scmp.lt.s32.totalorder %s15, 1
      %s159 = scalar_select %p158, %s15, 1
      %s160 = scalar_lea.vmem %s2, %s159
      %p161 = pneg %p109
      %p162 = pneg %p106
      %p163 = scmp.lt.s32.totalorder %s15, 1
      %s164 = scalar_select %p163, %s15, 1
      %s165 = scalar_lea.vmem %s3, %s164
      %s166 = smul.u32 2, %s15
      %p167 = scmp.lt.s32.totalorder %s166, 3
      %s168 = scalar_select %p167, %s166, 3
      %s169 = smul.addr %s168, 8
      %s170 = scalar_lea.vmem %s0, %s169
      %s171 = smul.u32 2, %s15
      %p172 = scmp.lt.s32.totalorder %s15, 1
      %s173 = scalar_select %p172, %s15, 1
      %s174 = scalar_lea.vmem %s2, %s173
      %p175 = scmp.lt.s32.totalorder %s15, 1
      %s176 = scalar_select %p175, %s15, 1
      %s177 = scalar_lea.vmem %s3, %s176
      %v178 = vld [vmem:[%s170] sm:$0xff]
      %v179 = vld [vmem:[%s170 + $0x8] sm:$0xff]
      %v180 = vld [vmem:[%s1] sm:$0xf]
      %vm181 = vcmask 31744
      %v183 = vsel %vm181, %v178, 0
      %v186 = vsel %vm181, %v179, 0
      %vm188 = vcmask 1043456
      %v190 = vsel %vm188, %v180, 0
      %192 = vmatprep.subr.mxu0 0.0
      %193 = vmatpush1.msra.mxu0 0.0
      %194 = vmatprep.subr.mxu0 0.0
      %195 = vmatpush1.msra.mxu0 0.0
      %196 = vmatprep.subr.mxu0 0.0
      %197 = vmatpush1.msra.mxu0 0.0
      %198 = vmatprep.subr.mxu0 0.0
      %199 = vmatpush1.msra.mxu0 0.0
      %200 = vmatprep.subr.mxu0 0.0
      %201 = vmatpush1.msra.mxu0 0.0
      %202 = vmatprep.subr.mxu0 0.0
      %203 = vmatpush1.msra.mxu0 0.0
      %204 = vmatprep.subr.mxu0 0.0
      %205 = vmatpush1.msra.mxu0 0.0
      %206 = vmatprep.subr.mxu0 0.0
      %207 = vmatpush1.msra.mxu0 0.0
      %208 = vmatprep.subr.mxu0 0.0
      %209 = vmatpush1.msra.mxu0 0.0
      %210 = vmatprep.subr.mxu0 0.0
      %211 = vmatpush1.msra.mxu0 0.0
      %212 = vmatprep.subr.mxu0 0.0
      %213 = vmatpush1.msra.mxu0 0.0
      %214 = vmatprep.subr.mxu0 0.0
      %215 = vmatpush1.msra.mxu0 0.0
      %216 = vmatprep.subr.mxu0 0.0
      %217 = vmatpush1.msra.mxu0 0.0
      %218 = vmatprep.subr.mxu0 0.0
      %219 = vmatpush1.msra.mxu0 0.0
      %220 = vmatprep.subr.mxu0 0.0
      %221 = vmatpush1.msra.mxu0 0.0
      %222 = vmatprep.subr.mxu0 0.0
      %223 = vmatpush1.msra.mxu0 %v190
      %224 = vmatprep.subr.mxu0 0.0
      %225 = vmatpush2.msra.mxu0 0.0
      %226 = vmatprep.subr.mxu0 0.0
      %227 = vmatpush2.msra.mxu0 0.0
      %228 = vmatprep.subr.mxu0 0.0
      %229 = vmatpush2.msra.mxu0 0.0
      %230 = vmatprep.subr.mxu0 0.0
      %231 = vmatpush2.msra.mxu0 0.0
      %232 = vmatprep.subr.mxu0 0.0
      %233 = vmatpush2.msra.mxu0 0.0
      %234 = vmatprep.subr.mxu0 0.0
      %235 = vmatpush2.msra.mxu0 0.0
      %236 = vmatprep.subr.mxu0 0.0
      %237 = vmatpush2.msra.mxu0 0.0
      %238 = vmatprep.subr.mxu0 0.0
      %239 = vmatpush2.msra.mxu0 0.0
      %240 = vmatprep.subr.mxu0 0.0
      %241 = vmatpush2.msra.mxu0 0.0
      %242 = vmatprep.subr.mxu0 0.0
      %243 = vmatpush2.msra.mxu0 0.0
      %244 = vmatprep.subr.mxu0 0.0
      %245 = vmatpush2.msra.mxu0 0.0
      %246 = vmatprep.subr.mxu0 0.0
      %247 = vmatpush2.msra.mxu0 0.0
      %248 = vmatprep.subr.mxu0 0.0
      %249 = vmatpush2.msra.mxu0 0.0
      %250 = vmatprep.subr.mxu0 0.0
      %251 = vmatpush2.msra.mxu0 0.0
      %252 = vmatprep.subr.mxu0 0.0
      %253 = vmatpush2.msra.mxu0 0.0
      %254 = vmatprep.subr.mxu0 0.0
      %255 = vmatpush2.msra.mxu0 0.0
      %256 = vmatprep.mubr.f32.mxu0 0.0
      %257 = vmatmul.mubr.f32.gmra.mxu0 %v183
      %v258 = vpop.f32.mrf.mxu0
      %v259 = vadd.f32 0.0, %v258
      %v260 = vpop.f32.mrf.mxu0
      %261 = vmatprep.mubr.f32.mxu0 0.0
      %262 = vmatmul.mubr.f32.gmra.mxu0 %v186
      %v263 = vpop.f32.mrf.mxu0
      %v264 = vadd.f32 0.0, %v263
      %v265 = vpop.f32.mrf.mxu0
      %266 = vdwg.mxu0
      %vm267 = vcmask 523264
      %v268 = vsel %vm267, %v259, 0.0
      %v269 = vsel %vm267, %v264, 0.0
      %v270 = vadd.f32 %v268, %v269
      %v271 = vrot.slane %v270, 4
      %v272 = vadd.f32 %v270, %v271
      %v273 = vrot.slane %v272, 2
      %v274 = vadd.f32 %v272, %v273
      %v275 = vrot.slane %v274, 1
      %v276 = vadd.f32 %v274, %v275
      %vm277 = vcmask 516096
      %278 = vst.msk [vmem:[%s174] sm:$0x1] %vm277, %v276
      %v279 = vmul.f32 %v259, %v259
      %v280 = vmul.f32 %v264, %v264
      %v281 = vsel %vm267, %v279, 0.0
      %v282 = vsel %vm267, %v280, 0.0
      %v283 = vadd.f32 %v281, %v282
      %v284 = vrot.slane %v283, 4
      %v285 = vadd.f32 %v283, %v284
      %v286 = vrot.slane %v285, 2
      %v287 = vadd.f32 %v285, %v286
      %v288 = vrot.slane %v287, 1
      %v289 = vadd.f32 %v287, %v288
      %290 = vst.msk [vmem:[%s177] sm:$0x1] %vm277, %v289
      %p291 = scmp.lt.s32.totalorder %s15, 1
      %s292 = scalar_select %p291, %s15, 1
      %s293 = scalar_lea.vmem %s2, %s292
      %p294 = scmp.lt.s32.totalorder %s15, 1
      %s295 = scalar_select %p294, %s15, 1
      %s296 = scalar_lea.vmem %s3, %s295
      // Predicated region
      $region29: #{t_net_forward.4} parent=27 // pred_check
        %p297 = pneg %p80
      $region30: #{t_net_forward.4} parent=27 // pred_check_branch
        %299 = sbr.rel (%p297) target = $region32
      $region31: #{t_net_forward.4} parent=27 // pred_region
        _
      $region32: #{t_net_forward.4} parent=27 // pred_fallthru
        _
      // Predicated region
      $region33: #{t_net_forward.4} parent=27 // pred_check
        %p300 = pneg %p106
      $region34: #{t_net_forward.4} parent=27 // pred_check_branch
        %302 = sbr.rel (%p300) target = $region36
      $region35: #{t_net_forward.4} parent=27 // pred_region
        _
      $region36: #{t_net_forward.4} parent=27 // pred_fallthru
        _
    $region28: #{t_net_forward.4} parent=5 // pred_fallthru
      _
    %p303 = scmp.le.s32.totalorder 2, %s10
    // Predicated region
    $region37: #{t_net_forward.4} parent=5 // pred_check
      %p304 = pneg %p303
    $region38: #{t_net_forward.4} parent=5 // pred_check_branch
      %306 = sbr.rel (%p304) target = $region40
    $region39: #{t_net_forward.4} parent=5 // pred_region
      %s307 = ssub.s32 %s10, 2
      // Predicated region
      $region41: #{t_net_forward.4} parent=39 // pred_check
        %p308 = pneg %p86
      $region42: #{t_net_forward.4} parent=39 // pred_check_branch
        %310 = sbr.rel (%p308) target = $region44
      $region43: #{t_net_forward.4} parent=39 // pred_region
        %p311 = scmp.lt.s32.totalorder %s16, 1
        %s312 = scalar_select %p311, %s16, 1
        %s313 = scalar_lea.vmem %s2, %s312
      $region44: #{t_net_forward.4} parent=39 // pred_fallthru
        _
      // Predicated region
      $region45: #{t_net_forward.4} parent=39 // pred_check
        %p314 = pneg %p112
      $region46: #{t_net_forward.4} parent=39 // pred_check_branch
        %316 = sbr.rel (%p314) target = $region48
      $region47: #{t_net_forward.4} parent=39 // pred_region
        %p317 = scmp.lt.s32.totalorder %s16, 1
        %s318 = scalar_select %p317, %s16, 1
        %s319 = scalar_lea.vmem %s3, %s318
      $region48: #{t_net_forward.4} parent=39 // pred_fallthru
        _
    $region40: #{t_net_forward.4} parent=5 // pred_fallthru
      _
  $region6: #{t_net_forward.4} parent=0 // loop_footer
    %s14 = sadd.s32 1, %s10
  $region7: #{t_net_forward.4} parent=0 // loop_footer_branch
    %9 = sbr.rel target = $region3
  $region8: #{t_net_forward.4} parent=0 // loop_exit
    _

// kernel: t_net_forward.5
$region0: #{t_net_forward.5}
  #allocation0 [shape = 'u32[]', space=smem, size = 0x4, offset = 0x4, fixed_abs, tag = 'smem constant byte address 0x4 - core index']
  #allocation1 [shape = 'u32[144,128]{1,0:T(1,128)}', space=vmem, size = 0x12000, scoped, tag = 'internal scratch']
  %s0 = inlined_call_operand.vmem [shape: f32[2], index: 0, kind: input, shape index: {}]
  %s1 = inlined_call_operand.vmem [shape: f32[32,4], index: 1, kind: input, shape index: {}]
  %s2 = inlined_call_operand.vmem [shape: f32[4,64], index: 2, kind: input, shape index: {}]
  %s3 = inlined_call_operand.vmem [shape: bf16[64,128], index: 3, kind: input, shape index: {}]
  %s4 = inlined_call_operand.vmem [shape: f32[2,1,128], index: 4, kind: output, shape index: {0}]
  %s5 = inlined_call_operand.vmem [shape: f32[2,1,128], index: 5, kind: output, shape index: {1}]
  %6 = xla_tuple %s4, %s5
  %s7 = sld [smem:[#allocation0]]
  $region61: #{t_net_forward.5} parent=0
    _
  %s9 = ssub.s32 1, %s7
  %s10 = scalar_select 0, %s9, %s7
  $region1: #{t_net_forward.5} parent=0
    #allocation2 [shape = 'u8[512]{0}', space=smem, size = 0x200, scoped, tag = 'input window, operand 0, single buffered']
    #allocation3 [shape = 's32[2]{0}', space=sflag, size = 0x8, scoped, tag = 'scoped memory for t_net_forward.5']
    %11 = vsyncpa [#allocation3], 0
    loop: start=0, step=1, limit=4
    $region2: #{t_net_forward.5} parent=1 // loop_pre_header
      _
    $region3: #{t_net_forward.5} parent=1 // loop_header
      %s13 = sphi 0, %s17
      %p14 = scmp.ge.s32.totalorder %s13, 4
      %s21 = sphi 0, %s21
      %s23 = sphi 0, %s21
      %s24 = sphi 0, %s23
      %s38 = sphi 0, %s24
      %s44 = sphi 0, %s46
      %s47 = sphi 0, %s44
      %s48 = sphi 0, %s47
      %s64 = sphi 0, %s48
      %s68 = sphi 0, %s68
      %s70 = sphi 0, %s68
      %s71 = sphi 0, %s70
      %s85 = sphi 0, %s71
      %s89 = sphi 0, %s89
      %s91 = sphi 0, %s89
      %s92 = sphi 0, %s91
      %s106 = sphi 0, %s92
      %s112 = sphi 0, %s114
      %s115 = sphi 0, %s112
      %s116 = sphi 0, %s115
      %s132 = sphi 0, %s116
      %s138 = sphi 0, %s140
      %s141 = sphi 0, %s138
      %s142 = sphi 0, %s141
      %s158 = sphi 0, %s142
    $region4: #{t_net_forward.5} parent=1 // loop_header_branch
      %16 = sbr.rel (%p14) target = $region8
    $region5: #{t_net_forward.5} parent=1 // loop_body
      %s18 = ssub.s32 %s13, 1
      %s19 = ssub.s32 %s13, 2
      %s20 = sadd.s32 %s13, 1
      %s22 = sadd.s32 %s21, 1
      %p25 = scmp.eq.s32.totalorder %s13, 1
      %p26 = scmp.ne.s32.totalorder %s21, %s23
      %p27 = scmp.eq.s32.totalorder %s13, 0
      %p28 = por %p26, %p27
      %p29 = scmp.ne.s32.totalorder %s21, %s23
      %p30 = scmp.eq.s32.totalorder %s18, 1
      %p31 = por %p29, %p30
      %p32 = scmp.ne.s32.totalorder %s23, %s24
      %p33 = scmp.eq.s32.totalorder %s18, 0
      %p34 = por %p32, %p33
      %p35 = scmp.ne.s32.totalorder %s23, %s24
      %p36 = scmp.eq.s32.totalorder %s19, 1
      %p37 = por %p35, %p36
      %p39 = scmp.ne.s32.totalorder %s24, %s38
      %p40 = scmp.eq.s32.totalorder %s19, 0
      %p41 = por %p39, %p40
      %s42 = ssub.s32 %s13, %s20
      %p43 = scmp.eq.s32.totalorder %s42, 0
      %s45 = sadd.s32 %s44, 1
      %s46 = scalar_select %p43, %s44, %s45
      %p49 = pneg %p43
      %p50 = scmp.eq.s32.totalorder %s13, 1
      %p51 = por %p49, %p50
      %p52 = scmp.ne.s32.totalorder %s44, %s47
      %p53 = scmp.eq.s32.totalorder %s13, 0
      %p54 = por %p52, %p53
      %p55 = scmp.ne.s32.totalorder %s44, %s47
      %p56 = scmp.eq.s32.totalorder %s18, 1
      %p57 = por %p55, %p56
      %p58 = scmp.ne.s32.totalorder %s47, %s48
      %p59 = scmp.eq.s32.totalorder %s18, 0
      %p60 = por %p58, %p59
      %p61 = scmp.ne.s32.totalorder %s47, %s48
      %p62 = scmp.eq.s32.totalorder %s19, 1
      %p63 = por %p61, %p62
      %p65 = scmp.ne.s32.totalorder %s48, %s64
      %p66 = scmp.eq.s32.totalorder %s19, 0
      %p67 = por %p65, %p66
      %s69 = sadd.s32 %s68, 1
      %p72 = scmp.eq.s32.totalorder %s13, 1
      %p73 = scmp.ne.s32.totalorder %s68, %s70
      %p74 = scmp.eq.s32.totalorder %s13, 0
      %p75 = por %p73, %p74
      %p76 = scmp.ne.s32.totalorder %s68, %s70
      %p77 = scmp.eq.s32.totalorder %s18, 1
      %p78 = por %p76, %p77
      %p79 = scmp.ne.s32.totalorder %s70, %s71
      %p80 = scmp.eq.s32.totalorder %s18, 0
      %p81 = por %p79, %p80
      %p82 = scmp.ne.s32.totalorder %s70, %s71
      %p83 = scmp.eq.s32.totalorder %s19, 1
      %p84 = por %p82, %p83
      %p86 = scmp.ne.s32.totalorder %s71, %s85
      %p87 = scmp.eq.s32.totalorder %s19, 0
      %p88 = por %p86, %p87
      %s90 = sadd.s32 %s89, 1
      %p93 = scmp.eq.s32.totalorder %s13, 1
      %p94 = scmp.ne.s32.totalorder %s89, %s91
      %p95 = scmp.eq.s32.totalorder %s13, 0
      %p96 = por %p94, %p95
      %p97 = scmp.ne.s32.totalorder %s89, %s91
      %p98 = scmp.eq.s32.totalorder %s18, 1
      %p99 = por %p97, %p98
      %p100 = scmp.ne.s32.totalorder %s91, %s92
      %p101 = scmp.eq.s32.totalorder %s18, 0
      %p102 = por %p100, %p101
      %p103 = scmp.ne.s32.totalorder %s91, %s92
      %p104 = scmp.eq.s32.totalorder %s19, 1
      %p105 = por %p103, %p104
      %p107 = scmp.ne.s32.totalorder %s92, %s106
      %p108 = scmp.eq.s32.totalorder %s19, 0
      %p109 = por %p107, %p108
      %s110 = ssub.s32 %s13, %s20
      %p111 = scmp.eq.s32.totalorder %s110, 0
      %s113 = sadd.s32 %s112, 1
      %s114 = scalar_select %p111, %s112, %s113
      %p117 = pneg %p111
      %p118 = scmp.eq.s32.totalorder %s13, 1
      %p119 = por %p117, %p118
      %p120 = scmp.ne.s32.totalorder %s112, %s115
      %p121 = scmp.eq.s32.totalorder %s13, 0
      %p122 = por %p120, %p121
      %p123 = scmp.ne.s32.totalorder %s112, %s115
      %p124 = scmp.eq.s32.totalorder %s18, 1
      %p125 = por %p123, %p124
      %p126 = scmp.ne.s32.totalorder %s115, %s116
      %p127 = scmp.eq.s32.totalorder %s18, 0
      %p128 = por %p126, %p127
      %p129 = scmp.ne.s32.totalorder %s115, %s116
      %p130 = scmp.eq.s32.totalorder %s19, 1
      %p131 = por %p129, %p130
      %p133 = scmp.ne.s32.totalorder %s116, %s132
      %p134 = scmp.eq.s32.totalorder %s19, 0
      %p135 = por %p133, %p134
      %s136 = ssub.s32 %s13, %s20
      %p137 = scmp.eq.s32.totalorder %s136, 0
      %s139 = sadd.s32 %s138, 1
      %s140 = scalar_select %p137, %s138, %s139
      %p143 = pneg %p137
      %p144 = scmp.eq.s32.totalorder %s13, 1
      %p145 = por %p143, %p144
      %p146 = scmp.ne.s32.totalorder %s138, %s141
      %p147 = scmp.eq.s32.totalorder %s13, 0
      %p148 = por %p146, %p147
      %p149 = scmp.ne.s32.totalorder %s138, %s141
      %p150 = scmp.eq.s32.totalorder %s18, 1
      %p151 = por %p149, %p150
      %p152 = scmp.ne.s32.totalorder %s141, %s142
      %p153 = scmp.eq.s32.totalorder %s18, 0
      %p154 = por %p152, %p153
      %p155 = scmp.ne.s32.totalorder %s141, %s142
      %p156 = scmp.eq.s32.totalorder %s19, 1
      %p157 = por %p155, %p156
      %p159 = scmp.ne.s32.totalorder %s142, %s158
      %p160 = scmp.eq.s32.totalorder %s19, 0
      %p161 = por %p159, %p160
      %p162 = scmp.le.s32.totalorder 1, %s13
      %p163 = scmp.lt.s32.totalorder %s13, 3
      %p164 = pnand %p162, %p163
      %p165 = pneg %p164
      // Predicated region
      $region9: #{t_net_forward.5} parent=5 // pred_check
        _
      $region10: #{t_net_forward.5} parent=5 // pred_check_branch
        %167 = sbr.rel (%p164) target = $region12
      $region11: #{t_net_forward.5} parent=5 // pred_region
        %s168 = ssub.s32 %s13, 1
        // Predicated region
        $region13: #{t_net_forward.5} parent=11 // pred_check
          %p169 = pneg %p34
        $region14: #{t_net_forward.5} parent=11 // pred_check_branch
          %171 = sbr.rel (%p169) target = $region16
        $region15: #{t_net_forward.5} parent=11 // pred_region
          %s173 = ssub.s32 16, 16
          %174 = vsyncadd [#allocation3], %s173
          %s176 = sshll.u32 %s0, 4
          %s177 = int_to_ptr.vmem [resolvable:$true] %s176
          %179 = dma.vmem_to_smem %s177, 16, [#allocation2], [#allocation3]
        $region16: #{t_net_forward.5} parent=11 // pred_fallthru
          _
        // Predicated region
        $region17: #{t_net_forward.5} parent=11 // pred_check
          %p180 = pneg %p81
        $region18: #{t_net_forward.5} parent=11 // pred_check_branch
          %182 = sbr.rel (%p180) target = $region20
        $region19: #{t_net_forward.5} parent=11 // pred_region
          _
        $region20: #{t_net_forward.5} parent=11 // pred_fallthru
          _
        // Predicated region
        $region21: #{t_net_forward.5} parent=11 // pred_check
          %p183 = pneg %p102
        $region22: #{t_net_forward.5} parent=11 // pred_check_branch
          %185 = sbr.rel (%p183) target = $region24
        $region23: #{t_net_forward.5} parent=11 // pred_region
          _
        $region24: #{t_net_forward.5} parent=11 // pred_fallthru
          _
      $region12: #{t_net_forward.5} parent=5 // pred_fallthru
        _
      %p186 = scmp.lt.s32.totalorder %s13, 2
      // Predicated region
      $region25: #{t_net_forward.5} parent=5 // pred_check
        %p187 = pneg %p186
      $region26: #{t_net_forward.5} parent=5 // pred_check_branch
        %189 = sbr.rel (%p187) target = $region28
      $region27: #{t_net_forward.5} parent=5 // pred_region
        // Predicated region
        $region29: #{t_net_forward.5} parent=27 // pred_check
          %p190 = pneg %p54
        $region30: #{t_net_forward.5} parent=27 // pred_check_branch
          %192 = sbr.rel (%p190) target = $region32
        $region31: #{t_net_forward.5} parent=27 // pred_region
          %s193 = smul.u32 2, %s13
          %p194 = scmp.lt.s32.totalorder %s193, 3
          %s195 = scalar_select %p194, %s193, 3
          %s196 = smul.addr %s195, 8
          %s197 = scalar_lea.vmem %s1, %s196
          %s198 = smul.u32 2, %s13
        $region32: #{t_net_forward.5} parent=27 // pred_fallthru
          _
      $region28: #{t_net_forward.5} parent=5 // pred_fallthru
        _
      %p199 = scmp.le.s32.totalorder 1, %s13
      %p200 = scmp.lt.s32.totalorder %s13, 3
      %p201 = pnand %p199, %p200
      %p202 = pneg %p201
      // Predicated region
      $region33: #{t_net_forward.5} parent=5 // pred_check
        _
      $region34: #{t_net_forward.5} parent=5 // pred_check_branch
        %204 = sbr.rel (%p201) target = $region36
      $region35: #{t_net_forward.5} parent=5 // pred_region
        %s205 = ssub.s32 %s13, 1
        // Predicated region
        $region37: #{t_net_forward.5} parent=35 // pred_check
          %p206 = pneg %p34
        $region38: #{t_net_forward.5} parent=35 // pred_check_branch
          %208 = sbr.rel (%p206) target = $region40
        $region39: #{t_net_forward.5} parent=35 // pred_region
          %209 = dma.done [#allocation3], 16
        $region40: #{t_net_forward.5} parent=35 // pred_fallthru
          _
        %210 = sfence
        %p211 = pneg %p34
        %p212 = pneg %p31
        %s213 = smul.u32 2, %s18
        %p214 = scmp.lt.s32.totalorder %s213, 3
        %s215 = scalar_select %p214, %s213, 3
        %s216 = smul.addr %s215, 8
        %s217 = scalar_lea.vmem %s1, %s216
        %p218 = pneg %p60
        %p219 = pneg %p57
        %p220 = pneg %p81
        %p221 = pneg %p78
        %p222 = pneg %p102
        %p223 = pneg %p99
        %p224 = pneg %p128
        %p225 = pneg %p125
        %p226 = scmp.lt.s32.totalorder %s18, 1
        %s227 = scalar_select %p226, %s18, 1
        %s228 = scalar_lea.vmem %s4, %s227
        %p229 = pneg %p154
        %p230 = pneg %p151
        %p231 = scmp.lt.s32.totalorder %s18, 1
        %s232 = scalar_select %p231, %s18, 1
        %s233 = scalar_lea.vmem %s5, %s232
        %s234 = smul.u32 2, %s18
        %p235 = scmp.lt.s32.totalorder %s234, 3
        %s236 = scalar_select %p235, %s234, 3
        %s237 = smul.addr %s236, 8
        %s238 = scalar_lea.vmem %s1, %s237
        %s239 = smul.u32 2, %s18
        %p240 = scmp.lt.s32.totalorder %s18, 1
        %s241 = scalar_select %p240, %s18, 1
        %s242 = scalar_lea.vmem %s4, %s241
        %p243 = scmp.lt.s32.totalorder %s18, 1
        %s244 = scalar_select %p243, %s18, 1
        %s245 = scalar_lea.vmem %s5, %s244
        %v247 = vld [vmem:[%s238] sm:$0xff]
        %v248 = vld [vmem:[%s238 + $0x8] sm:$0xff]
        %v249 = vld [vmem:[%s2] sm:$0xf]
        %vm250 = vcmask 31744
        %v252 = vsel %vm250, %v247, 0
        %v255 = vsel %vm250, %v248, 0
        %vm257 = vcmask 1043456
        %v259 = vsel %vm257, %v249, 0
        %261 = vmatprep.subr.mxu0 0.0
        %262 = vmatpush1.msra.mxu0 0.0
        %263 = vmatprep.subr.mxu0 0.0
        %264 = vmatpush1.msra.mxu0 0.0
        %265 = vmatprep.subr.mxu0 0.0
        %266 = vmatpush1.msra.mxu0 0.0
        %267 = vmatprep.subr.mxu0 0.0
        %268 = vmatpush1.msra.mxu0 0.0
        %269 = vmatprep.subr.mxu0 0.0
        %270 = vmatpush1.msra.mxu0 0.0
        %271 = vmatprep.subr.mxu0 0.0
        %272 = vmatpush1.msra.mxu0 0.0
        %273 = vmatprep.subr.mxu0 0.0
        %274 = vmatpush1.msra.mxu0 0.0
        %275 = vmatprep.subr.mxu0 0.0
        %276 = vmatpush1.msra.mxu0 0.0
        %277 = vmatprep.subr.mxu0 0.0
        %278 = vmatpush1.msra.mxu0 0.0
        %279 = vmatprep.subr.mxu0 0.0
        %280 = vmatpush1.msra.mxu0 0.0
        %281 = vmatprep.subr.mxu0 0.0
        %282 = vmatpush1.msra.mxu0 0.0
        %283 = vmatprep.subr.mxu0 0.0
        %284 = vmatpush1.msra.mxu0 0.0
        %285 = vmatprep.subr.mxu0 0.0
        %286 = vmatpush1.msra.mxu0 0.0
        %287 = vmatprep.subr.mxu0 0.0
        %288 = vmatpush1.msra.mxu0 0.0
        %289 = vmatprep.subr.mxu0 0.0
        %290 = vmatpush1.msra.mxu0 0.0
        %291 = vmatprep.subr.mxu0 0.0
        %292 = vmatpush1.msra.mxu0 %v259
        %293 = vmatprep.subr.mxu0 0.0
        %294 = vmatpush2.msra.mxu0 0.0
        %295 = vmatprep.subr.mxu0 0.0
        %296 = vmatpush2.msra.mxu0 0.0
        %297 = vmatprep.subr.mxu0 0.0
        %298 = vmatpush2.msra.mxu0 0.0
        %299 = vmatprep.subr.mxu0 0.0
        %300 = vmatpush2.msra.mxu0 0.0
        %301 = vmatprep.subr.mxu0 0.0
        %302 = vmatpush2.msra.mxu0 0.0
        %303 = vmatprep.subr.mxu0 0.0
        %304 = vmatpush2.msra.mxu0 0.0
        %305 = vmatprep.subr.mxu0 0.0
        %306 = vmatpush2.msra.mxu0 0.0
        %307 = vmatprep.subr.mxu0 0.0
        %308 = vmatpush2.msra.mxu0 0.0
        %309 = vmatprep.subr.mxu0 0.0
        %310 = vmatpush2.msra.mxu0 0.0
        %311 = vmatprep.subr.mxu0 0.0
        %312 = vmatpush2.msra.mxu0 0.0
        %313 = vmatprep.subr.mxu0 0.0
        %314 = vmatpush2.msra.mxu0 0.0
        %315 = vmatprep.subr.mxu0 0.0
        %316 = vmatpush2.msra.mxu0 0.0
        %317 = vmatprep.subr.mxu0 0.0
        %318 = vmatpush2.msra.mxu0 0.0
        %319 = vmatprep.subr.mxu0 0.0
        %320 = vmatpush2.msra.mxu0 0.0
        %321 = vmatprep.subr.mxu0 0.0
        %322 = vmatpush2.msra.mxu0 0.0
        %323 = vmatprep.subr.mxu0 0.0
        %324 = vmatpush2.msra.mxu0 0.0
        %325 = vmatprep.mubr.f32.mxu0 0.0
        %326 = vmatmul.mubr.f32.gmra.mxu0 %v252
        %v327 = vpop.f32.mrf.mxu0
        %v328 = vadd.f32 0.0, %v327
        %v329 = vpop.f32.mrf.mxu0
        %330 = vmatprep.mubr.f32.mxu0 0.0
        %331 = vmatmul.mubr.f32.gmra.mxu0 %v255
        %v332 = vpop.f32.mrf.mxu0
        %v333 = vadd.f32 0.0, %v332
        %v334 = vpop.f32.mrf.mxu0
        %335 = vdwg.mxu0
        %s336 = sld [smem:[#allocation2]]
        %v337 = vstv %s336
        %v338 = vmul.f32 %v328, %v337
        %v339 = vmul.f32 %v333, %v337
        %s340 = sld [smem:[#allocation2 + $0x1]]
        %v341 = vstv %s340
        %v342 = vadd.f32 %v338, %v341
        %v343 = vadd.f32 %v339, %v341
        %v344 = vmax.f32 %v342, 0.0
        %v345 = vmax.f32 %v343, 0.0
        %v346 = vpack.c.bf16 %v345, %v344
        %v347 = vld [vmem:[%s3] sm:$0xf]
        %v348 = vld [vmem:[%s3 + $0x4] sm:$0xf]
        %v349 = vld [vmem:[%s3 + $0x8] sm:$0xf]
        %v350 = vld [vmem:[%s3 + $0xc] sm:$0xf]
        %v351 = vld [vmem:[%s3 + $0x10] sm:$0xf]
        %v352 = vld [vmem:[%s3 + $0x14] sm:$0xf]
        %v353 = vld [vmem:[%s3 + $0x18] sm:$0xf]
        %v354 = vld [vmem:[%s3 + $0x1c] sm:$0xf]
        %v363 = vunpack.c.l.b16 %v347
        %v364 = vunpack.c.l.b16 %v348
        %v365 = vunpack.c.l.b16 %v349
        %v366 = vunpack.c.l.b16 %v350
        %v367 = vunpack.c.l.b16 %v351
        %v368 = vunpack.c.l.b16 %v352
        %v369 = vunpack.c.l.b16 %v353
        %v370 = vunpack.c.l.b16 %v354
        %v371 = vpack.c.b16 %v364, %v363
        %v372 = vpack.c.b16 %v366, %v365
        %v373 = vpack.c.b16 %v368, %v367
        %v374 = vpack.c.b16 %v370, %v369
        %vm379 = vcmask 523264
        %v381 = vsel %vm379, %v346, 0
        %383 = vmatprep.subr.bf16.mxu0 0
        %384 = vmatpush1.bf16.msra.mxu0 0
        %385 = vmatprep.subr.bf16.mxu0 0
        %386 = vmatpush1.bf16.msra.mxu0 0
        %387 = vmatprep.subr.bf16.mxu0 0
        %388 = vmatpush1.bf16.msra.mxu0 0
        %389 = vmatprep.subr.bf16.mxu0 0
        %390 = vmatpush1.bf16.msra.mxu0 0
        %391 = vmatprep.subr.bf16.mxu0 0
        %392 = vmatpush1.bf16.msra.mxu0 %v374
        %393 = vmatprep.subr.bf16.mxu0 0
        %394 = vmatpush1.bf16.msra.mxu0 %v373
        %395 = vmatprep.subr.bf16.mxu0 0
        %396 = vmatpush1.bf16.msra.mxu0 %v372
        %397 = vmatprep.subr.bf16.mxu0 0
        %398 = vmatpush1.bf16.msra.mxu0 %v371
        %399 = vmatprep.subr.bf16.mxu0 0
        %400 = vmatpush2.bf16.msra.mxu0 0
        %401 = vmatprep.subr.bf16.mxu0 0
        %402 = vmatpush2.bf16.msra.mxu0 0
        %403 = vmatprep.subr.bf16.mxu0 0
        %404 = vmatpush2.bf16.msra.mxu0 0
        %405 = vmatprep.subr.bf16.mxu0 0
        %406 = vmatpush2.bf16.msra.mxu0 0
        %407 = vmatprep.subr.bf16.mxu0 0
        %408 = vmatpush2.bf16.msra.mxu0 0
        %409 = vmatprep.subr.bf16.mxu0 0
        %410 = vmatpush2.bf16.msra.mxu0 0
        %411 = vmatprep.subr.bf16.mxu0 0
        %412 = vmatpush2.bf16.msra.mxu0 0
        %413 = vmatprep.subr.bf16.mxu0 0
        %414 = vmatpush2.bf16.msra.mxu0 0
        %415 = vmatprep.mubr.bf16.mxu0 0
        %416 = vmatmul.mubr.bf16.gmra.mxu0 %v381
        %v417 = vpop.f32.mrf.mxu0
        %v418 = vadd.f32 0.0, %v417
        %v419 = vpop.f32.mrf.mxu0
        %v420 = vpop.f32.mrf.mxu0
        %v421 = vadd.f32 0.0, %v420
        %v422 = vpop.f32.mrf.mxu0
        %423 = vdwg.mxu0
        %v424 = vadd.f32 %v418, %v421
        %v425 = vrot.slane %v424, 4
        %v426 = vadd.f32 %v424, %v425
        %v427 = vrot.slane %v426, 2
        %v428 = vadd.f32 %v426, %v427
        %v429 = vrot.slane %v428, 1
        %v430 = vadd.f32 %v428, %v429
        %431 = vst [vmem:[%s242] sm:$0x1] %v430
        %v432 = vmul.f32 %v418, %v418
        %v433 = vmul.f32 %v421, %v421
        %v434 = vadd.f32 %v432, %v433
        %v435 = vrot.slane %v434, 4
        %v436 = vadd.f32 %v434, %v435
        %v437 = vrot.slane %v436, 2
        %v438 = vadd.f32 %v436, %v437
        %v439 = vrot.slane %v438, 1
        %v440 = vadd.f32 %v438, %v439
        %441 = vst [vmem:[%s245] sm:$0x1] %v440
        %p442 = scmp.lt.s32.totalorder %s18, 1
        %s443 = scalar_select %p442, %s18, 1
        %s444 = scalar_lea.vmem %s4, %s443
        %p445 = scmp.lt.s32.totalorder %s18, 1
        %s446 = scalar_select %p445, %s18, 1
        %s447 = scalar_lea.vmem %s5, %s446
        // Predicated region
        $region41: #{t_net_forward.5} parent=35 // pred_check
          %p448 = pneg %p125
        $region42: #{t_net_forward.5} parent=35 // pred_check_branch
          %450 = sbr.rel (%p448) target = $region44
        $region43: #{t_net_forward.5} parent=35 // pred_region
          _
        $region44: #{t_net_forward.5} parent=35 // pred_fallthru
          _
        // Predicated region
        $region45: #{t_net_forward.5} parent=35 // pred_check
          %p451 = pneg %p151
        $region46: #{t_net_forward.5} parent=35 // pred_check_branch
          %453 = sbr.rel (%p451) target = $region48
        $region47: #{t_net_forward.5} parent=35 // pred_region
          _
        $region48: #{t_net_forward.5} parent=35 // pred_fallthru
          _
      $region36: #{t_net_forward.5} parent=5 // pred_fallthru
        _
      %p454 = scmp.le.s32.totalorder 2, %s13
      // Predicated region
      $region49: #{t_net_forward.5} parent=5 // pred_check
        %p455 = pneg %p454
      $region50: #{t_net_forward.5} parent=5 // pred_check_branch
        %457 = sbr.rel (%p455) target = $region52
      $region51: #{t_net_forward.5} parent=5 // pred_region
        %s458 = ssub.s32 %s13, 2
        // Predicated region
        $region53: #{t_net_forward.5} parent=51 // pred_check
          %p459 = pneg %p131
        $region54: #{t_net_forward.5} parent=51 // pred_check_branch
          %461 = sbr.rel (%p459) target = $region56
        $region55: #{t_net_forward.5} parent=51 // pred_region
          %p462 = scmp.lt.s32.totalorder %s19, 1
          %s463 = scalar_select %p462, %s19, 1
          %s464 = scalar_lea.vmem %s4, %s463
        $region56: #{t_net_forward.5} parent=51 // pred_fallthru
          _
        // Predicated region
        $region57: #{t_net_forward.5} parent=51 // pred_check
          %p465 = pneg %p157
        $region58: #{t_net_forward.5} parent=51 // pred_check_branch
          %467 = sbr.rel (%p465) target = $region60
        $region59: #{t_net_forward.5} parent=51 // pred_region
          %p468 = scmp.lt.s32.totalorder %s19, 1
          %s469 = scalar_select %p468, %s19, 1
          %s470 = scalar_lea.vmem %s5, %s469
        $region60: #{t_net_forward.5} parent=51 // pred_fallthru
          _
      $region52: #{t_net_forward.5} parent=5 // pred_fallthru
        _
    $region6: #{t_net_forward.5} parent=1 // loop_footer
      %s17 = sadd.s32 1, %s13
    $region7: #{t_net_forward.5} parent=1 // loop_footer_branch
      %12 = sbr.rel target = $region3
    $region8: #{t_net_forward.5} parent=1 // loop_exit
      _
    %471 = vsyncpa [#allocation3], 1
    %s472 = scalar_lea.sflag [#allocation3], 1
    %473 = vsyncpa %s472, 1

// kernel: t_net_forward.6
$region0: #{t_net_forward.6}
  #allocation0 [shape = 'u32[]', space=smem, size = 0x4, offset = 0x4, fixed_abs, tag = 'smem constant byte address 0x4 - core index']
  #allocation1 [shape = 'u32[144,128]{1,0:T(1,128)}', space=vmem, size = 0x12000, scoped, tag = 'internal scratch']
  %s0 = inlined_call_operand.vmem [shape: f32[2], index: 0, kind: input, shape index: {}]
  %s1 = inlined_call_operand.vmem [shape: f32[2], index: 1, kind: input, shape index: {}]
  %s2 = inlined_call_operand.vmem [shape: f32[32,4], index: 2, kind: input, shape index: {}]
  %s3 = inlined_call_operand.vmem [shape: f32[4,64], index: 3, kind: input, shape index: {}]
  %s4 = inlined_call_operand.vmem [shape: bf16[64,128], index: 4, kind: input, shape index: {}]
  %s5 = inlined_call_operand.hbm [shape: bf16[128,1024], index: 5, kind: input, shape index: {}]
  %s6 = inlined_call_operand.vmem [shape: f32[2,1,1024], index: 6, kind: output, shape index: {0}]
  %s7 = inlined_call_operand.vmem [shape: f32[2,1,1024], index: 7, kind: output, shape index: {1}]
  %s8 = inlined_call_operand.vmem [shape: f32[2,1,1024], index: 8, kind: output, shape index: {2}]
  %9 = xla_tuple %s6, %s7, %s8
  %s10 = sld [smem:[#allocation0]]
  $region85: #{t_net_forward.6} parent=0
    _
  %s12 = ssub.s32 1, %s10
  %s13 = scalar_select 0, %s12, %s10
  $region1: #{t_net_forward.6} parent=0
    #allocation2 [shape = 'u8[512]{0}', space=smem, size = 0x200, scoped, tag = 'input window, operand 0, single buffered']
    #allocation3 [shape = 's32[2]{0}', space=sflag, size = 0x8, scoped, tag = 'scoped memory for t_net_forward.6']
    #allocation4 [shape = 's32[2]{0}', space=sflag, size = 0x8, scoped, tag = 'scoped memory for t_net_forward.6']
    #allocation5 [shape = 'u8[512]{0}', space=smem, size = 0x200, scoped, tag = 'input window, operand 1, single buffered']
    #allocation6 [shape = 's32[1]{0}', space=sflag, size = 0x4, scoped, tag = 'scoped memory for t_net_forward.6']
    #allocation7 [shape = 'u8[262144]{0}', space=vmem, size = 0x40000, scoped, tag = 'input window, operand 5, single buffered']
    %14 = vsyncpa [#allocation4], 0
    %15 = vsyncpa [#allocation6], 0
    %16 = vsyncpa [#allocation3], 0
    loop: start=0, step=1, limit=4
    $region2: #{t_net_forward.6} parent=1 // loop_pre_header
      _
    $region3: #{t_net_forward.6} parent=1 // loop_header
      %s18 = sphi 0, %s22
      %p19 = scmp.ge.s32.totalorder %s18, 4
      %s26 = sphi 0, %s26
      %s28 = sphi 0, %s26
      %s29 = sphi 0, %s28
      %s43 = sphi 0, %s29
      %s47 = sphi 0, %s47
      %s49 = sphi 0, %s47
      %s50 = sphi 0, %s49
      %s64 = sphi 0, %s50
      %s70 = sphi 0, %s72
      %s73 = sphi 0, %s70
      %s74 = sphi 0, %s73
      %s90 = sphi 0, %s74
      %s94 = sphi 0, %s94
      %s96 = sphi 0, %s94
      %s97 = sphi 0, %s96
      %s111 = sphi 0, %s97
      %s115 = sphi 0, %s115
      %s117 = sphi 0, %s115
      %s118 = sphi 0, %s117
      %s132 = sphi 0, %s118
      %s136 = sphi 0, %s136
      %s138 = sphi 0, %s136
      %s139 = sphi 0, %s138
      %s153 = sphi 0, %s139
      %s159 = sphi 0, %s161
      %s162 = sphi 0, %s159
      %s163 = sphi 0, %s162
      %s179 = sphi 0, %s163
      %s185 = sphi 0, %s187
      %s188 = sphi 0, %s185
      %s189 = sphi 0, %s188
      %s205 = sphi 0, %s189
      %s211 = sphi 0, %s213
      %s214 = sphi 0, %s211
      %s215 = sphi 0, %s214
      %s231 = sphi 0, %s215
    $region4: #{t_net_forward.6} parent=1 // loop_header_branch
      %21 = sbr.rel (%p19) target = $region8
    $region5: #{t_net_forward.6} parent=1 // loop_body
      %s23 = ssub.s32 %s18, 1
      %s24 = ssub.s32 %s18, 2
      %s25 = sadd.s32 %s18, 1
      %s27 = sadd.s32 %s26, 1
      %p30 = scmp.eq.s32.totalorder %s18, 1
      %p31 = scmp.ne.s32.totalorder %s26, %s28
      %p32 = scmp.eq.s32.totalorder %s18, 0
      %p33 = por %p31, %p32
      %p34 = scmp.ne.s32.totalorder %s26, %s28
      %p35 = scmp.eq.s32.totalorder %s23, 1
      %p36 = por %p34, %p35
      %p37 = scmp.ne.s32.totalorder %s28, %s29
      %p38 = scmp.eq.s32.totalorder %s23, 0
      %p39 = por %p37, %p38
      %p40 = scmp.ne.s32.totalorder %s28, %s29
      %p41 = scmp.eq.s32.totalorder %s24, 1
      %p42 = por %p40, %p41
      %p44 = scmp.ne.s32.totalorder %s29, %s43
      %p45 = scmp.eq.s32.totalorder %s24, 0
      %p46 = por %p44, %p45
      %s48 = sadd.s32 %s47, 1
      %p51 = scmp.eq.s32.totalorder %s18, 1
      %p52 = scmp.ne.s32.totalorder %s47, %s49
      %p53 = scmp.eq.s32.totalorder %s18, 0
      %p54 = por %p52, %p53
      %p55 = scmp.ne.s32.totalorder %s47, %s49
      %p56 = scmp.eq.s32.totalorder %s23, 1
      %p57 = por %p55, %p56
      %p58 = scmp.ne.s32.totalorder %s49, %s50
      %p59 = scmp.eq.s32.totalorder %s23, 0
      %p60 = por %p58, %p59
      %p61 = scmp.ne.s32.totalorder %s49, %s50
      %p62 = scmp.eq.s32.totalorder %s24, 1
      %p63 = por %p61, %p62
      %p65 = scmp.ne.s32.totalorder %s50, %s64
      %p66 = scmp.eq.s32.totalorder %s24, 0
      %p67 = por %p65, %p66
      %s68 = ssub.s32 %s18, %s25
      %p69 = scmp.eq.s32.totalorder %s68, 0
      %s71 = sadd.s32 %s70, 1
      %s72 = scalar_select %p69, %s70, %s71
      %p75 = pneg %p69
      %p76 = scmp.eq.s32.totalorder %s18, 1
      %p77 = por %p75, %p76
      %p78 = scmp.ne.s32.totalorder %s70, %s73
      %p79 = scmp.eq.s32.totalorder %s18, 0
      %p80 = por %p78, %p79
      %p81 = scmp.ne.s32.totalorder %s70, %s73
      %p82 = scmp.eq.s32.totalorder %s23, 1
      %p83 = por %p81, %p82
      %p84 = scmp.ne.s32.totalorder %s73, %s74
      %p85 = scmp.eq.s32.totalorder %s23, 0
      %p86 = por %p84, %p85
      %p87 = scmp.ne.s32.totalorder %s73, %s74
      %p88 = scmp.eq.s32.totalorder %s24, 1
      %p89 = por %p87, %p88
      %p91 = scmp.ne.s32.totalorder %s74, %s90
      %p92 = scmp.eq.s32.totalorder %s24, 0
      %p93 = por %p91, %p92
      %s95 = sadd.s32 %s94, 1
      %p98 = scmp.eq.s32.totalorder %s18, 1
      %p99 = scmp.ne.s32.totalorder %s94, %s96
      %p100 = scmp.eq.s32.totalorder %s18, 0
      %p101 = por %p99, %p100
      %p102 = scmp.ne.s32.totalorder %s94, %s96
      %p103 = scmp.eq.s32.totalorder %s23, 1
      %p104 = por %p102, %p103
      %p105 = scmp.ne.s32.totalorder %s96, %s97
      %p106 = scmp.eq.s32.totalorder %s23, 0
      %p107 = por %p105, %p106
      %p108 = scmp.ne.s32.totalorder %s96, %s97
      %p109 = scmp.eq.s32.totalorder %s24, 1
      %p110 = por %p108, %p109
      %p112 = scmp.ne.s32.totalorder %s97, %s111
      %p113 = scmp.eq.s32.totalorder %s24, 0
      %p114 = por %p112, %p113
      %s116 = sadd.s32 %s115, 1
      %p119 = scmp.eq.s32.totalorder %s18, 1
      %p120 = scmp.ne.s32.totalorder %s115, %s117
      %p121 = scmp.eq.s32.totalorder %s18, 0
      %p122 = por %p120, %p121
      %p123 = scmp.ne.s32.totalorder %s115, %s117
      %p124 = scmp.eq.s32.totalorder %s23, 1
      %p125 = por %p123, %p124
      %p126 = scmp.ne.s32.totalorder %s117, %s118
      %p127 = scmp.eq.s32.totalorder %s23, 0
      %p128 = por %p126, %p127
      %p129 = scmp.ne.s32.totalorder %s117, %s118
      %p130 = scmp.eq.s32.totalorder %s24, 1
      %p131 = por %p129, %p130
      %p133 = scmp.ne.s32.totalorder %s118, %s132
      %p134 = scmp.eq.s32.totalorder %s24, 0
      %p135 = por %p133, %p134
      %s137 = sadd.s32 %s136, 1
      %p140 = scmp.eq.s32.totalorder %s18, 1
      %p141 = scmp.ne.s32.totalorder %s136, %s138
      %p142 = scmp.eq.s32.totalorder %s18, 0
      %p143 = por %p141, %p142
      %p144 = scmp.ne.s32.totalorder %s136, %s138
      %p145 = scmp.eq.s32.totalorder %s23, 1
      %p146 = por %p144, %p145
      %p147 = scmp.ne.s32.totalorder %s138, %s139
      %p148 = scmp.eq.s32.totalorder %s23, 0
      %p149 = por %p147, %p148
      %p150 = scmp.ne.s32.totalorder %s138, %s139
      %p151 = scmp.eq.s32.totalorder %s24, 1
      %p152 = por %p150, %p151
      %p154 = scmp.ne.s32.totalorder %s139, %s153
      %p155 = scmp.eq.s32.totalorder %s24, 0
      %p156 = por %p154, %p155
      %s157 = ssub.s32 %s18, %s25
      %p158 = scmp.eq.s32.totalorder %s157, 0
      %s160 = sadd.s32 %s159, 1
      %s161 = scalar_select %p158, %s159, %s160
      %p164 = pneg %p158
      %p165 = scmp.eq.s32.totalorder %s18, 1
      %p166 = por %p164, %p165
      %p167 = scmp.ne.s32.totalorder %s159, %s162
      %p168 = scmp.eq.s32.totalorder %s18, 0
      %p169 = por %p167, %p168
      %p170 = scmp.ne.s32.totalorder %s159, %s162
      %p171 = scmp.eq.s32.totalorder %s23, 1
      %p172 = por %p170, %p171
      %p173 = scmp.ne.s32.totalorder %s162, %s163
      %p174 = scmp.eq.s32.totalorder %s23, 0
      %p175 = por %p173, %p174
      %p176 = scmp.ne.s32.totalorder %s162, %s163
      %p177 = scmp.eq.s32.totalorder %s24, 1
      %p178 = por %p176, %p177
      %p180 = scmp.ne.s32.totalorder %s163, %s179
      %p181 = scmp.eq.s32.totalorder %s24, 0
      %p182 = por %p180, %p181
      %s183 = ssub.s32 %s18, %s25
      %p184 = scmp.eq.s32.totalorder %s183, 0
      %s186 = sadd.s32 %s185, 1
      %s187 = scalar_select %p184, %s185, %s186
      %p190 = pneg %p184
      %p191 = scmp.eq.s32.totalorder %s18, 1
      %p192 = por %p190, %p191
      %p193 = scmp.ne.s32.totalorder %s185, %s188
      %p194 = scmp.eq.s32.totalorder %s18, 0
      %p195 = por %p193, %p194
      %p196 = scmp.ne.s32.totalorder %s185, %s188
      %p197 = scmp.eq.s32.totalorder %s23, 1
      %p198 = por %p196, %p197
      %p199 = scmp.ne.s32.totalorder %s188, %s189
      %p200 = scmp.eq.s32.totalorder %s23, 0
      %p201 = por %p199, %p200
      %p202 = scmp.ne.s32.totalorder %s188, %s189
      %p203 = scmp.eq.s32.totalorder %s24, 1
      %p204 = por %p202, %p203
      %p206 = scmp.ne.s32.totalorder %s189, %s205
      %p207 = scmp.eq.s32.totalorder %s24, 0
      %p208 = por %p206, %p207
      %s209 = ssub.s32 %s18, %s25
      %p210 = scmp.eq.s32.totalorder %s209, 0
      %s212 = sadd.s32 %s211, 1
      %s213 = scalar_select %p210, %s211, %s212
      %p216 = pneg %p210
      %p217 = scmp.eq.s32.totalorder %s18, 1
      %p218 = por %p216, %p217
      %p219 = scmp.ne.s32.totalorder %s211, %s214
      %p220 = scmp.eq.s32.totalorder %s18, 0
      %p221 = por %p219, %p220
      %p222 = scmp.ne.s32.totalorder %s211, %s214
      %p223 = scmp.eq.s32.totalorder %s23, 1
      %p224 = por %p222, %p223
      %p225 = scmp.ne.s32.totalorder %s214, %s215
      %p226 = scmp.eq.s32.totalorder %s23, 0
      %p227 = por %p225, %p226
      %p228 = scmp.ne.s32.totalorder %s214, %s215
      %p229 = scmp.eq.s32.totalorder %s24, 1
      %p230 = por %p228, %p229
      %p232 = scmp.ne.s32.totalorder %s215, %s231
      %p233 = scmp.eq.s32.totalorder %s24, 0
      %p234 = por %p232, %p233
      %p235 = scmp.le.s32.totalorder 1, %s18
      %p236 = scmp.lt.s32.totalorder %s18, 3
      %p237 = pnand %p235, %p236
      %p238 = pneg %p237
      // Predicated region
      $region9: #{t_net_forward.6} parent=5 // pred_check
        _
      $region10: #{t_net_forward.6} parent=5 // pred_check_branch
        %240 = sbr.rel (%p237) target = $region12
      $region11: #{t_net_forward.6} parent=5 // pred_region
        %s241 = ssub.s32 %s18, 1
        // Predicated region
        $region13: #{t_net_forward.6} parent=11 // pred_check
          %p242 = pneg %p39
        $region14: #{t_net_forward.6} parent=11 // pred_check_branch
          %244 = sbr.rel (%p242) target = $region16
        $region15: #{t_net_forward.6} parent=11 // pred_region
          %s246 = ssub.s32 16, 16
          %247 = vsyncadd [#allocation4], %s246
          %s249 = sshll.u32 %s0, 4
          %s250 = int_to_ptr.vmem [resolvable:$true] %s249
          %252 = dma.vmem_to_smem %s250, 16, [#allocation2], [#allocation4]
        $region16: #{t_net_forward.6} parent=11 // pred_fallthru
          _
        // Predicated region
        $region17: #{t_net_forward.6} parent=11 // pred_check
          %p253 = pneg %p60
        $region18: #{t_net_forward.6} parent=11 // pred_check_branch
          %255 = sbr.rel (%p253) target = $region20
        $region19: #{t_net_forward.6} parent=11 // pred_region
          %s257 = ssub.s32 16, 16
          %258 = vsyncadd [#allocation6], %s257
          %s260 = sshll.u32 %s1, 4
          %s261 = int_to_ptr.vmem [resolvable:$true] %s260
          %263 = dma.vmem_to_smem %s261, 16, [#allocation5], [#allocation6]
        $region20: #{t_net_forward.6} parent=11 // pred_fallthru
          _
        // Predicated region
        $region21: #{t_net_forward.6} parent=11 // pred_check
          %p264 = pneg %p107
        $region22: #{t_net_forward.6} parent=11 // pred_check_branch
          %266 = sbr.rel (%p264) target = $region24
        $region23: #{t_net_forward.6} parent=11 // pred_region
          _
        $region24: #{t_net_forward.6} parent=11 // pred_fallthru
          _
        // Predicated region
        $region25: #{t_net_forward.6} parent=11 // pred_check
          %p267 = pneg %p128
        $region26: #{t_net_forward.6} parent=11 // pred_check_branch
          %269 = sbr.rel (%p267) target = $region28
        $region27: #{t_net_forward.6} parent=11 // pred_region
          _
        $region28: #{t_net_forward.6} parent=11 // pred_fallthru
          _
        // Predicated region
        $region29: #{t_net_forward.6} parent=11 // pred_check
          %p270 = pneg %p149
        $region30: #{t_net_forward.6} parent=11 // pred_check_branch
          %272 = sbr.rel (%p270) target = $region32
        $region31: #{t_net_forward.6} parent=11 // pred_region
          %s274 = ssub.s32 8192, 8192
          %275 = vsyncadd [#allocation3], %s274
          %s276 = sshll.u32 [#allocation7], 4
          %s277 = int_to_ptr.vmem [resolvable:$true] %s276
          %282 = dma.hbm_to_vmem [thread:$0]  %s5, 8192, %s277, [#allocation3], 512, 512, 32
        $region32: #{t_net_forward.6} parent=11 // pred_fallthru
          _
      $region12: #{t_net_forward.6} parent=5 // pred_fallthru
        _
      %p283 = scmp.lt.s32.totalorder %s18, 2
      // Predicated region
      $region33: #{t_net_forward.6} parent=5 // pred_check
        %p284 = pneg %p283
      $region34: #{t_net_forward.6} parent=5 // pred_check_branch
        %286 = sbr.rel (%p284) target = $region36
      $region35: #{t_net_forward.6} parent=5 // pred_region
        // Predicated region
        $region37: #{t_net_forward.6} parent=35 // pred_check
          %p287 = pneg %p80
        $region38: #{t_net_forward.6} parent=35 // pred_check_branch
          %289 = sbr.rel (%p287) target = $region40
        $region39: #{t_net_forward.6} parent=35 // pred_region
          %s290 = smul.u32 2, %s18
          %p291 = scmp.lt.s32.totalorder %s290, 3
          %s292 = scalar_select %p291, %s290, 3
          %s293 = smul.addr %s292, 8
          %s294 = scalar_lea.vmem %s2, %s293
          %s295 = smul.u32 2, %s18
        $region40: #{t_net_forward.6} parent=35 // pred_fallthru
          _
      $region36: #{t_net_forward.6} parent=5 // pred_fallthru
        _
      %p296 = scmp.le.s32.totalorder 1, %s18
      %p297 = scmp.lt.s32.totalorder %s18, 3
      %p298 = pnand %p296, %p297
      %p299 = pneg %p298
      // Predicated region
      $region41: #{t_net_forward.6} parent=5 // pred_check
        _
      $region42: #{t_net_forward.6} parent=5 // pred_check_branch
        %301 = sbr.rel (%p298) target = $region44
      $region43: #{t_net_forward.6} parent=5 // pred_region
        %s302 = ssub.s32 %s18, 1
        // Predicated region
        $region45: #{t_net_forward.6} parent=43 // pred_check
          %p303 = pneg %p39
        $region46: #{t_net_forward.6} parent=43 // pred_check_branch
          %305 = sbr.rel (%p303) target = $region48
        $region47: #{t_net_forward.6} parent=43 // pred_region
          %306 = dma.done [#allocation4], 16
        $region48: #{t_net_forward.6} parent=43 // pred_fallthru
          _
        // Predicated region
        $region49: #{t_net_forward.6} parent=43 // pred_check
          %p307 = pneg %p60
        $region50: #{t_net_forward.6} parent=43 // pred_check_branch
          %309 = sbr.rel (%p307) target = $region52
        $region51: #{t_net_forward.6} parent=43 // pred_region
          %310 = dma.done [#allocation6], 16
        $region52: #{t_net_forward.6} parent=43 // pred_fallthru
          _
        // Predicated region
        $region53: #{t_net_forward.6} parent=43 // pred_check
          %p311 = pneg %p149
        $region54: #{t_net_forward.6} parent=43 // pred_check_branch
          %313 = sbr.rel (%p311) target = $region56
        $region55: #{t_net_forward.6} parent=43 // pred_region
          %314 = dma.done [#allocation3], 8192
        $region56: #{t_net_forward.6} parent=43 // pred_fallthru
          _
        %315 = sfence
        %p316 = pneg %p39
        %p317 = pneg %p36
        %p318 = pneg %p60
        %p319 = pneg %p57
        %s320 = smul.u32 2, %s23
        %p321 = scmp.lt.s32.totalorder %s320, 3
        %s322 = scalar_select %p321, %s320, 3
        %s323 = smul.addr %s322, 8
        %s324 = scalar_lea.vmem %s2, %s323
        %p325 = pneg %p86
        %p326 = pneg %p83
        %p327 = pneg %p107
        %p328 = pneg %p104
        %p329 = pneg %p128
        %p330 = pneg %p125
        %p331 = pneg %p149
        %p332 = pneg %p146
        %p333 = pneg %p175
        %p334 = pneg %p172
        %p335 = scmp.lt.s32.totalorder %s23, 1
        %s336 = scalar_select %p335, %s23, 1
        %s337 = smul.addr %s336, 8
        %s338 = scalar_lea.vmem %s6, %s337
        %p339 = pneg %p201
        %p340 = pneg %p198
        %p341 = scmp.lt.s32.totalorder %s23, 1
        %s342 = scalar_select %p341, %s23, 1
        %s343 = smul.addr %s342, 8
        %s344 = scalar_lea.vmem %s7, %s343
        %p345 = pneg %p227
        %p346 = pneg %p224
        %p347 = scmp.lt.s32.totalorder %s23, 1
        %s348 = scalar_select %p347, %s23, 1
        %s349 = smul.addr %s348, 8
        %s350 = scalar_lea.vmem %s8, %s349
        %s351 = smul.u32 2, %s23
        %p352 = scmp.lt.s32.totalorder %s351, 3
        %s353 = scalar_select %p352, %s351, 3
        %s354 = smul.addr %s353, 8
        %s355 = scalar_lea.vmem %s2, %s354
        %s356 = smul.u32 2, %s23
        %p357 = scmp.lt.s32.totalorder %s23, 1
        %s358 = scalar_select %p357, %s23, 1
        %s359 = smul.addr %s358, 8
        %s360 = scalar_lea.vmem %s6, %s359
        %p361 = scmp.lt.s32.totalorder %s23, 1
        %s362 = scalar_select %p361, %s23, 1
        %s363 = smul.addr %s362, 8
        %s364 = scalar_lea.vmem %s7, %s363
        %p365 = scmp.lt.s32.totalorder %s23, 1
        %s366 = scalar_select %p365, %s23, 1
        %s367 = smul.addr %s366, 8
        %s368 = scalar_lea.vmem %s8, %s367
        %v370 = vld [vmem:[%s355] sm:$0xff]
        %v371 = vld [vmem:[%s355 + $0x8] sm:$0xff]
        %v372 = vld [vmem:[%s3] sm:$0xf]
        %vm373 = vcmask 31744
        %v375 = vsel %vm373, %v370, 0
        %v378 = vsel %vm373, %v371, 0
        %vm380 = vcmask 1043456
        %v382 = vsel %vm380, %v372, 0
        %384 = vmatprep.subr.mxu0 0.0
        %385 = vmatpush1.msra.mxu0 0.0
        %386 = vmatprep.subr.mxu0 0.0
        %387 = vmatpush1.msra.mxu0 0.0
        %388 = vmatprep.subr.mxu0 0.0
        %389 = vmatpush1.msra.mxu0 0.0
        %390 = vmatprep.subr.mxu0 0.0
        %391 = vmatpush1.msra.mxu0 0.0
        %392 = vmatprep.subr.mxu0 0.0
        %393 = vmatpush1.msra.mxu0 0.0
        %394 = vmatprep.subr.mxu0 0.0
        %395 = vmatpush1.msra.mxu0 0.0
        %396 = vmatprep.subr.mxu0 0.0
        %397 = vmatpush1.msra.mxu0 0.0
        %398 = vmatprep.subr.mxu0 0.0
        %399 = vmatpush1.msra.mxu0 0.0
        %400 = vmatprep.subr.mxu0 0.0
        %401 = vmatpush1.msra.mxu0 0.0
        %402 = vmatprep.subr.mxu0 0.0
        %403 = vmatpush1.msra.mxu0 0.0
        %404 = vmatprep.subr.mxu0 0.0
        %405 = vmatpush1.msra.mxu0 0.0
        %406 = vmatprep.subr.mxu0 0.0
        %407 = vmatpush1.msra.mxu0 0.0
        %408 = vmatprep.subr.mxu0 0.0
        %409 = vmatpush1.msra.mxu0 0.0
        %410 = vmatprep.subr.mxu0 0.0
        %411 = vmatpush1.msra.mxu0 0.0
        %412 = vmatprep.subr.mxu0 0.0
        %413 = vmatpush1.msra.mxu0 0.0
        %414 = vmatprep.subr.mxu0 0.0
        %415 = vmatpush1.msra.mxu0 %v382
        %416 = vmatprep.subr.mxu0 0.0
        %417 = vmatpush2.msra.mxu0 0.0
        %418 = vmatprep.subr.mxu0 0.0
        %419 = vmatpush2.msra.mxu0 0.0
        %420 = vmatprep.subr.mxu0 0.0
        %421 = vmatpush2.msra.mxu0 0.0
        %422 = vmatprep.subr.mxu0 0.0
        %423 = vmatpush2.msra.mxu0 0.0
        %424 = vmatprep.subr.mxu0 0.0
        %425 = vmatpush2.msra.mxu0 0.0
        %426 = vmatprep.subr.mxu0 0.0
        %427 = vmatpush2.msra.mxu0 0.0
        %428 = vmatprep.subr.mxu0 0.0
        %429 = vmatpush2.msra.mxu0 0.0
        %430 = vmatprep.subr.mxu0 0.0
        %431 = vmatpush2.msra.mxu0 0.0
        %432 = vmatprep.subr.mxu0 0.0
        %433 = vmatpush2.msra.mxu0 0.0
        %434 = vmatprep.subr.mxu0 0.0
        %435 = vmatpush2.msra.mxu0 0.0
        %436 = vmatprep.subr.mxu0 0.0
        %437 = vmatpush2.msra.mxu0 0.0
        %438 = vmatprep.subr.mxu0 0.0
        %439 = vmatpush2.msra.mxu0 0.0
        %440 = vmatprep.subr.mxu0 0.0
        %441 = vmatpush2.msra.mxu0 0.0
        %442 = vmatprep.subr.mxu0 0.0
        %443 = vmatpush2.msra.mxu0 0.0
        %444 = vmatprep.subr.mxu0 0.0
        %445 = vmatpush2.msra.mxu0 0.0
        %446 = vmatprep.subr.mxu0 0.0
        %447 = vmatpush2.msra.mxu0 0.0
        %448 = vmatprep.mubr.f32.mxu0 0.0
        %449 = vmatmul.mubr.f32.gmra.mxu0 %v375
        %v450 = vpop.f32.mrf.mxu0
        %v451 = vadd.f32 0.0, %v450
        %v452 = vpop.f32.mrf.mxu0
        %453 = vmatprep.mubr.f32.mxu0 0.0
        %454 = vmatmul.mubr.f32.gmra.mxu0 %v378
        %v455 = vpop.f32.mrf.mxu0
        %v456 = vadd.f32 0.0, %v455
        %v457 = vpop.f32.mrf.mxu0
        %458 = vdwg.mxu0
        %s459 = sld [smem:[#allocation2]]
        %v460 = vstv %s459
        %v461 = vmul.f32 %v451, %v460
        %v462 = vmul.f32 %v456, %v460
        %s463 = sld [smem:[#allocation2 + $0x1]]
        %v464 = vstv %s463
        %v465 = vadd.f32 %v461, %v464
        %v466 = vadd.f32 %v462, %v464
        %v467 = vmax.f32 %v465, 0.0
        %v468 = vmax.f32 %v466, 0.0
        %v469 = vpack.c.bf16 %v468, %v467
        %v470 = vld [vmem:[%s4] sm:$0xf]
        %v471 = vld [vmem:[%s4 + $0x4] sm:$0xf]
        %v472 = vld [vmem:[%s4 + $0x8] sm:$0xf]
        %v473 = vld [vmem:[%s4 + $0xc] sm:$0xf]
        %v474 = vld [vmem:[%s4 + $0x10] sm:$0xf]
        %v475 = vld [vmem:[%s4 + $0x14] sm:$0xf]
        %v476 = vld [vmem:[%s4 + $0x18] sm:$0xf]
        %v477 = vld [vmem:[%s4 + $0x1c] sm:$0xf]
        %v486 = vunpack.c.l.b16 %v470
        %v487 = vunpack.c.l.b16 %v471
        %v488 = vunpack.c.l.b16 %v472
        %v489 = vunpack.c.l.b16 %v473
        %v490 = vunpack.c.l.b16 %v474
        %v491 = vunpack.c.l.b16 %v475
        %v492 = vunpack.c.l.b16 %v476
        %v493 = vunpack.c.l.b16 %v477
        %v494 = vpack.c.b16 %v487, %v486
        %v495 = vpack.c.b16 %v489, %v488
        %v496 = vpack.c.b16 %v491, %v490
        %v497 = vpack.c.b16 %v493, %v492
        %vm502 = vcmask 523264
        %v504 = vsel %vm502, %v469, 0
        %506 = vmatprep.subr.bf16.mxu0 0
        %507 = vmatpush1.bf16.msra.mxu0 0
        %508 = vmatprep.subr.bf16.mxu0 0
        %509 = vmatpush1.bf16.msra.mxu0 0
        %510 = vmatprep.subr.bf16.mxu0 0
        %511 = vmatpush1.bf16.msra.mxu0 0
        %512 = vmatprep.subr.bf16.mxu0 0
        %513 = vmatpush1.bf16.msra.mxu0 0
        %514 = vmatprep.subr.bf16.mxu0 0
        %515 = vmatpush1.bf16.msra.mxu0 %v497
        %516 = vmatprep.subr.bf16.mxu0 0
        %517 = vmatpush1.bf16.msra.mxu0 %v496
        %518 = vmatprep.subr.bf16.mxu0 0
        %519 = vmatpush1.bf16.msra.mxu0 %v495
        %520 = vmatprep.subr.bf16.mxu0 0
        %521 = vmatpush1.bf16.msra.mxu0 %v494
        %522 = vmatprep.subr.bf16.mxu0 0
        %523 = vmatpush2.bf16.msra.mxu0 0
        %524 = vmatprep.subr.bf16.mxu0 0
        %525 = vmatpush2.bf16.msra.mxu0 0
        %526 = vmatprep.subr.bf16.mxu0 0
        %527 = vmatpush2.bf16.msra.mxu0 0
        %528 = vmatprep.subr.bf16.mxu0 0
        %529 = vmatpush2.bf16.msra.mxu0 0
        %530 = vmatprep.subr.bf16.mxu0 0
        %531 = vmatpush2.bf16.msra.mxu0 0
        %532 = vmatprep.subr.bf16.mxu0 0
        %533 = vmatpush2.bf16.msra.mxu0 0
        %534 = vmatprep.subr.bf16.mxu0 0
        %535 = vmatpush2.bf16.msra.mxu0 0
        %536 = vmatprep.subr.bf16.mxu0 0
        %537 = vmatpush2.bf16.msra.mxu0 0
        %538 = vmatprep.mubr.bf16.mxu0 0
        %539 = vmatmul.mubr.bf16.gmra.mxu0 %v504
        %v540 = vpop.f32.mrf.mxu0
        %v541 = vadd.f32 0.0, %v540
        %v542 = vpop.f32.mrf.mxu0
        %v543 = vpop.f32.mrf.mxu0
        %v544 = vadd.f32 0.0, %v543
        %v545 = vpop.f32.mrf.mxu0
        %546 = vdwg.mxu0
        %s547 = sld [smem:[#allocation5]]
        %v548 = vstv %s547
        %v549 = vmul.f32 %v541, %v548
        %v550 = vmul.f32 %v544, %v548
        %s551 = sld [smem:[#allocation5 + $0x1]]
        %v552 = vstv %s551
        %v553 = vadd.f32 %v549, %v552
        %v554 = vadd.f32 %v550, %v552
        %v555 = vmax.f32 %v553, 0.0
        %v556 = vmax.f32 %v554, 0.0
        %v557 = vpack.c.bf16 %v556, %v555
        %v558 = vld [vmem:[#allocation7] sm:$0xff]
        %v559 = vld [vmem:[#allocation7 + $0x8] sm:$0xff]
        %v560 = vld [vmem:[#allocation7 + $0x10] sm:$0xff]
        %v561 = vld [vmem:[#allocation7 + $0x18] sm:$0xff]
        %v562 = vld [vmem:[#allocation7 + $0x20] sm:$0xff]
        %v563 = vld [vmem:[#allocation7 + $0x28] sm:$0xff]
        %v564 = vld [vmem:[#allocation7 + $0x30] sm:$0xff]
        %v565 = vld [vmem:[#allocation7 + $0x38] sm:$0xff]
        %v566 = vld [vmem:[#allocation7 + $0x40] sm:$0xff]
        %v567 = vld [vmem:[#allocation7 + $0x48] sm:$0xff]
        %v568 = vld [vmem:[#allocation7 + $0x50] sm:$0xff]
        %v569 = vld [vmem:[#allocation7 + $0x58] sm:$0xff]
        %v570 = vld [vmem:[#allocation7 + $0x60] sm:$0xff]
        %v571 = vld [vmem:[#allocation7 + $0x68] sm:$0xff]
        %v572 = vld [vmem:[#allocation7 + $0x70] sm:$0xff]
        %v573 = vld [vmem:[#allocation7 + $0x78] sm:$0xff]
        %v574 = vld [vmem:[#allocation7 + $0x80] sm:$0xff]
        %v575 = vld [vmem:[#allocation7 + $0x88] sm:$0xff]
        %v576 = vld [vmem:[#allocation7 + $0x90] sm:$0xff]
        %v577 = vld [vmem:[#allocation7 + $0x98] sm:$0xff]
        %v578 = vld [vmem:[#allocation7 + $0xa0] sm:$0xff]
        %v579 = vld [vmem:[#allocation7 + $0xa8] sm:$0xff]
        %v580 = vld [vmem:[#allocation7 + $0xb0] sm:$0xff]
        %v581 = vld [vmem:[#allocation7 + $0xb8] sm:$0xff]
        %v582 = vld [vmem:[#allocation7 + $0xc0] sm:$0xff]
        %v583 = vld [vmem:[#allocation7 + $0xc8] sm:$0xff]
        %v584 = vld [vmem:[#allocation7 + $0xd0] sm:$0xff]
        %v585 = vld [vmem:[#allocation7 + $0xd8] sm:$0xff]
        %v586 = vld [vmem:[#allocation7 + $0xe0] sm:$0xff]
        %v587 = vld [vmem:[#allocation7 + $0xe8] sm:$0xff]
        %v588 = vld [vmem:[#allocation7 + $0xf0] sm:$0xff]
        %v589 = vld [vmem:[#allocation7 + $0xf8] sm:$0xff]
        %v590 = vld [vmem:[#allocation7 + $0x100] sm:$0xff]
        %v591 = vld [vmem:[#allocation7 + $0x108] sm:$0xff]
        %v592 = vld [vmem:[#allocation7 + $0x110] sm:$0xff]
        %v593 = vld [vmem:[#allocation7 + $0x118] sm:$0xff]
        %v594 = vld [vmem:[#allocation7 + $0x120] sm:$0xff]
        %v595 = vld [vmem:[#allocation7 + $0x128] sm:$0xff]
        %v596 = vld [vmem:[#allocation7 + $0x130] sm:$0xff]
        %v597 = vld [vmem:[#allocation7 + $0x138] sm:$0xff]
        %v598 = vld [vmem:[#allocation7 + $0x140] sm:$0xff]
        %v599 = vld [vmem:[#allocation7 + $0x148] sm:$0xff]
        %v600 = vld [vmem:[#allocation7 + $0x150] sm:$0xff]
        %v601 = vld [vmem:[#allocation7 + $0x158] sm:$0xff]
        %v602 = vld [vmem:[#allocation7 + $0x160] sm:$0xff]
        %v603 = vld [vmem:[#allocation7 + $0x168] sm:$0xff]
        %v604 = vld [vmem:[#allocation7 + $0x170] sm:$0xff]
        %v605 = vld [vmem:[#allocation7 + $0x178] sm:$0xff]
        %v606 = vld [vmem:[#allocation7 + $0x180] sm:$0xff]
        %v607 = vld [vmem:[#allocation7 + $0x188] sm:$0xff]
        %v608 = vld [vmem:[#allocation7 + $0x190] sm:$0xff]
        %v609 = vld [vmem:[#allocation7 + $0x198] sm:$0xff]
        %v610 = vld [vmem:[#allocation7 + $0x1a0] sm:$0xff]
        %v611 = vld [vmem:[#allocation7 + $0x1a8] sm:$0xff]
        %v612 = vld [vmem:[#allocation7 + $0x1b0] sm:$0xff]
        %v613 = vld [vmem:[#allocation7 + $0x1b8] sm:$0xff]
        %v614 = vld [vmem:[#allocation7 + $0x1c0] sm:$0xff]
        %v615 = vld [vmem:[#allocation7 + $0x1c8] sm:$0xff]
        %v616 = vld [vmem:[#allocation7 + $0x1d0] sm:$0xff]
        %v617 = vld [vmem:[#allocation7 + $0x1d8] sm:$0xff]
        %v618 = vld [vmem:[#allocation7 + $0x1e0] sm:$0xff]
        %v619 = vld [vmem:[#allocation7 + $0x1e8] sm:$0xff]
        %v620 = vld [vmem:[#allocation7 + $0x1f0] sm:$0xff]
        %v621 = vld [vmem:[#allocation7 + $0x1f8] sm:$0xff]
        %v686 = vunpack.c.l.b16 %v558
        %v687 = vunpack.c.h.b16 %v558
        %v688 = vunpack.c.l.b16 %v559
        %v689 = vunpack.c.h.b16 %v559
        %v690 = vunpack.c.l.b16 %v560
        %v691 = vunpack.c.h.b16 %v560
        %v692 = vunpack.c.l.b16 %v561
        %v693 = vunpack.c.h.b16 %v561
        %v694 = vunpack.c.l.b16 %v562
        %v695 = vunpack.c.h.b16 %v562
        %v696 = vunpack.c.l.b16 %v563
        %v697 = vunpack.c.h.b16 %v563
        %v698 = vunpack.c.l.b16 %v564
        %v699 = vunpack.c.h.b16 %v564
        %v700 = vunpack.c.l.b16 %v565
        %v701 = vunpack.c.h.b16 %v565
        %v702 = vunpack.c.l.b16 %v566
        %v703 = vunpack.c.h.b16 %v566
        %v704 = vunpack.c.l.b16 %v567
        %v705 = vunpack.c.h.b16 %v567
        %v706 = vunpack.c.l.b16 %v568
        %v707 = vunpack.c.h.b16 %v568
        %v708 = vunpack.c.l.b16 %v569
        %v709 = vunpack.c.h.b16 %v569
        %v710 = vunpack.c.l.b16 %v570
        %v711 = vunpack.c.h.b16 %v570
        %v712 = vunpack.c.l.b16 %v571
        %v713 = vunpack.c.h.b16 %v571
        %v714 = vunpack.c.l.b16 %v572
        %v715 = vunpack.c.h.b16 %v572
        %v716 = vunpack.c.l.b16 %v573
        %v717 = vunpack.c.h.b16 %v573
        %v718 = vunpack.c.l.b16 %v574
        %v719 = vunpack.c.h.b16 %v574
        %v720 = vunpack.c.l.b16 %v575
        %v721 = vunpack.c.h.b16 %v575
        %v722 = vunpack.c.l.b16 %v576
        %v723 = vunpack.c.h.b16 %v576
        %v724 = vunpack.c.l.b16 %v577
        %v725 = vunpack.c.h.b16 %v577
        %v726 = vunpack.c.l.b16 %v578
        %v727 = vunpack.c.h.b16 %v578
        %v728 = vunpack.c.l.b16 %v579
        %v729 = vunpack.c.h.b16 %v579
        %v730 = vunpack.c.l.b16 %v580
        %v731 = vunpack.c.h.b16 %v580
        %v732 = vunpack.c.l.b16 %v581
        %v733 = vunpack.c.h.b16 %v581
        %v734 = vunpack.c.l.b16 %v582
        %v735 = vunpack.c.h.b16 %v582
        %v736 = vunpack.c.l.b16 %v583
        %v737 = vunpack.c.h.b16 %v583
        %v738 = vunpack.c.l.b16 %v584
        %v739 = vunpack.c.h.b16 %v584
        %v740 = vunpack.c.l.b16 %v585
        %v741 = vunpack.c.h.b16 %v585
        %v742 = vunpack.c.l.b16 %v586
        %v743 = vunpack.c.h.b16 %v586
        %v744 = vunpack.c.l.b16 %v587
        %v745 = vunpack.c.h.b16 %v587
        %v746 = vunpack.c.l.b16 %v588
        %v747 = vunpack.c.h.b16 %v588
        %v748 = vunpack.c.l.b16 %v589
        %v749 = vunpack.c.h.b16 %v589
        %v750 = vunpack.c.l.b16 %v590
        %v751 = vunpack.c.h.b16 %v590
        %v752 = vunpack.c.l.b16 %v591
        %v753 = vunpack.c.h.b16 %v591
        %v754 = vunpack.c.l.b16 %v592
        %v755 = vunpack.c.h.b16 %v592
        %v756 = vunpack.c.l.b16 %v593
        %v757 = vunpack.c.h.b16 %v593
        %v758 = vunpack.c.l.b16 %v594
        %v759 = vunpack.c.h.b16 %v594
        %v760 = vunpack.c.l.b16 %v595
        %v761 = vunpack.c.h.b16 %v595
        %v762 = vunpack.c.l.b16 %v596
        %v763 = vunpack.c.h.b16 %v596
        %v764 = vunpack.c.l.b16 %v597
        %v765 = vunpack.c.h.b16 %v597
        %v766 = vunpack.c.l.b16 %v598
        %v767 = vunpack.c.h.b16 %v598
        %v768 = vunpack.c.l.b16 %v599
        %v769 = vunpack.c.h.b16 %v599
        %v770 = vunpack.c.l.b16 %v600
        %v771 = vunpack.c.h.b16 %v600
        %v772 = vunpack.c.l.b16 %v601
        %v773 = vunpack.c.h.b16 %v601
        %v774 = vunpack.c.l.b16 %v602
        %v775 = vunpack.c.h.b16 %v602
        %v776 = vunpack.c.l.b16 %v603
        %v777 = vunpack.c.h.b16 %v603
        %v778 = vunpack.c.l.b16 %v604
        %v779 = vunpack.c.h.b16 %v604
        %v780 = vunpack.c.l.b16 %v605
        %v781 = vunpack.c.h.b16 %v605
        %v782 = vunpack.c.l.b16 %v606
        %v783 = vunpack.c.h.b16 %v606
        %v784 = vunpack.c.l.b16 %v607
        %v785 = vunpack.c.h.b16 %v607
        %v786 = vunpack.c.l.b16 %v608
        %v787 = vunpack.c.h.b16 %v608
        %v788 = vunpack.c.l.b16 %v609
        %v789 = vunpack.c.h.b16 %v609
        %v790 = vunpack.c.l.b16 %v610
        %v791 = vunpack.c.h.b16 %v610
        %v792 = vunpack.c.l.b16 %v611
        %v793 = vunpack.c.h.b16 %v611
        %v794 = vunpack.c.l.b16 %v612
        %v795 = vunpack.c.h.b16 %v612
        %v796 = vunpack.c.l.b16 %v613
        %v797 = vunpack.c.h.b16 %v613
        %v798 = vunpack.c.l.b16 %v614
        %v799 = vunpack.c.h.b16 %v614
        %v800 = vunpack.c.l.b16 %v615
        %v801 = vunpack.c.h.b16 %v615
        %v802 = vunpack.c.l.b16 %v616
        %v803 = vunpack.c.h.b16 %v616
        %v804 = vunpack.c.l.b16 %v617
        %v805 = vunpack.c.h.b16 %v617
        %v806 = vunpack.c.l.b16 %v618
        %v807 = vunpack.c.h.b16 %v618
        %v808 = vunpack.c.l.b16 %v619
        %v809 = vunpack.c.h.b16 %v619
        %v810 = vunpack.c.l.b16 %v620
        %v811 = vunpack.c.h.b16 %v620
        %v812 = vunpack.c.l.b16 %v621
        %v813 = vunpack.c.h.b16 %v621
        %v814 = vpack.c.b16 %v694, %v686
        %v815 = vpack.c.b16 %v695, %v687
        %v816 = vpack.c.b16 %v696, %v688
        %v817 = vpack.c.b16 %v697, %v689
        %v818 = vpack.c.b16 %v698, %v690
        %v819 = vpack.c.b16 %v699, %v691
        %v820 = vpack.c.b16 %v700, %v692
        %v821 = vpack.c.b16 %v701, %v693
        %v822 = vpack.c.b16 %v710, %v702
        %v823 = vpack.c.b16 %v711, %v703
        %v824 = vpack.c.b16 %v712, %v704
        %v825 = vpack.c.b16 %v713, %v705
        %v826 = vpack.c.b16 %v714, %v706
        %v827 = vpack.c.b16 %v715, %v707
        %v828 = vpack.c.b16 %v716, %v708
        %v829 = vpack.c.b16 %v717, %v709
        %v830 = vpack.c.b16 %v726, %v718
        %v831 = vpack.c.b16 %v727, %v719
        %v832 = vpack.c.b16 %v728, %v720
        %v833 = vpack.c.b16 %v729, %v721
        %v834 = vpack.c.b16 %v730, %v722
        %v835 = vpack.c.b16 %v731, %v723
        %v836 = vpack.c.b16 %v732, %v724
        %v837 = vpack.c.b16 %v733, %v725
        %v838 = vpack.c.b16 %v742, %v734
        %v839 = vpack.c.b16 %v743, %v735
        %v840 = vpack.c.b16 %v744, %v736
        %v841 = vpack.c.b16 %v745, %v737
        %v842 = vpack.c.b16 %v746, %v738
        %v843 = vpack.c.b16 %v747, %v739
        %v844 = vpack.c.b16 %v748, %v740
        %v845 = vpack.c.b16 %v749, %v741
        %v846 = vpack.c.b16 %v758, %v750
        %v847 = vpack.c.b16 %v759, %v751
        %v848 = vpack.c.b16 %v760, %v752
        %v849 = vpack.c.b16 %v761, %v753
        %v850 = vpack.c.b16 %v762, %v754
        %v851 = vpack.c.b16 %v763, %v755
        %v852 = vpack.c.b16 %v764, %v756
        %v853 = vpack.c.b16 %v765, %v757
        %v854 = vpack.c.b16 %v774, %v766
        %v855 = vpack.c.b16 %v775, %v767
        %v856 = vpack.c.b16 %v776, %v768
        %v857 = vpack.c.b16 %v777, %v769
        %v858 = vpack.c.b16 %v778, %v770
        %v859 = vpack.c.b16 %v779, %v771
        %v860 = vpack.c.b16 %v780, %v772
        %v861 = vpack.c.b16 %v781, %v773
        %v862 = vpack.c.b16 %v790, %v782
        %v863 = vpack.c.b16 %v791, %v783
        %v864 = vpack.c.b16 %v792, %v784
        %v865 = vpack.c.b16 %v793, %v785
        %v866 = vpack.c.b16 %v794, %v786
        %v867 = vpack.c.b16 %v795, %v787
        %v868 = vpack.c.b16 %v796, %v788
        %v869 = vpack.c.b16 %v797, %v789
        %v870 = vpack.c.b16 %v806, %v798
        %v871 = vpack.c.b16 %v807, %v799
        %v872 = vpack.c.b16 %v808, %v800
        %v873 = vpack.c.b16 %v809, %v801
        %v874 = vpack.c.b16 %v810, %v802
        %v875 = vpack.c.b16 %v811, %v803
        %v876 = vpack.c.b16 %v812, %v804
        %v877 = vpack.c.b16 %v813, %v805
        %942 = vmatprep.subr.bf16.mxu0 %v871
        %943 = vmatpush1.bf16.msra.mxu0 %v870
        %944 = vmatprep.subr.bf16.mxu0 %v863
        %945 = vmatpush1.bf16.msra.mxu0 %v862
        %946 = vmatprep.subr.bf16.mxu0 %v855
        %947 = vmatpush1.bf16.msra.mxu0 %v854
        %948 = vmatprep.subr.bf16.mxu0 %v847
        %949 = vmatpush1.bf16.msra.mxu0 %v846
        %950 = vmatprep.subr.bf16.mxu0 %v839
        %951 = vmatpush1.bf16.msra.mxu0 %v838
        %952 = vmatprep.subr.bf16.mxu0 %v831
        %953 = vmatpush1.bf16.msra.mxu0 %v830
        %954 = vmatprep.subr.bf16.mxu0 %v823
        %955 = vmatpush1.bf16.msra.mxu0 %v822
        %956 = vmatprep.subr.bf16.mxu0 %v815
        %957 = vmatpush1.bf16.msra.mxu0 %v814
        %958 = vmatprep.subr.bf16.mxu0 0
        %959 = vmatpush2.bf16.msra.mxu0 0
        %960 = vmatprep.subr.bf16.mxu0 0
        %961 = vmatpush2.bf16.msra.mxu0 0
        %962 = vmatprep.subr.bf16.mxu0 0
        %963 = vmatpush2.bf16.msra.mxu0 0
        %964 = vmatprep.subr.bf16.mxu0 0
        %965 = vmatpush2.bf16.msra.mxu0 0
        %966 = vmatprep.subr.bf16.mxu0 0
        %967 = vmatpush2.bf16.msra.mxu0 0
        %968 = vmatprep.subr.bf16.mxu0 0
        %969 = vmatpush2.bf16.msra.mxu0 0
        %970 = vmatprep.subr.bf16.mxu0 0
        %971 = vmatpush2.bf16.msra.mxu0 0
        %972 = vmatprep.subr.bf16.mxu0 0
        %973 = vmatpush2.bf16.msra.mxu0 0
        %974 = vmatprep.mubr.bf16.mxu0 0
        %975 = vmatmul.mubr.bf16.gmra.mxu0 %v557
        %v976 = vpop.f32.mrf.mxu0
        %v977 = vadd.f32 0.0, %v976
        %v978 = vpop.f32.mrf.mxu0
        %v979 = vadd.f32 0.0, %v978
        %v980 = vpop.f32.mrf.mxu0
        %v981 = vadd.f32 0.0, %v980
        %v982 = vpop.f32.mrf.mxu0
        %v983 = vadd.f32 0.0, %v982
        %984 = vdwg.mxu0
        %985 = vmatprep.subr.bf16.mxu0 %v873
        %986 = vmatpush1.bf16.msra.mxu0 %v872
        %987 = vmatprep.subr.bf16.mxu0 %v865
        %988 = vmatpush1.bf16.msra.mxu0 %v864
        %989 = vmatprep.subr.bf16.mxu0 %v857
        %990 = vmatpush1.bf16.msra.mxu0 %v856
        %991 = vmatprep.subr.bf16.mxu0 %v849
        %992 = vmatpush1.bf16.msra.mxu0 %v848
        %993 = vmatprep.subr.bf16.mxu0 %v841
        %994 = vmatpush1.bf16.msra.mxu0 %v840
        %995 = vmatprep.subr.bf16.mxu0 %v833
        %996 = vmatpush1.bf16.msra.mxu0 %v832
        %997 = vmatprep.subr.bf16.mxu0 %v825
        %998 = vmatpush1.bf16.msra.mxu0 %v824
        %999 = vmatprep.subr.bf16.mxu0 %v817
        %1000 = vmatpush1.bf16.msra.mxu0 %v816
        %1001 = vmatprep.subr.bf16.mxu0 0
        %1002 = vmatpush2.bf16.msra.mxu0 0
        %1003 = vmatprep.subr.bf16.mxu0 0
        %1004 = vmatpush2.bf16.msra.mxu0 0
        %1005 = vmatprep.subr.bf16.mxu0 0
        %1006 = vmatpush2.bf16.msra.mxu0 0
        %1007 = vmatprep.subr.bf16.mxu0 0
        %1008 = vmatpush2.bf16.msra.mxu0 0
        %1009 = vmatprep.subr.bf16.mxu0 0
        %1010 = vmatpush2.bf16.msra.mxu0 0
        %1011 = vmatprep.subr.bf16.mxu0 0
        %1012 = vmatpush2.bf16.msra.mxu0 0
        %1013 = vmatprep.subr.bf16.mxu0 0
        %1014 = vmatpush2.bf16.msra.mxu0 0
        %1015 = vmatprep.subr.bf16.mxu0 0
        %1016 = vmatpush2.bf16.msra.mxu0 0
        %1017 = vmatprep.mubr.bf16.mxu0 0
        %1018 = vmatmul.mubr.bf16.gmra.mxu0 %v557
        %v1019 = vpop.f32.mrf.mxu0
        %v1020 = vadd.f32 0.0, %v1019
        %v1021 = vpop.f32.mrf.mxu0
        %v1022 = vadd.f32 0.0, %v1021
        %v1023 = vpop.f32.mrf.mxu0
        %v1024 = vadd.f32 0.0, %v1023
        %v1025 = vpop.f32.mrf.mxu0
        %v1026 = vadd.f32 0.0, %v1025
        %1027 = vdwg.mxu0
        %1028 = vmatprep.subr.bf16.mxu0 %v875
        %1029 = vmatpush1.bf16.msra.mxu0 %v874
        %1030 = vmatprep.subr.bf16.mxu0 %v867
        %1031 = vmatpush1.bf16.msra.mxu0 %v866
        %1032 = vmatprep.subr.bf16.mxu0 %v859
        %1033 = vmatpush1.bf16.msra.mxu0 %v858
        %1034 = vmatprep.subr.bf16.mxu0 %v851
        %1035 = vmatpush1.bf16.msra.mxu0 %v850
        %1036 = vmatprep.subr.bf16.mxu0 %v843
        %1037 = vmatpush1.bf16.msra.mxu0 %v842
        %1038 = vmatprep.subr.bf16.mxu0 %v835
        %1039 = vmatpush1.bf16.msra.mxu0 %v834
        %1040 = vmatprep.subr.bf16.mxu0 %v827
        %1041 = vmatpush1.bf16.msra.mxu0 %v826
        %1042 = vmatprep.subr.bf16.mxu0 %v819
        %1043 = vmatpush1.bf16.msra.mxu0 %v818
        %1044 = vmatprep.subr.bf16.mxu0 0
        %1045 = vmatpush2.bf16.msra.mxu0 0
        %1046 = vmatprep.subr.bf16.mxu0 0
        %1047 = vmatpush2.bf16.msra.mxu0 0
        %1048 = vmatprep.subr.bf16.mxu0 0
        %1049 = vmatpush2.bf16.msra.mxu0 0
        %1050 = vmatprep.subr.bf16.mxu0 0
        %1051 = vmatpush2.bf16.msra.mxu0 0
        %1052 = vmatprep.subr.bf16.mxu0 0
        %1053 = vmatpush2.bf16.msra.mxu0 0
        %1054 = vmatprep.subr.bf16.mxu0 0
        %1055 = vmatpush2.bf16.msra.mxu0 0
        %1056 = vmatprep.subr.bf16.mxu0 0
        %1057 = vmatpush2.bf16.msra.mxu0 0
        %1058 = vmatprep.subr.bf16.mxu0 0
        %1059 = vmatpush2.bf16.msra.mxu0 0
        %1060 = vmatprep.mubr.bf16.mxu0 0
        %1061 = vmatmul.mubr.bf16.gmra.mxu0 %v557
        %v1062 = vpop.f32.mrf.mxu0
        %v1063 = vadd.f32 0.0, %v1062
        %v1064 = vpop.f32.mrf.mxu0
        %v1065 = vadd.f32 0.0, %v1064
        %v1066 = vpop.f32.mrf.mxu0
        %v1067 = vadd.f32 0.0, %v1066
        %v1068 = vpop.f32.mrf.mxu0
        %v1069 = vadd.f32 0.0, %v1068
        %1070 = vdwg.mxu0
        %1071 = vmatprep.subr.bf16.mxu0 %v877
        %1072 = vmatpush1.bf16.msra.mxu0 %v876
        %1073 = vmatprep.subr.bf16.mxu0 %v869
        %1074 = vmatpush1.bf16.msra.mxu0 %v868
        %1075 = vmatprep.subr.bf16.mxu0 %v861
        %1076 = vmatpush1.bf16.msra.mxu0 %v860
        %1077 = vmatprep.subr.bf16.mxu0 %v853
        %1078 = vmatpush1.bf16.msra.mxu0 %v852
        %1079 = vmatprep.subr.bf16.mxu0 %v845
        %1080 = vmatpush1.bf16.msra.mxu0 %v844
        %1081 = vmatprep.subr.bf16.mxu0 %v837
        %1082 = vmatpush1.bf16.msra.mxu0 %v836
        %1083 = vmatprep.subr.bf16.mxu0 %v829
        %1084 = vmatpush1.bf16.msra.mxu0 %v828
        %1085 = vmatprep.subr.bf16.mxu0 %v821
        %1086 = vmatpush1.bf16.msra.mxu0 %v820
        %1087 = vmatprep.subr.bf16.mxu0 0
        %1088 = vmatpush2.bf16.msra.mxu0 0
        %1089 = vmatprep.subr.bf16.mxu0 0
        %1090 = vmatpush2.bf16.msra.mxu0 0
        %1091 = vmatprep.subr.bf16.mxu0 0
        %1092 = vmatpush2.bf16.msra.mxu0 0
        %1093 = vmatprep.subr.bf16.mxu0 0
        %1094 = vmatpush2.bf16.msra.mxu0 0
        %1095 = vmatprep.subr.bf16.mxu0 0
        %1096 = vmatpush2.bf16.msra.mxu0 0
        %1097 = vmatprep.subr.bf16.mxu0 0
        %1098 = vmatpush2.bf16.msra.mxu0 0
        %1099 = vmatprep.subr.bf16.mxu0 0
        %1100 = vmatpush2.bf16.msra.mxu0 0
        %1101 = vmatprep.subr.bf16.mxu0 0
        %1102 = vmatpush2.bf16.msra.mxu0 0
        %1103 = vmatprep.mubr.bf16.mxu0 0
        %1104 = vmatmul.mubr.bf16.gmra.mxu0 %v557
        %v1105 = vpop.f32.mrf.mxu0
        %v1106 = vadd.f32 0.0, %v1105
        %v1107 = vpop.f32.mrf.mxu0
        %v1108 = vadd.f32 0.0, %v1107
        %v1109 = vpop.f32.mrf.mxu0
        %v1110 = vadd.f32 0.0, %v1109
        %v1111 = vpop.f32.mrf.mxu0
        %v1112 = vadd.f32 0.0, %v1111
        %1113 = vdwg.mxu0
        %v1114 = vadd.f32 %v977, %v981
        %v1115 = vrot.slane %v1114, 4
        %v1116 = vadd.f32 %v1114, %v1115
        %v1117 = vrot.slane %v1116, 2
        %v1118 = vadd.f32 %v1116, %v1117
        %v1119 = vrot.slane %v1118, 1
        %v1120 = vadd.f32 %v1118, %v1119
        %v1121 = vadd.f32 %v979, %v983
        %v1122 = vrot.slane %v1121, 4
        %v1123 = vadd.f32 %v1121, %v1122
        %v1124 = vrot.slane %v1123, 2
        %v1125 = vadd.f32 %v1123, %v1124
        %v1126 = vrot.slane %v1125, 1
        %v1127 = vadd.f32 %v1125, %v1126
        %v1128 = vadd.f32 %v1020, %v1024
        %v1129 = vrot.slane %v1128, 4
        %v1130 = vadd.f32 %v1128, %v1129
        %v1131 = vrot.slane %v1130, 2
        %v1132 = vadd.f32 %v1130, %v1131
        %v1133 = vrot.slane %v1132, 1
        %v1134 = vadd.f32 %v1132, %v1133
        %v1135 = vadd.f32 %v1022, %v1026
        %v1136 = vrot.slane %v1135, 4
        %v1137 = vadd.f32 %v1135, %v1136
        %v1138 = vrot.slane %v1137, 2
        %v1139 = vadd.f32 %v1137, %v1138
        %v1140 = vrot.slane %v1139, 1
        %v1141 = vadd.f32 %v1139, %v1140
        %v1142 = vadd.f32 %v1063, %v1067
        %v1143 = vrot.slane %v1142, 4
        %v1144 = vadd.f32 %v1142, %v1143
        %v1145 = vrot.slane %v1144, 2
        %v1146 = vadd.f32 %v1144, %v1145
        %v1147 = vrot.slane %v1146, 1
        %v1148 = vadd.f32 %v1146, %v1147
        %v1149 = vadd.f32 %v1065, %v1069
        %v1150 = vrot.slane %v1149, 4
        %v1151 = vadd.f32 %v1149, %v1150
        %v1152 = vrot.slane %v1151, 2
        %v1153 = vadd.f32 %v1151, %v1152
        %v1154 = vrot.slane %v1153, 1
        %v1155 = vadd.f32 %v1153, %v1154
        %v1156 = vadd.f32 %v1106, %v1110
        %v1157 = vrot.slane %v1156, 4
        %v1158 = vadd.f32 %v1156, %v1157
        %v1159 = vrot.slane %v1158, 2
        %v1160 = vadd.f32 %v1158, %v1159
        %v1161 = vrot.slane %v1160, 1
        %v1162 = vadd.f32 %v1160, %v1161
        %v1163 = vadd.f32 %v1108, %v1112
        %v1164 = vrot.slane %v1163, 4
        %v1165 = vadd.f32 %v1163, %v1164
        %v1166 = vrot.slane %v1165, 2
        %v1167 = vadd.f32 %v1165, %v1166
        %v1168 = vrot.slane %v1167, 1
        %v1169 = vadd.f32 %v1167, %v1168
        %v1178 = vcombine.low %v1120, %v1127
        %v1179 = vcombine.low %v1134, %v1141
        %v1180 = vcombine.low %v1148, %v1155
        %v1181 = vcombine.low %v1162, %v1169
        %v1183 = vunpack.c.l.s4 1966171168
        %v1184 = vunpack.c.0.s8 %v1183
        %v1185 = vlaneseq
        %v1186 = vshrl.u32 %v1185, 7
        %v1187 = vsub.s32 %v1184, %v1186
        %v1188 = vrot.slane %v1178, %v1187
        %v1190 = vunpack.c.l.s4 1966171168
        %v1191 = vunpack.c.0.s8 %v1190
        %v1192 = vlaneseq
        %v1193 = vshrl.u32 %v1192, 7
        %v1194 = vsub.s32 %v1191, %v1193
        %v1195 = vrot.slane %v1179, %v1194
        %v1197 = vunpack.c.l.s4 1966171168
        %v1198 = vunpack.c.0.s8 %v1197
        %v1199 = vlaneseq
        %v1200 = vshrl.u32 %v1199, 7
        %v1201 = vsub.s32 %v1198, %v1200
        %v1202 = vrot.slane %v1180, %v1201
        %v1204 = vunpack.c.l.s4 1966171168
        %v1205 = vunpack.c.0.s8 %v1204
        %v1206 = vlaneseq
        %v1207 = vshrl.u32 %v1206, 7
        %v1208 = vsub.s32 %v1205, %v1207
        %v1209 = vrot.slane %v1181, %v1208
        %v1210 = vcombine.low %v1188, %v1195
        %v1211 = vcombine.low %v1202, %v1209
        %v1213 = vunpack.c.l.s4 1966171168
        %v1214 = vunpack.c.0.s8 %v1213
        %v1215 = vlaneseq
        %v1216 = vshrl.u32 %v1215, 7
        %v1217 = vsub.s32 %v1214, %v1216
        %v1218 = vrot.slane %v1210, %v1217
        %v1220 = vunpack.c.l.s4 1966171168
        %v1221 = vunpack.c.0.s8 %v1220
        %v1222 = vlaneseq
        %v1223 = vshrl.u32 %v1222, 7
        %v1224 = vsub.s32 %v1221, %v1223
        %v1225 = vrot.slane %v1211, %v1224
        %v1226 = vcombine.low %v1218, %v1225
        %1228 = vst [vmem:[%s364] sm:$0xff] %v1226
        %v1229 = vmul.f32 %v977, %v977
        %v1230 = vmul.f32 %v979, %v979
        %v1231 = vmul.f32 %v1020, %v1020
        %v1232 = vmul.f32 %v1022, %v1022
        %v1233 = vmul.f32 %v1063, %v1063
        %v1234 = vmul.f32 %v1065, %v1065
        %v1235 = vmul.f32 %v1106, %v1106
        %v1236 = vmul.f32 %v1108, %v1108
        %v1237 = vmul.f32 %v981, %v981
        %v1238 = vmul.f32 %v983, %v983
        %v1239 = vmul.f32 %v1024, %v1024
        %v1240 = vmul.f32 %v1026, %v1026
        %v1241 = vmul.f32 %v1067, %v1067
        %v1242 = vmul.f32 %v1069, %v1069
        %v1243 = vmul.f32 %v1110, %v1110
        %v1244 = vmul.f32 %v1112, %v1112
        %v1245 = vadd.f32 %v1229, %v1237
        %v1246 = vrot.slane %v1245, 4
        %v1247 = vadd.f32 %v1245, %v1246
        %v1248 = vrot.slane %v1247, 2
        %v1249 = vadd.f32 %v1247, %v1248
        %v1250 = vrot.slane %v1249, 1
        %v1251 = vadd.f32 %v1249, %v1250
        %v1252 = vadd.f32 %v1230, %v1238
        %v1253 = vrot.slane %v1252, 4
        %v1254 = vadd.f32 %v1252, %v1253
        %v1255 = vrot.slane %v1254, 2
        %v1256 = vadd.f32 %v1254, %v1255
        %v1257 = vrot.slane %v1256, 1
        %v1258 = vadd.f32 %v1256, %v1257
        %v1259 = vadd.f32 %v1231, %v1239
        %v1260 = vrot.slane %v1259, 4
        %v1261 = vadd.f32 %v1259, %v1260
        %v1262 = vrot.slane %v1261, 2
        %v1263 = vadd.f32 %v1261, %v1262
        %v1264 = vrot.slane %v1263, 1
        %v1265 = vadd.f32 %v1263, %v1264
        %v1266 = vadd.f32 %v1232, %v1240
        %v1267 = vrot.slane %v1266, 4
        %v1268 = vadd.f32 %v1266, %v1267
        %v1269 = vrot.slane %v1268, 2
        %v1270 = vadd.f32 %v1268, %v1269
        %v1271 = vrot.slane %v1270, 1
        %v1272 = vadd.f32 %v1270, %v1271
        %v1273 = vadd.f32 %v1233, %v1241
        %v1274 = vrot.slane %v1273, 4
        %v1275 = vadd.f32 %v1273, %v1274
        %v1276 = vrot.slane %v1275, 2
        %v1277 = vadd.f32 %v1275, %v1276
        %v1278 = vrot.slane %v1277, 1
        %v1279 = vadd.f32 %v1277, %v1278
        %v1280 = vadd.f32 %v1234, %v1242
        %v1281 = vrot.slane %v1280, 4
        %v1282 = vadd.f32 %v1280, %v1281
        %v1283 = vrot.slane %v1282, 2
        %v1284 = vadd.f32 %v1282, %v1283
        %v1285 = vrot.slane %v1284, 1
        %v1286 = vadd.f32 %v1284, %v1285
        %v1287 = vadd.f32 %v1235, %v1243
        %v1288 = vrot.slane %v1287, 4
        %v1289 = vadd.f32 %v1287, %v1288
        %v1290 = vrot.slane %v1289, 2
        %v1291 = vadd.f32 %v1289, %v1290
        %v1292 = vrot.slane %v1291, 1
        %v1293 = vadd.f32 %v1291, %v1292
        %v1294 = vadd.f32 %v1236, %v1244
        %v1295 = vrot.slane %v1294, 4
        %v1296 = vadd.f32 %v1294, %v1295
        %v1297 = vrot.slane %v1296, 2
        %v1298 = vadd.f32 %v1296, %v1297
        %v1299 = vrot.slane %v1298, 1
        %v1300 = vadd.f32 %v1298, %v1299
        %v1309 = vcombine.low %v1251, %v1258
        %v1310 = vcombine.low %v1265, %v1272
        %v1311 = vcombine.low %v1279, %v1286
        %v1312 = vcombine.low %v1293, %v1300
        %v1314 = vunpack.c.l.s4 1966171168
        %v1315 = vunpack.c.0.s8 %v1314
        %v1316 = vlaneseq
        %v1317 = vshrl.u32 %v1316, 7
        %v1318 = vsub.s32 %v1315, %v1317
        %v1319 = vrot.slane %v1309, %v1318
        %v1321 = vunpack.c.l.s4 1966171168
        %v1322 = vunpack.c.0.s8 %v1321
        %v1323 = vlaneseq
        %v1324 = vshrl.u32 %v1323, 7
        %v1325 = vsub.s32 %v1322, %v1324
        %v1326 = vrot.slane %v1310, %v1325
        %v1328 = vunpack.c.l.s4 1966171168
        %v1329 = vunpack.c.0.s8 %v1328
        %v1330 = vlaneseq
        %v1331 = vshrl.u32 %v1330, 7
        %v1332 = vsub.s32 %v1329, %v1331
        %v1333 = vrot.slane %v1311, %v1332
        %v1335 = vunpack.c.l.s4 1966171168
        %v1336 = vunpack.c.0.s8 %v1335
        %v1337 = vlaneseq
        %v1338 = vshrl.u32 %v1337, 7
        %v1339 = vsub.s32 %v1336, %v1338
        %v1340 = vrot.slane %v1312, %v1339
        %v1341 = vcombine.low %v1319, %v1326
        %v1342 = vcombine.low %v1333, %v1340
        %v1344 = vunpack.c.l.s4 1966171168
        %v1345 = vunpack.c.0.s8 %v1344
        %v1346 = vlaneseq
        %v1347 = vshrl.u32 %v1346, 7
        %v1348 = vsub.s32 %v1345, %v1347
        %v1349 = vrot.slane %v1341, %v1348
        %v1351 = vunpack.c.l.s4 1966171168
        %v1352 = vunpack.c.0.s8 %v1351
        %v1353 = vlaneseq
        %v1354 = vshrl.u32 %v1353, 7
        %v1355 = vsub.s32 %v1352, %v1354
        %v1356 = vrot.slane %v1342, %v1355
        %v1357 = vcombine.low %v1349, %v1356
        %1359 = vst [vmem:[%s368] sm:$0xff] %v1357
        %v1360 = vmax.f32 %v977, %v981
        %v1361 = vrot.slane %v1360, 4
        %v1362 = vmax.f32 %v1360, %v1361
        %v1363 = vrot.slane %v1362, 2
        %v1364 = vmax.f32 %v1362, %v1363
        %v1365 = vrot.slane %v1364, 1
        %v1366 = vmax.f32 %v1364, %v1365
        %v1367 = vmax.f32 %v979, %v983
        %v1368 = vrot.slane %v1367, 4
        %v1369 = vmax.f32 %v1367, %v1368
        %v1370 = vrot.slane %v1369, 2
        %v1371 = vmax.f32 %v1369, %v1370
        %v1372 = vrot.slane %v1371, 1
        %v1373 = vmax.f32 %v1371, %v1372
        %v1374 = vmax.f32 %v1020, %v1024
        %v1375 = vrot.slane %v1374, 4
        %v1376 = vmax.f32 %v1374, %v1375
        %v1377 = vrot.slane %v1376, 2
        %v1378 = vmax.f32 %v1376, %v1377
        %v1379 = vrot.slane %v1378, 1
        %v1380 = vmax.f32 %v1378, %v1379
        %v1381 = vmax.f32 %v1022, %v1026
        %v1382 = vrot.slane %v1381, 4
        %v1383 = vmax.f32 %v1381, %v1382
        %v1384 = vrot.slane %v1383, 2
        %v1385 = vmax.f32 %v1383, %v1384
        %v1386 = vrot.slane %v1385, 1
        %v1387 = vmax.f32 %v1385, %v1386
        %v1388 = vmax.f32 %v1063, %v1067
        %v1389 = vrot.slane %v1388, 4
        %v1390 = vmax.f32 %v1388, %v1389
        %v1391 = vrot.slane %v1390, 2
        %v1392 = vmax.f32 %v1390, %v1391
        %v1393 = vrot.slane %v1392, 1
        %v1394 = vmax.f32 %v1392, %v1393
        %v1395 = vmax.f32 %v1065, %v1069
        %v1396 = vrot.slane %v1395, 4
        %v1397 = vmax.f32 %v1395, %v1396
        %v1398 = vrot.slane %v1397, 2
        %v1399 = vmax.f32 %v1397, %v1398
        %v1400 = vrot.slane %v1399, 1
        %v1401 = vmax.f32 %v1399, %v1400
        %v1402 = vmax.f32 %v1106, %v1110
        %v1403 = vrot.slane %v1402, 4
        %v1404 = vmax.f32 %v1402, %v1403
        %v1405 = vrot.slane %v1404, 2
        %v1406 = vmax.f32 %v1404, %v1405
        %v1407 = vrot.slane %v1406, 1
        %v1408 = vmax.f32 %v1406, %v1407
        %v1409 = vmax.f32 %v1108, %v1112
        %v1410 = vrot.slane %v1409, 4
        %v1411 = vmax.f32 %v1409, %v1410
        %v1412 = vrot.slane %v1411, 2
        %v1413 = vmax.f32 %v1411, %v1412
        %v1414 = vrot.slane %v1413, 1
        %v1415 = vmax.f32 %v1413, %v1414
        %v1424 = vcombine.low %v1366, %v1373
        %v1425 = vcombine.low %v1380, %v1387
        %v1426 = vcombine.low %v1394, %v1401
        %v1427 = vcombine.low %v1408, %v1415
        %v1429 = vunpack.c.l.s4 1966171168
        %v1430 = vunpack.c.0.s8 %v1429
        %v1431 = vlaneseq
        %v1432 = vshrl.u32 %v1431, 7
        %v1433 = vsub.s32 %v1430, %v1432
        %v1434 = vrot.slane %v1424, %v1433
        %v1436 = vunpack.c.l.s4 1966171168
        %v1437 = vunpack.c.0.s8 %v1436
        %v1438 = vlaneseq
        %v1439 = vshrl.u32 %v1438, 7
        %v1440 = vsub.s32 %v1437, %v1439
        %v1441 = vrot.slane %v1425, %v1440
        %v1443 = vunpack.c.l.s4 1966171168
        %v1444 = vunpack.c.0.s8 %v1443
        %v1445 = vlaneseq
        %v1446 = vshrl.u32 %v1445, 7
        %v1447 = vsub.s32 %v1444, %v1446
        %v1448 = vrot.slane %v1426, %v1447
        %v1450 = vunpack.c.l.s4 1966171168
        %v1451 = vunpack.c.0.s8 %v1450
        %v1452 = vlaneseq
        %v1453 = vshrl.u32 %v1452, 7
        %v1454 = vsub.s32 %v1451, %v1453
        %v1455 = vrot.slane %v1427, %v1454
        %v1456 = vcombine.low %v1434, %v1441
        %v1457 = vcombine.low %v1448, %v1455
        %v1459 = vunpack.c.l.s4 1966171168
        %v1460 = vunpack.c.0.s8 %v1459
        %v1461 = vlaneseq
        %v1462 = vshrl.u32 %v1461, 7
        %v1463 = vsub.s32 %v1460, %v1462
        %v1464 = vrot.slane %v1456, %v1463
        %v1466 = vunpack.c.l.s4 1966171168
        %v1467 = vunpack.c.0.s8 %v1466
        %v1468 = vlaneseq
        %v1469 = vshrl.u32 %v1468, 7
        %v1470 = vsub.s32 %v1467, %v1469
        %v1471 = vrot.slane %v1457, %v1470
        %v1472 = vcombine.low %v1464, %v1471
        %1474 = vst [vmem:[%s360] sm:$0xff] %v1472
        %p1475 = scmp.lt.s32.totalorder %s23, 1
        %s1476 = scalar_select %p1475, %s23, 1
        %s1477 = smul.addr %s1476, 8
        %s1478 = scalar_lea.vmem %s6, %s1477
        %p1479 = scmp.lt.s32.totalorder %s23, 1
        %s1480 = scalar_select %p1479, %s23, 1
        %s1481 = smul.addr %s1480, 8
        %s1482 = scalar_lea.vmem %s7, %s1481
        %p1483 = scmp.lt.s32.totalorder %s23, 1
        %s1484 = scalar_select %p1483, %s23, 1
        %s1485 = smul.addr %s1484, 8
        %s1486 = scalar_lea.vmem %s8, %s1485
        // Predicated region
        $region57: #{t_net_forward.6} parent=43 // pred_check
          %p1487 = pneg %p172
        $region58: #{t_net_forward.6} parent=43 // pred_check_branch
          %1489 = sbr.rel (%p1487) target = $region60
        $region59: #{t_net_forward.6} parent=43 // pred_region
          _
        $region60: #{t_net_forward.6} parent=43 // pred_fallthru
          _
        // Predicated region
        $region61: #{t_net_forward.6} parent=43 // pred_check
          %p1490 = pneg %p198
        $region62: #{t_net_forward.6} parent=43 // pred_check_branch
          %1492 = sbr.rel (%p1490) target = $region64
        $region63: #{t_net_forward.6} parent=43 // pred_region
          _
        $region64: #{t_net_forward.6} parent=43 // pred_fallthru
          _
        // Predicated region
        $region65: #{t_net_forward.6} parent=43 // pred_check
          %p1493 = pneg %p224
        $region66: #{t_net_forward.6} parent=43 // pred_check_branch
          %1495 = sbr.rel (%p1493) target = $region68
        $region67: #{t_net_forward.6} parent=43 // pred_region
          _
        $region68: #{t_net_forward.6} parent=43 // pred_fallthru
          _
      $region44: #{t_net_forward.6} parent=5 // pred_fallthru
        _
      %p1496 = scmp.le.s32.totalorder 2, %s18
      // Predicated region
      $region69: #{t_net_forward.6} parent=5 // pred_check
        %p1497 = pneg %p1496
      $region70: #{t_net_forward.6} parent=5 // pred_check_branch
        %1499 = sbr.rel (%p1497) target = $region72
      $region71: #{t_net_forward.6} parent=5 // pred_region
        %s1500 = ssub.s32 %s18, 2
        // Predicated region
        $region73: #{t_net_forward.6} parent=71 // pred_check
          %p1501 = pneg %p178
        $region74: #{t_net_forward.6} parent=71 // pred_check_branch
          %1503 = sbr.rel (%p1501) target = $region76
        $region75: #{t_net_forward.6} parent=71 // pred_region
          %p1504 = scmp.lt.s32.totalorder %s24, 1
          %s1505 = scalar_select %p1504, %s24, 1
          %s1506 = smul.addr %s1505, 8
          %s1507 = scalar_lea.vmem %s6, %s1506
        $region76: #{t_net_forward.6} parent=71 // pred_fallthru
          _
        // Predicated region
        $region77: #{t_net_forward.6} parent=71 // pred_check
          %p1508 = pneg %p204
        $region78: #{t_net_forward.6} parent=71 // pred_check_branch
          %1510 = sbr.rel (%p1508) target = $region80
        $region79: #{t_net_forward.6} parent=71 // pred_region
          %p1511 = scmp.lt.s32.totalorder %s24, 1
          %s1512 = scalar_select %p1511, %s24, 1
          %s1513 = smul.addr %s1512, 8
          %s1514 = scalar_lea.vmem %s7, %s1513
        $region80: #{t_net_forward.6} parent=71 // pred_fallthru
          _
        // Predicated region
        $region81: #{t_net_forward.6} parent=71 // pred_check
          %p1515 = pneg %p230
        $region82: #{t_net_forward.6} parent=71 // pred_check_branch
          %1517 = sbr.rel (%p1515) target = $region84
        $region83: #{t_net_forward.6} parent=71 // pred_region
          %p1518 = scmp.lt.s32.totalorder %s24, 1
          %s1519 = scalar_select %p1518, %s24, 1
          %s1520 = smul.addr %s1519, 8
          %s1521 = scalar_lea.vmem %s8, %s1520
        $region84: #{t_net_forward.6} parent=71 // pred_fallthru
          _
      $region72: #{t_net_forward.6} parent=5 // pred_fallthru
        _
    $region6: #{t_net_forward.6} parent=1 // loop_footer
      %s22 = sadd.s32 1, %s18
    $region7: #{t_net_forward.6} parent=1 // loop_footer_branch
      %17 = sbr.rel target = $region3
    $region8: #{t_net_forward.6} parent=1 // loop_exit
      _
    %1522 = vsyncpa [#allocation3], 1
    %s1523 = scalar_lea.sflag [#allocation3], 1
    %1524 = vsyncpa %s1523, 1
    %1525 = vsyncpa [#allocation4], 1
    %s1526 = scalar_lea.sflag [#allocation4], 1
    %1527 = vsyncpa %s1526, 1
    %1528 = vsyncpa [#allocation6], 1

// kernel: t_net_forward.7
$region0: #{t_net_forward.7}
  #allocation0 [shape = 'u32[]', space=smem, size = 0x4, offset = 0x4, fixed_abs, tag = 'smem constant byte address 0x4 - core index']
  #allocation1 [shape = 'u32[144,128]{1,0:T(1,128)}', space=vmem, size = 0x12000, scoped, tag = 'internal scratch']
  %s0 = inlined_call_operand.vmem [shape: f32[2], index: 0, kind: input, shape index: {}]
  %s1 = inlined_call_operand.vmem [shape: f32[2,1024], index: 1, kind: input, shape index: {}]
  %s2 = inlined_call_operand.hbm [shape: bf16[1024,512], index: 2, kind: input, shape index: {}]
  %s3 = inlined_call_operand.vmem [shape: bf16[512,256], index: 3, kind: input, shape index: {}]
  %s4 = inlined_call_operand.vmem [shape: bf16[256,128], index: 4, kind: input, shape index: {}]
  %s5 = inlined_call_operand.vmem [shape: f32[1,128], index: 5, kind: input, shape index: {}]
  %s6 = inlined_call_operand.vmem [shape: f32[2,128], index: 6, kind: output, shape index: {}]
  %s7 = sld [smem:[#allocation0]]
  $region42: #{t_net_forward.7} parent=0
    _
  %s9 = ssub.s32 1, %s7
  %s10 = scalar_select 0, %s9, %s7
  $region1: #{t_net_forward.7} parent=0
    #allocation2 [shape = 'u8[512]{0}', space=smem, size = 0x200, scoped, tag = 'input window, operand 0, single buffered']
    #allocation3 [shape = 's32[1]{0}', space=sflag, size = 0x4, scoped, tag = 'scoped memory for t_net_forward.7']
    #allocation4 [shape = 's32[1]{0}', space=sflag, size = 0x4, scoped, tag = 'scoped memory for t_net_forward.7']
    #allocation5 [shape = 'u8[1048576]{0}', space=vmem, size = 0x100000, scoped, tag = 'input window, operand 2, single buffered']
    %11 = vsyncpa [#allocation4], 0
    %12 = vsyncpa [#allocation3], 0
    // Predicated region
    $region2: #{t_net_forward.7} parent=1 // pred_check
      _
    $region3: #{t_net_forward.7} parent=1 // pred_check_branch
      %14 = sbr.rel (0) target = $region5
    $region4: #{t_net_forward.7} parent=1 // pred_region
      %s16 = ssub.s32 16, 16
      %17 = vsyncadd [#allocation4], %s16
      %s19 = sshll.u32 %s0, 4
      %s20 = int_to_ptr.vmem [resolvable:$true] %s19
      %22 = dma.vmem_to_smem %s20, 16, [#allocation2], [#allocation4]
    $region5: #{t_net_forward.7} parent=1 // pred_fallthru
      _
    // Predicated region
    $region6: #{t_net_forward.7} parent=1 // pred_check
      _
    $region7: #{t_net_forward.7} parent=1 // pred_check_branch
      %24 = sbr.rel (0) target = $region9
    $region8: #{t_net_forward.7} parent=1 // pred_region
      _
    $region9: #{t_net_forward.7} parent=1 // pred_fallthru
      _
    // Predicated region
    $region10: #{t_net_forward.7} parent=1 // pred_check
      _
    $region11: #{t_net_forward.7} parent=1 // pred_check_branch
      %26 = sbr.rel (0) target = $region13
    $region12: #{t_net_forward.7} parent=1 // pred_region
      %s28 = ssub.s32 32768, 32768
      %29 = vsyncadd [#allocation3], %s28
      %s30 = sshll.u32 [#allocation5], 4
      %s31 = int_to_ptr.vmem [resolvable:$true] %s30
      %36 = dma.hbm_to_vmem [thread:$0]  %s2, 32768, %s31, [#allocation3], 256, 256, 16
    $region13: #{t_net_forward.7} parent=1 // pred_fallthru
      _
    // Predicated region
    $region14: #{t_net_forward.7} parent=1 // pred_check
      _
    $region15: #{t_net_forward.7} parent=1 // pred_check_branch
      %38 = sbr.rel (0) target = $region17
    $region16: #{t_net_forward.7} parent=1 // pred_region
      _
    $region17: #{t_net_forward.7} parent=1 // pred_fallthru
      _
    // Predicated region
    $region18: #{t_net_forward.7} parent=1 // pred_check
      _
    $region19: #{t_net_forward.7} parent=1 // pred_check_branch
      %40 = sbr.rel (0) target = $region21
    $region20: #{t_net_forward.7} parent=1 // pred_region
      _
    $region21: #{t_net_forward.7} parent=1 // pred_fallthru
      _
    // Predicated region
    $region22: #{t_net_forward.7} parent=1 // pred_check
      _
    $region23: #{t_net_forward.7} parent=1 // pred_check_branch
      %42 = sbr.rel (0) target = $region25
    $region24: #{t_net_forward.7} parent=1 // pred_region
      _
    $region25: #{t_net_forward.7} parent=1 // pred_fallthru
      _
    // Predicated region
    $region26: #{t_net_forward.7} parent=1 // pred_check
      _
    $region27: #{t_net_forward.7} parent=1 // pred_check_branch
      %44 = sbr.rel (0) target = $region29
    $region28: #{t_net_forward.7} parent=1 // pred_region
      %45 = dma.done [#allocation4], 16
    $region29: #{t_net_forward.7} parent=1 // pred_fallthru
      _
    // Predicated region
    $region30: #{t_net_forward.7} parent=1 // pred_check
      _
    $region31: #{t_net_forward.7} parent=1 // pred_check_branch
      %47 = sbr.rel (0) target = $region33
    $region32: #{t_net_forward.7} parent=1 // pred_region
      %48 = dma.done [#allocation3], 32768
    $region33: #{t_net_forward.7} parent=1 // pred_fallthru
      _
    %49 = sfence
    %v51 = vld [vmem:[%s1] sm:$0xff]
    %v52 = vld [vmem:[%s1 + $0x8] sm:$0xff]
    %s53 = sld [smem:[#allocation2]]
    %v54 = vstv %s53
    %v55 = vmul.f32 %v51, %v54
    %v56 = vmul.f32 %v52, %v54
    %s57 = sld [smem:[#allocation2 + $0x1]]
    %v58 = vstv %s57
    %v59 = vadd.f32 %v55, %v58
    %v60 = vadd.f32 %v56, %v58
    %v61 = vmax.f32 %v59, 0.0
    %v62 = vmax.f32 %v60, 0.0
    %v65 = vcombine.high %v61, %v61
    %v67 = vunpack.c.l.s4 1983009808
    %v68 = vunpack.c.0.s8 %v67
    %v69 = vlaneseq
    %v70 = vshrl.u32 %v69, 7
    %v71 = vsub.s32 %v68, %v70
    %v72 = vrot.slane %v61, %v71
    %v74 = vunpack.c.l.s4 1983009808
    %v75 = vunpack.c.0.s8 %v74
    %v76 = vlaneseq
    %v77 = vshrl.u32 %v76, 7
    %v78 = vsub.s32 %v75, %v77
    %v79 = vrot.slane %v65, %v78
    %v80 = vcombine.high %v72, %v72
    %v81 = vcombine.high %v79, %v79
    %v82 = vcombine.high %v62, %v62
    %v84 = vunpack.c.l.s4 1983009808
    %v85 = vunpack.c.0.s8 %v84
    %v86 = vlaneseq
    %v87 = vshrl.u32 %v86, 7
    %v88 = vsub.s32 %v85, %v87
    %v89 = vrot.slane %v62, %v88
    %v91 = vunpack.c.l.s4 1983009808
    %v92 = vunpack.c.0.s8 %v91
    %v93 = vlaneseq
    %v94 = vshrl.u32 %v93, 7
    %v95 = vsub.s32 %v92, %v94
    %v96 = vrot.slane %v82, %v95
    %v97 = vcombine.high %v89, %v89
    %v98 = vcombine.high %v96, %v96
    %v107 = vpack.c.bf16 %v72, %v72
    %v108 = vpack.c.bf16 %v80, %v80
    %v109 = vpack.c.bf16 %v79, %v79
    %v110 = vpack.c.bf16 %v81, %v81
    %v111 = vpack.c.bf16 %v89, %v89
    %v112 = vpack.c.bf16 %v97, %v97
    %v113 = vpack.c.bf16 %v96, %v96
    %v114 = vpack.c.bf16 %v98, %v98
    %v115 = vld [vmem:[#allocation5] sm:$0xff]
    %v116 = vld [vmem:[#allocation5 + $0x8] sm:$0xff]
    %v117 = vld [vmem:[#allocation5 + $0x10] sm:$0xff]
    %v118 = vld [vmem:[#allocation5 + $0x18] sm:$0xff]
    %v119 = vld [vmem:[#allocation5 + $0x20] sm:$0xff]
    %v120 = vld [vmem:[#allocation5 + $0x28] sm:$0xff]
    %v121 = vld [vmem:[#allocation5 + $0x30] sm:$0xff]
    %v122 = vld [vmem:[#allocation5 + $0x38] sm:$0xff]
    %v123 = vld [vmem:[#allocation5 + $0x40] sm:$0xff]
    %v124 = vld [vmem:[#allocation5 + $0x48] sm:$0xff]
    %v125 = vld [vmem:[#allocation5 + $0x50] sm:$0xff]
    %v126 = vld [vmem:[#allocation5 + $0x58] sm:$0xff]
    %v127 = vld [vmem:[#allocation5 + $0x60] sm:$0xff]
    %v128 = vld [vmem:[#allocation5 + $0x68] sm:$0xff]
    %v129 = vld [vmem:[#allocation5 + $0x70] sm:$0xff]
    %v130 = vld [vmem:[#allocation5 + $0x78] sm:$0xff]
    %v131 = vld [vmem:[#allocation5 + $0x80] sm:$0xff]
    %v132 = vld [vmem:[#allocation5 + $0x88] sm:$0xff]
    %v133 = vld [vmem:[#allocation5 + $0x90] sm:$0xff]
    %v134 = vld [vmem:[#allocation5 + $0x98] sm:$0xff]
    %v135 = vld [vmem:[#allocation5 + $0xa0] sm:$0xff]
    %v136 = vld [vmem:[#allocation5 + $0xa8] sm:$0xff]
    %v137 = vld [vmem:[#allocation5 + $0xb0] sm:$0xff]
    %v138 = vld [vmem:[#allocation5 + $0xb8] sm:$0xff]
    %v139 = vld [vmem:[#allocation5 + $0xc0] sm:$0xff]
    %v140 = vld [vmem:[#allocation5 + $0xc8] sm:$0xff]
    %v141 = vld [vmem:[#allocation5 + $0xd0] sm:$0xff]
    %v142 = vld [vmem:[#allocation5 + $0xd8] sm:$0xff]
    %v143 = vld [vmem:[#allocation5 + $0xe0] sm:$0xff]
    %v144 = vld [vmem:[#allocation5 + $0xe8] sm:$0xff]
    %v145 = vld [vmem:[#allocation5 + $0xf0] sm:$0xff]
    %v146 = vld [vmem:[#allocation5 + $0xf8] sm:$0xff]
    %v147 = vld [vmem:[#allocation5 + $0x100] sm:$0xff]
    %v148 = vld [vmem:[#allocation5 + $0x108] sm:$0xff]
    %v149 = vld [vmem:[#allocation5 + $0x110] sm:$0xff]
    %v150 = vld [vmem:[#allocation5 + $0x118] sm:$0xff]
    %v151 = vld [vmem:[#allocation5 + $0x120] sm:$0xff]
    %v152 = vld [vmem:[#allocation5 + $0x128] sm:$0xff]
    %v153 = vld [vmem:[#allocation5 + $0x130] sm:$0xff]
    %v154 = vld [vmem:[#allocation5 + $0x138] sm:$0xff]
    %v155 = vld [vmem:[#allocation5 + $0x140] sm:$0xff]
    %v156 = vld [vmem:[#allocation5 + $0x148] sm:$0xff]
    %v157 = vld [vmem:[#allocation5 + $0x150] sm:$0xff]
    %v158 = vld [vmem:[#allocation5 + $0x158] sm:$0xff]
    %v159 = vld [vmem:[#allocation5 + $0x160] sm:$0xff]
    %v160 = vld [vmem:[#allocation5 + $0x168] sm:$0xff]
    %v161 = vld [vmem:[#allocation5 + $0x170] sm:$0xff]
    %v162 = vld [vmem:[#allocation5 + $0x178] sm:$0xff]
    %v163 = vld [vmem:[#allocation5 + $0x180] sm:$0xff]
    %v164 = vld [vmem:[#allocation5 + $0x188] sm:$0xff]
    %v165 = vld [vmem:[#allocation5 + $0x190] sm:$0xff]
    %v166 = vld [vmem:[#allocation5 + $0x198] sm:$0xff]
    %v167 = vld [vmem:[#allocation5 + $0x1a0] sm:$0xff]
    %v168 = vld [vmem:[#allocation5 + $0x1a8] sm:$0xff]
    %v169 = vld [vmem:[#allocation5 + $0x1b0] sm:$0xff]
    %v170 = vld [vmem:[#allocation5 + $0x1b8] sm:$0xff]
    %v171 = vld [vmem:[#allocation5 + $0x1c0] sm:$0xff]
    %v172 = vld [vmem:[#allocation5 + $0x1c8] sm:$0xff]
    %v173 = vld [vmem:[#allocation5 + $0x1d0] sm:$0xff]
    %v174 = vld [vmem:[#allocation5 + $0x1d8] sm:$0xff]
    %v175 = vld [vmem:[#allocation5 + $0x1e0] sm:$0xff]
    %v176 = vld [vmem:[#allocation5 + $0x1e8] sm:$0xff]
    %v177 = vld [vmem:[#allocation5 + $0x1f0] sm:$0xff]
    %v178 = vld [vmem:[#allocation5 + $0x1f8] sm:$0xff]
    %v179 = vld [vmem:[#allocation5 + $0x200] sm:$0xff]
    %v180 = vld [vmem:[#allocation5 + $0x208] sm:$0xff]
    %v181 = vld [vmem:[#allocation5 + $0x210] sm:$0xff]
    %v182 = vld [vmem:[#allocation5 + $0x218] sm:$0xff]
    %v183 = vld [vmem:[#allocation5 + $0x220] sm:$0xff]
    %v184 = vld [vmem:[#allocation5 + $0x228] sm:$0xff]
    %v185 = vld [vmem:[#allocation5 + $0x230] sm:$0xff]
    %v186 = vld [vmem:[#allocation5 + $0x238] sm:$0xff]
    %v187 = vld [vmem:[#allocation5 + $0x240] sm:$0xff]
    %v188 = vld [vmem:[#allocation5 + $0x248] sm:$0xff]
    %v189 = vld [vmem:[#allocation5 + $0x250] sm:$0xff]
    %v190 = vld [vmem:[#allocation5 + $0x258] sm:$0xff]
    %v191 = vld [vmem:[#allocation5 + $0x260] sm:$0xff]
    %v192 = vld [vmem:[#allocation5 + $0x268] sm:$0xff]
    %v193 = vld [vmem:[#allocation5 + $0x270] sm:$0xff]
    %v194 = vld [vmem:[#allocation5 + $0x278] sm:$0xff]
    %v195 = vld [vmem:[#allocation5 + $0x280] sm:$0xff]
    %v196 = vld [vmem:[#allocation5 + $0x288] sm:$0xff]
    %v197 = vld [vmem:[#allocation5 + $0x290] sm:$0xff]
    %v198 = vld [vmem:[#allocation5 + $0x298] sm:$0xff]
    %v199 = vld [vmem:[#allocation5 + $0x2a0] sm:$0xff]
    %v200 = vld [vmem:[#allocation5 + $0x2a8] sm:$0xff]
    %v201 = vld [vmem:[#allocation5 + $0x2b0] sm:$0xff]
    %v202 = vld [vmem:[#allocation5 + $0x2b8] sm:$0xff]
    %v203 = vld [vmem:[#allocation5 + $0x2c0] sm:$0xff]
    %v204 = vld [vmem:[#allocation5 + $0x2c8] sm:$0xff]
    %v205 = vld [vmem:[#allocation5 + $0x2d0] sm:$0xff]
    %v206 = vld [vmem:[#allocation5 + $0x2d8] sm:$0xff]
    %v207 = vld [vmem:[#allocation5 + $0x2e0] sm:$0xff]
    %v208 = vld [vmem:[#allocation5 + $0x2e8] sm:$0xff]
    %v209 = vld [vmem:[#allocation5 + $0x2f0] sm:$0xff]
    %v210 = vld [vmem:[#allocation5 + $0x2f8] sm:$0xff]
    %v211 = vld [vmem:[#allocation5 + $0x300] sm:$0xff]
    %v212 = vld [vmem:[#allocation5 + $0x308] sm:$0xff]
    %v213 = vld [vmem:[#allocation5 + $0x310] sm:$0xff]
    %v214 = vld [vmem:[#allocation5 + $0x318] sm:$0xff]
    %v215 = vld [vmem:[#allocation5 + $0x320] sm:$0xff]
    %v216 = vld [vmem:[#allocation5 + $0x328] sm:$0xff]
    %v217 = vld [vmem:[#allocation5 + $0x330] sm:$0xff]
    %v218 = vld [vmem:[#allocation5 + $0x338] sm:$0xff]
    %v219 = vld [vmem:[#allocation5 + $0x340] sm:$0xff]
    %v220 = vld [vmem:[#allocation5 + $0x348] sm:$0xff]
    %v221 = vld [vmem:[#allocation5 + $0x350] sm:$0xff]
    %v222 = vld [vmem:[#allocation5 + $0x358] sm:$0xff]
    %v223 = vld [vmem:[#allocation5 + $0x360] sm:$0xff]
    %v224 = vld [vmem:[#allocation5 + $0x368] sm:$0xff]
    %v225 = vld [vmem:[#allocation5 + $0x370] sm:$0xff]
    %v226 = vld [vmem:[#allocation5 + $0x378] sm:$0xff]
    %v227 = vld [vmem:[#allocation5 + $0x380] sm:$0xff]
    %v228 = vld [vmem:[#allocation5 + $0x388] sm:$0xff]
    %v229 = vld [vmem:[#allocation5 + $0x390] sm:$0xff]
    %v230 = vld [vmem:[#allocation5 + $0x398] sm:$0xff]
    %v231 = vld [vmem:[#allocation5 + $0x3a0] sm:$0xff]
    %v232 = vld [vmem:[#allocation5 + $0x3a8] sm:$0xff]
    %v233 = vld [vmem:[#allocation5 + $0x3b0] sm:$0xff]
    %v234 = vld [vmem:[#allocation5 + $0x3b8] sm:$0xff]
    %v235 = vld [vmem:[#allocation5 + $0x3c0] sm:$0xff]
    %v236 = vld [vmem:[#allocation5 + $0x3c8] sm:$0xff]
    %v237 = vld [vmem:[#allocation5 + $0x3d0] sm:$0xff]
    %v238 = vld [vmem:[#allocation5 + $0x3d8] sm:$0xff]
    %v239 = vld [vmem:[#allocation5 + $0x3e0] sm:$0xff]
    %v240 = vld [vmem:[#allocation5 + $0x3e8] sm:$0xff]
    %v241 = vld [vmem:[#allocation5 + $0x3f0] sm:$0xff]
    %v242 = vld [vmem:[#allocation5 + $0x3f8] sm:$0xff]
    %v243 = vld [vmem:[#allocation5 + $0x400] sm:$0xff]
    %v244 = vld [vmem:[#allocation5 + $0x408] sm:$0xff]
    %v245 = vld [vmem:[#allocation5 + $0x410] sm:$0xff]
    %v246 = vld [vmem:[#allocation5 + $0x418] sm:$0xff]
    %v247 = vld [vmem:[#allocation5 + $0x420] sm:$0xff]
    %v248 = vld [vmem:[#allocation5 + $0x428] sm:$0xff]
    %v249 = vld [vmem:[#allocation5 + $0x430] sm:$0xff]
    %v250 = vld [vmem:[#allocation5 + $0x438] sm:$0xff]
    %v251 = vld [vmem:[#allocation5 + $0x440] sm:$0xff]
    %v252 = vld [vmem:[#allocation5 + $0x448] sm:$0xff]
    %v253 = vld [vmem:[#allocation5 + $0x450] sm:$0xff]
    %v254 = vld [vmem:[#allocation5 + $0x458] sm:$0xff]
    %v255 = vld [vmem:[#allocation5 + $0x460] sm:$0xff]
    %v256 = vld [vmem:[#allocation5 + $0x468] sm:$0xff]
    %v257 = vld [vmem:[#allocation5 + $0x470] sm:$0xff]
    %v258 = vld [vmem:[#allocation5 + $0x478] sm:$0xff]
    %v259 = vld [vmem:[#allocation5 + $0x480] sm:$0xff]
    %v260 = vld [vmem:[#allocation5 + $0x488] sm:$0xff]
    %v261 = vld [vmem:[#allocation5 + $0x490] sm:$0xff]
    %v262 = vld [vmem:[#allocation5 + $0x498] sm:$0xff]
    %v263 = vld [vmem:[#allocation5 + $0x4a0] sm:$0xff]
    %v264 = vld [vmem:[#allocation5 + $0x4a8] sm:$0xff]
    %v265 = vld [vmem:[#allocation5 + $0x4b0] sm:$0xff]
    %v266 = vld [vmem:[#allocation5 + $0x4b8] sm:$0xff]
    %v267 = vld [vmem:[#allocation5 + $0x4c0] sm:$0xff]
    %v268 = vld [vmem:[#allocation5 + $0x4c8] sm:$0xff]
    %v269 = vld [vmem:[#allocation5 + $0x4d0] sm:$0xff]
    %v270 = vld [vmem:[#allocation5 + $0x4d8] sm:$0xff]
    %v271 = vld [vmem:[#allocation5 + $0x4e0] sm:$0xff]
    %v272 = vld [vmem:[#allocation5 + $0x4e8] sm:$0xff]
    %v273 = vld [vmem:[#allocation5 + $0x4f0] sm:$0xff]
    %v274 = vld [vmem:[#allocation5 + $0x4f8] sm:$0xff]
    %v275 = vld [vmem:[#allocation5 + $0x500] sm:$0xff]
    %v276 = vld [vmem:[#allocation5 + $0x508] sm:$0xff]
    %v277 = vld [vmem:[#allocation5 + $0x510] sm:$0xff]
    %v278 = vld [vmem:[#allocation5 + $0x518] sm:$0xff]
    %v279 = vld [vmem:[#allocation5 + $0x520] sm:$0xff]
    %v280 = vld [vmem:[#allocation5 + $0x528] sm:$0xff]
    %v281 = vld [vmem:[#allocation5 + $0x530] sm:$0xff]
    %v282 = vld [vmem:[#allocation5 + $0x538] sm:$0xff]
    %v283 = vld [vmem:[#allocation5 + $0x540] sm:$0xff]
    %v284 = vld [vmem:[#allocation5 + $0x548] sm:$0xff]
    %v285 = vld [vmem:[#allocation5 + $0x550] sm:$0xff]
    %v286 = vld [vmem:[#allocation5 + $0x558] sm:$0xff]
    %v287 = vld [vmem:[#allocation5 + $0x560] sm:$0xff]
    %v288 = vld [vmem:[#allocation5 + $0x568] sm:$0xff]
    %v289 = vld [vmem:[#allocation5 + $0x570] sm:$0xff]
    %v290 = vld [vmem:[#allocation5 + $0x578] sm:$0xff]
    %v291 = vld [vmem:[#allocation5 + $0x580] sm:$0xff]
    %v292 = vld [vmem:[#allocation5 + $0x588] sm:$0xff]
    %v293 = vld [vmem:[#allocation5 + $0x590] sm:$0xff]
    %v294 = vld [vmem:[#allocation5 + $0x598] sm:$0xff]
    %v295 = vld [vmem:[#allocation5 + $0x5a0] sm:$0xff]
    %v296 = vld [vmem:[#allocation5 + $0x5a8] sm:$0xff]
    %v297 = vld [vmem:[#allocation5 + $0x5b0] sm:$0xff]
    %v298 = vld [vmem:[#allocation5 + $0x5b8] sm:$0xff]
    %v299 = vld [vmem:[#allocation5 + $0x5c0] sm:$0xff]
    %v300 = vld [vmem:[#allocation5 + $0x5c8] sm:$0xff]
    %v301 = vld [vmem:[#allocation5 + $0x5d0] sm:$0xff]
    %v302 = vld [vmem:[#allocation5 + $0x5d8] sm:$0xff]
    %v303 = vld [vmem:[#allocation5 + $0x5e0] sm:$0xff]
    %v304 = vld [vmem:[#allocation5 + $0x5e8] sm:$0xff]
    %v305 = vld [vmem:[#allocation5 + $0x5f0] sm:$0xff]
    %v306 = vld [vmem:[#allocation5 + $0x5f8] sm:$0xff]
    %v307 = vld [vmem:[#allocation5 + $0x600] sm:$0xff]
    %v308 = vld [vmem:[#allocation5 + $0x608] sm:$0xff]
    %v309 = vld [vmem:[#allocation5 + $0x610] sm:$0xff]
    %v310 = vld [vmem:[#allocation5 + $0x618] sm:$0xff]
    %v311 = vld [vmem:[#allocation5 + $0x620] sm:$0xff]
    %v312 = vld [vmem:[#allocation5 + $0x628] sm:$0xff]
    %v313 = vld [vmem:[#allocation5 + $0x630] sm:$0xff]
    %v314 = vld [vmem:[#allocation5 + $0x638] sm:$0xff]
    %v315 = vld [vmem:[#allocation5 + $0x640] sm:$0xff]
    %v316 = vld [vmem:[#allocation5 + $0x648] sm:$0xff]
    %v317 = vld [vmem:[#allocation5 + $0x650] sm:$0xff]
    %v318 = vld [vmem:[#allocation5 + $0x658] sm:$0xff]
    %v319 = vld [vmem:[#allocation5 + $0x660] sm:$0xff]
    %v320 = vld [vmem:[#allocation5 + $0x668] sm:$0xff]
    %v321 = vld [vmem:[#allocation5 + $0x670] sm:$0xff]
    %v322 = vld [vmem:[#allocation5 + $0x678] sm:$0xff]
    %v323 = vld [vmem:[#allocation5 + $0x680] sm:$0xff]
    %v324 = vld [vmem:[#allocation5 + $0x688] sm:$0xff]
    %v325 = vld [vmem:[#allocation5 + $0x690] sm:$0xff]
    %v326 = vld [vmem:[#allocation5 + $0x698] sm:$0xff]
    %v327 = vld [vmem:[#allocation5 + $0x6a0] sm:$0xff]
    %v328 = vld [vmem:[#allocation5 + $0x6a8] sm:$0xff]
    %v329 = vld [vmem:[#allocation5 + $0x6b0] sm:$0xff]
    %v330 = vld [vmem:[#allocation5 + $0x6b8] sm:$0xff]
    %v331 = vld [vmem:[#allocation5 + $0x6c0] sm:$0xff]
    %v332 = vld [vmem:[#allocation5 + $0x6c8] sm:$0xff]
    %v333 = vld [vmem:[#allocation5 + $0x6d0] sm:$0xff]
    %v334 = vld [vmem:[#allocation5 + $0x6d8] sm:$0xff]
    %v335 = vld [vmem:[#allocation5 + $0x6e0] sm:$0xff]
    %v336 = vld [vmem:[#allocation5 + $0x6e8] sm:$0xff]
    %v337 = vld [vmem:[#allocation5 + $0x6f0] sm:$0xff]
    %v338 = vld [vmem:[#allocation5 + $0x6f8] sm:$0xff]
    %v339 = vld [vmem:[#allocation5 + $0x700] sm:$0xff]
    %v340 = vld [vmem:[#allocation5 + $0x708] sm:$0xff]
    %v341 = vld [vmem:[#allocation5 + $0x710] sm:$0xff]
    %v342 = vld [vmem:[#allocation5 + $0x718] sm:$0xff]
    %v343 = vld [vmem:[#allocation5 + $0x720] sm:$0xff]
    %v344 = vld [vmem:[#allocation5 + $0x728] sm:$0xff]
    %v345 = vld [vmem:[#allocation5 + $0x730] sm:$0xff]
    %v346 = vld [vmem:[#allocation5 + $0x738] sm:$0xff]
    %v347 = vld [vmem:[#allocation5 + $0x740] sm:$0xff]
    %v348 = vld [vmem:[#allocation5 + $0x748] sm:$0xff]
    %v349 = vld [vmem:[#allocation5 + $0x750] sm:$0xff]
    %v350 = vld [vmem:[#allocation5 + $0x758] sm:$0xff]
    %v351 = vld [vmem:[#allocation5 + $0x760] sm:$0xff]
    %v352 = vld [vmem:[#allocation5 + $0x768] sm:$0xff]
    %v353 = vld [vmem:[#allocation5 + $0x770] sm:$0xff]
    %v354 = vld [vmem:[#allocation5 + $0x778] sm:$0xff]
    %v355 = vld [vmem:[#allocation5 + $0x780] sm:$0xff]
    %v356 = vld [vmem:[#allocation5 + $0x788] sm:$0xff]
    %v357 = vld [vmem:[#allocation5 + $0x790] sm:$0xff]
    %v358 = vld [vmem:[#allocation5 + $0x798] sm:$0xff]
    %v359 = vld [vmem:[#allocation5 + $0x7a0] sm:$0xff]
    %v360 = vld [vmem:[#allocation5 + $0x7a8] sm:$0xff]
    %v361 = vld [vmem:[#allocation5 + $0x7b0] sm:$0xff]
    %v362 = vld [vmem:[#allocation5 + $0x7b8] sm:$0xff]
    %v363 = vld [vmem:[#allocation5 + $0x7c0] sm:$0xff]
    %v364 = vld [vmem:[#allocation5 + $0x7c8] sm:$0xff]
    %v365 = vld [vmem:[#allocation5 + $0x7d0] sm:$0xff]
    %v366 = vld [vmem:[#allocation5 + $0x7d8] sm:$0xff]
    %v367 = vld [vmem:[#allocation5 + $0x7e0] sm:$0xff]
    %v368 = vld [vmem:[#allocation5 + $0x7e8] sm:$0xff]
    %v369 = vld [vmem:[#allocation5 + $0x7f0] sm:$0xff]
    %v370 = vld [vmem:[#allocation5 + $0x7f8] sm:$0xff]
    %v627 = vunpack.c.l.b16 %v115
    %v628 = vunpack.c.h.b16 %v115
    %v629 = vunpack.c.l.b16 %v116
    %v630 = vunpack.c.h.b16 %v116
    %v631 = vunpack.c.l.b16 %v117
    %v632 = vunpack.c.h.b16 %v117
    %v633 = vunpack.c.l.b16 %v118
    %v634 = vunpack.c.h.b16 %v118
    %v635 = vunpack.c.l.b16 %v119
    %v636 = vunpack.c.h.b16 %v119
    %v637 = vunpack.c.l.b16 %v120
    %v638 = vunpack.c.h.b16 %v120
    %v639 = vunpack.c.l.b16 %v121
    %v640 = vunpack.c.h.b16 %v121
    %v641 = vunpack.c.l.b16 %v122
    %v642 = vunpack.c.h.b16 %v122
    %v643 = vunpack.c.l.b16 %v123
    %v644 = vunpack.c.h.b16 %v123
    %v645 = vunpack.c.l.b16 %v124
    %v646 = vunpack.c.h.b16 %v124
    %v647 = vunpack.c.l.b16 %v125
    %v648 = vunpack.c.h.b16 %v125
    %v649 = vunpack.c.l.b16 %v126
    %v650 = vunpack.c.h.b16 %v126
    %v651 = vunpack.c.l.b16 %v127
    %v652 = vunpack.c.h.b16 %v127
    %v653 = vunpack.c.l.b16 %v128
    %v654 = vunpack.c.h.b16 %v128
    %v655 = vunpack.c.l.b16 %v129
    %v656 = vunpack.c.h.b16 %v129
    %v657 = vunpack.c.l.b16 %v130
    %v658 = vunpack.c.h.b16 %v130
    %v659 = vunpack.c.l.b16 %v131
    %v660 = vunpack.c.h.b16 %v131
    %v661 = vunpack.c.l.b16 %v132
    %v662 = vunpack.c.h.b16 %v132
    %v663 = vunpack.c.l.b16 %v133
    %v664 = vunpack.c.h.b16 %v133
    %v665 = vunpack.c.l.b16 %v134
    %v666 = vunpack.c.h.b16 %v134
    %v667 = vunpack.c.l.b16 %v135
    %v668 = vunpack.c.h.b16 %v135
    %v669 = vunpack.c.l.b16 %v136
    %v670 = vunpack.c.h.b16 %v136
    %v671 = vunpack.c.l.b16 %v137
    %v672 = vunpack.c.h.b16 %v137
    %v673 = vunpack.c.l.b16 %v138
    %v674 = vunpack.c.h.b16 %v138
    %v675 = vunpack.c.l.b16 %v139
    %v676 = vunpack.c.h.b16 %v139
    %v677 = vunpack.c.l.b16 %v140
    %v678 = vunpack.c.h.b16 %v140
    %v679 = vunpack.c.l.b16 %v141
    %v680 = vunpack.c.h.b16 %v141
    %v681 = vunpack.c.l.b16 %v142
    %v682 = vunpack.c.h.b16 %v142
    %v683 = vunpack.c.l.b16 %v143
    %v684 = vunpack.c.h.b16 %v143
    %v685 = vunpack.c.l.b16 %v144
    %v686 = vunpack.c.h.b16 %v144
    %v687 = vunpack.c.l.b16 %v145
    %v688 = vunpack.c.h.b16 %v145
    %v689 = vunpack.c.l.b16 %v146
    %v690 = vunpack.c.h.b16 %v146
    %v691 = vunpack.c.l.b16 %v147
    %v692 = vunpack.c.h.b16 %v147
    %v693 = vunpack.c.l.b16 %v148
    %v694 = vunpack.c.h.b16 %v148
    %v695 = vunpack.c.l.b16 %v149
    %v696 = vunpack.c.h.b16 %v149
    %v697 = vunpack.c.l.b16 %v150
    %v698 = vunpack.c.h.b16 %v150
    %v699 = vunpack.c.l.b16 %v151
    %v700 = vunpack.c.h.b16 %v151
    %v701 = vunpack.c.l.b16 %v152
    %v702 = vunpack.c.h.b16 %v152
    %v703 = vunpack.c.l.b16 %v153
    %v704 = vunpack.c.h.b16 %v153
    %v705 = vunpack.c.l.b16 %v154
    %v706 = vunpack.c.h.b16 %v154
    %v707 = vunpack.c.l.b16 %v155
    %v708 = vunpack.c.h.b16 %v155
    %v709 = vunpack.c.l.b16 %v156
    %v710 = vunpack.c.h.b16 %v156
    %v711 = vunpack.c.l.b16 %v157
    %v712 = vunpack.c.h.b16 %v157
    %v713 = vunpack.c.l.b16 %v158
    %v714 = vunpack.c.h.b16 %v158
    %v715 = vunpack.c.l.b16 %v159
    %v716 = vunpack.c.h.b16 %v159
    %v717 = vunpack.c.l.b16 %v160
    %v718 = vunpack.c.h.b16 %v160
    %v719 = vunpack.c.l.b16 %v161
    %v720 = vunpack.c.h.b16 %v161
    %v721 = vunpack.c.l.b16 %v162
    %v722 = vunpack.c.h.b16 %v162
    %v723 = vunpack.c.l.b16 %v163
    %v724 = vunpack.c.h.b16 %v163
    %v725 = vunpack.c.l.b16 %v164
    %v726 = vunpack.c.h.b16 %v164
    %v727 = vunpack.c.l.b16 %v165
    %v728 = vunpack.c.h.b16 %v165
    %v729 = vunpack.c.l.b16 %v166
    %v730 = vunpack.c.h.b16 %v166
    %v731 = vunpack.c.l.b16 %v167
    %v732 = vunpack.c.h.b16 %v167
    %v733 = vunpack.c.l.b16 %v168
    %v734 = vunpack.c.h.b16 %v168
    %v735 = vunpack.c.l.b16 %v169
    %v736 = vunpack.c.h.b16 %v169
    %v737 = vunpack.c.l.b16 %v170
    %v738 = vunpack.c.h.b16 %v170
    %v739 = vunpack.c.l.b16 %v171
    %v740 = vunpack.c.h.b16 %v171
    %v741 = vunpack.c.l.b16 %v172
    %v742 = vunpack.c.h.b16 %v172
    %v743 = vunpack.c.l.b16 %v173
    %v744 = vunpack.c.h.b16 %v173
    %v745 = vunpack.c.l.b16 %v174
    %v746 = vunpack.c.h.b16 %v174
    %v747 = vunpack.c.l.b16 %v175
    %v748 = vunpack.c.h.b16 %v175
    %v749 = vunpack.c.l.b16 %v176
    %v750 = vunpack.c.h.b16 %v176
    %v751 = vunpack.c.l.b16 %v177
    %v752 = vunpack.c.h.b16 %v177
    %v753 = vunpack.c.l.b16 %v178
    %v754 = vunpack.c.h.b16 %v178
    %v755 = vunpack.c.l.b16 %v179
    %v756 = vunpack.c.h.b16 %v179
    %v757 = vunpack.c.l.b16 %v180
    %v758 = vunpack.c.h.b16 %v180
    %v759 = vunpack.c.l.b16 %v181
    %v760 = vunpack.c.h.b16 %v181
    %v761 = vunpack.c.l.b16 %v182
    %v762 = vunpack.c.h.b16 %v182
    %v763 = vunpack.c.l.b16 %v183
    %v764 = vunpack.c.h.b16 %v183
    %v765 = vunpack.c.l.b16 %v184
    %v766 = vunpack.c.h.b16 %v184
    %v767 = vunpack.c.l.b16 %v185
    %v768 = vunpack.c.h.b16 %v185
    %v769 = vunpack.c.l.b16 %v186
    %v770 = vunpack.c.h.b16 %v186
    %v771 = vunpack.c.l.b16 %v187
    %v772 = vunpack.c.h.b16 %v187
    %v773 = vunpack.c.l.b16 %v188
    %v774 = vunpack.c.h.b16 %v188
    %v775 = vunpack.c.l.b16 %v189
    %v776 = vunpack.c.h.b16 %v189
    %v777 = vunpack.c.l.b16 %v190
    %v778 = vunpack.c.h.b16 %v190
    %v779 = vunpack.c.l.b16 %v191
    %v780 = vunpack.c.h.b16 %v191
    %v781 = vunpack.c.l.b16 %v192
    %v782 = vunpack.c.h.b16 %v192
    %v783 = vunpack.c.l.b16 %v193
    %v784 = vunpack.c.h.b16 %v193
    %v785 = vunpack.c.l.b16 %v194
    %v786 = vunpack.c.h.b16 %v194
    %v787 = vunpack.c.l.b16 %v195
    %v788 = vunpack.c.h.b16 %v195
    %v789 = vunpack.c.l.b16 %v196
    %v790 = vunpack.c.h.b16 %v196
    %v791 = vunpack.c.l.b16 %v197
    %v792 = vunpack.c.h.b16 %v197
    %v793 = vunpack.c.l.b16 %v198
    %v794 = vunpack.c.h.b16 %v198
    %v795 = vunpack.c.l.b16 %v199
    %v796 = vunpack.c.h.b16 %v199
    %v797 = vunpack.c.l.b16 %v200
    %v798 = vunpack.c.h.b16 %v200
    %v799 = vunpack.c.l.b16 %v201
    %v800 = vunpack.c.h.b16 %v201
    %v801 = vunpack.c.l.b16 %v202
    %v802 = vunpack.c.h.b16 %v202
    %v803 = vunpack.c.l.b16 %v203
    %v804 = vunpack.c.h.b16 %v203
    %v805 = vunpack.c.l.b16 %v204
    %v806 = vunpack.c.h.b16 %v204
    %v807 = vunpack.c.l.b16 %v205
    %v808 = vunpack.c.h.b16 %v205
    %v809 = vunpack.c.l.b16 %v206
    %v810 = vunpack.c.h.b16 %v206
    %v811 = vunpack.c.l.b16 %v207
    %v812 = vunpack.c.h.b16 %v207
    %v813 = vunpack.c.l.b16 %v208
    %v814 = vunpack.c.h.b16 %v208
    %v815 = vunpack.c.l.b16 %v209
    %v816 = vunpack.c.h.b16 %v209
    %v817 = vunpack.c.l.b16 %v210
    %v818 = vunpack.c.h.b16 %v210
    %v819 = vunpack.c.l.b16 %v211
    %v820 = vunpack.c.h.b16 %v211
    %v821 = vunpack.c.l.b16 %v212
    %v822 = vunpack.c.h.b16 %v212
    %v823 = vunpack.c.l.b16 %v213
    %v824 = vunpack.c.h.b16 %v213
    %v825 = vunpack.c.l.b16 %v214
    %v826 = vunpack.c.h.b16 %v214
    %v827 = vunpack.c.l.b16 %v215
    %v828 = vunpack.c.h.b16 %v215
    %v829 = vunpack.c.l.b16 %v216
    %v830 = vunpack.c.h.b16 %v216
    %v831 = vunpack.c.l.b16 %v217
    %v832 = vunpack.c.h.b16 %v217
    %v833 = vunpack.c.l.b16 %v218
    %v834 = vunpack.c.h.b16 %v218
    %v835 = vunpack.c.l.b16 %v219
    %v836 = vunpack.c.h.b16 %v219
    %v837 = vunpack.c.l.b16 %v220
    %v838 = vunpack.c.h.b16 %v220
    %v839 = vunpack.c.l.b16 %v221
    %v840 = vunpack.c.h.b16 %v221
    %v841 = vunpack.c.l.b16 %v222
    %v842 = vunpack.c.h.b16 %v222
    %v843 = vunpack.c.l.b16 %v223
    %v844 = vunpack.c.h.b16 %v223
    %v845 = vunpack.c.l.b16 %v224
    %v846 = vunpack.c.h.b16 %v224
    %v847 = vunpack.c.l.b16 %v225
    %v848 = vunpack.c.h.b16 %v225
    %v849 = vunpack.c.l.b16 %v226
    %v850 = vunpack.c.h.b16 %v226
    %v851 = vunpack.c.l.b16 %v227
    %v852 = vunpack.c.h.b16 %v227
    %v853 = vunpack.c.l.b16 %v228
    %v854 = vunpack.c.h.b16 %v228
    %v855 = vunpack.c.l.b16 %v229
    %v856 = vunpack.c.h.b16 %v229
    %v857 = vunpack.c.l.b16 %v230
    %v858 = vunpack.c.h.b16 %v230
    %v859 = vunpack.c.l.b16 %v231
    %v860 = vunpack.c.h.b16 %v231
    %v861 = vunpack.c.l.b16 %v232
    %v862 = vunpack.c.h.b16 %v232
    %v863 = vunpack.c.l.b16 %v233
    %v864 = vunpack.c.h.b16 %v233
    %v865 = vunpack.c.l.b16 %v234
    %v866 = vunpack.c.h.b16 %v234
    %v867 = vunpack.c.l.b16 %v235
    %v868 = vunpack.c.h.b16 %v235
    %v869 = vunpack.c.l.b16 %v236
    %v870 = vunpack.c.h.b16 %v236
    %v871 = vunpack.c.l.b16 %v237
    %v872 = vunpack.c.h.b16 %v237
    %v873 = vunpack.c.l.b16 %v238
    %v874 = vunpack.c.h.b16 %v238
    %v875 = vunpack.c.l.b16 %v239
    %v876 = vunpack.c.h.b16 %v239
    %v877 = vunpack.c.l.b16 %v240
    %v878 = vunpack.c.h.b16 %v240
    %v879 = vunpack.c.l.b16 %v241
    %v880 = vunpack.c.h.b16 %v241
    %v881 = vunpack.c.l.b16 %v242
    %v882 = vunpack.c.h.b16 %v242
    %v883 = vunpack.c.l.b16 %v243
    %v884 = vunpack.c.h.b16 %v243
    %v885 = vunpack.c.l.b16 %v244
    %v886 = vunpack.c.h.b16 %v244
    %v887 = vunpack.c.l.b16 %v245
    %v888 = vunpack.c.h.b16 %v245
    %v889 = vunpack.c.l.b16 %v246
    %v890 = vunpack.c.h.b16 %v246
    %v891 = vunpack.c.l.b16 %v247
    %v892 = vunpack.c.h.b16 %v247
    %v893 = vunpack.c.l.b16 %v248
    %v894 = vunpack.c.h.b16 %v248
    %v895 = vunpack.c.l.b16 %v249
    %v896 = vunpack.c.h.b16 %v249
    %v897 = vunpack.c.l.b16 %v250
    %v898 = vunpack.c.h.b16 %v250
    %v899 = vunpack.c.l.b16 %v251
    %v900 = vunpack.c.h.b16 %v251
    %v901 = vunpack.c.l.b16 %v252
    %v902 = vunpack.c.h.b16 %v252
    %v903 = vunpack.c.l.b16 %v253
    %v904 = vunpack.c.h.b16 %v253
    %v905 = vunpack.c.l.b16 %v254
    %v906 = vunpack.c.h.b16 %v254
    %v907 = vunpack.c.l.b16 %v255
    %v908 = vunpack.c.h.b16 %v255
    %v909 = vunpack.c.l.b16 %v256
    %v910 = vunpack.c.h.b16 %v256
    %v911 = vunpack.c.l.b16 %v257
    %v912 = vunpack.c.h.b16 %v257
    %v913 = vunpack.c.l.b16 %v258
    %v914 = vunpack.c.h.b16 %v258
    %v915 = vunpack.c.l.b16 %v259
    %v916 = vunpack.c.h.b16 %v259
    %v917 = vunpack.c.l.b16 %v260
    %v918 = vunpack.c.h.b16 %v260
    %v919 = vunpack.c.l.b16 %v261
    %v920 = vunpack.c.h.b16 %v261
    %v921 = vunpack.c.l.b16 %v262
    %v922 = vunpack.c.h.b16 %v262
    %v923 = vunpack.c.l.b16 %v263
    %v924 = vunpack.c.h.b16 %v263
    %v925 = vunpack.c.l.b16 %v264
    %v926 = vunpack.c.h.b16 %v264
    %v927 = vunpack.c.l.b16 %v265
    %v928 = vunpack.c.h.b16 %v265
    %v929 = vunpack.c.l.b16 %v266
    %v930 = vunpack.c.h.b16 %v266
    %v931 = vunpack.c.l.b16 %v267
    %v932 = vunpack.c.h.b16 %v267
    %v933 = vunpack.c.l.b16 %v268
    %v934 = vunpack.c.h.b16 %v268
    %v935 = vunpack.c.l.b16 %v269
    %v936 = vunpack.c.h.b16 %v269
    %v937 = vunpack.c.l.b16 %v270
    %v938 = vunpack.c.h.b16 %v270
    %v939 = vunpack.c.l.b16 %v271
    %v940 = vunpack.c.h.b16 %v271
    %v941 = vunpack.c.l.b16 %v272
    %v942 = vunpack.c.h.b16 %v272
    %v943 = vunpack.c.l.b16 %v273
    %v944 = vunpack.c.h.b16 %v273
    %v945 = vunpack.c.l.b16 %v274
    %v946 = vunpack.c.h.b16 %v274
    %v947 = vunpack.c.l.b16 %v275
    %v948 = vunpack.c.h.b16 %v275
    %v949 = vunpack.c.l.b16 %v276
    %v950 = vunpack.c.h.b16 %v276
    %v951 = vunpack.c.l.b16 %v277
    %v952 = vunpack.c.h.b16 %v277
    %v953 = vunpack.c.l.b16 %v278
    %v954 = vunpack.c.h.b16 %v278
    %v955 = vunpack.c.l.b16 %v279
    %v956 = vunpack.c.h.b16 %v279
    %v957 = vunpack.c.l.b16 %v280
    %v958 = vunpack.c.h.b16 %v280
    %v959 = vunpack.c.l.b16 %v281
    %v960 = vunpack.c.h.b16 %v281
    %v961 = vunpack.c.l.b16 %v282
    %v962 = vunpack.c.h.b16 %v282
    %v963 = vunpack.c.l.b16 %v283
    %v964 = vunpack.c.h.b16 %v283
    %v965 = vunpack.c.l.b16 %v284
    %v966 = vunpack.c.h.b16 %v284
    %v967 = vunpack.c.l.b16 %v285
    %v968 = vunpack.c.h.b16 %v285
    %v969 = vunpack.c.l.b16 %v286
    %v970 = vunpack.c.h.b16 %v286
    %v971 = vunpack.c.l.b16 %v287
    %v972 = vunpack.c.h.b16 %v287
    %v973 = vunpack.c.l.b16 %v288
    %v974 = vunpack.c.h.b16 %v288
    %v975 = vunpack.c.l.b16 %v289
    %v976 = vunpack.c.h.b16 %v289
    %v977 = vunpack.c.l.b16 %v290
    %v978 = vunpack.c.h.b16 %v290
    %v979 = vunpack.c.l.b16 %v291
    %v980 = vunpack.c.h.b16 %v291
    %v981 = vunpack.c.l.b16 %v292
    %v982 = vunpack.c.h.b16 %v292
    %v983 = vunpack.c.l.b16 %v293
    %v984 = vunpack.c.h.b16 %v293
    %v985 = vunpack.c.l.b16 %v294
    %v986 = vunpack.c.h.b16 %v294
    %v987 = vunpack.c.l.b16 %v295
    %v988 = vunpack.c.h.b16 %v295
    %v989 = vunpack.c.l.b16 %v296
    %v990 = vunpack.c.h.b16 %v296
    %v991 = vunpack.c.l.b16 %v297
    %v992 = vunpack.c.h.b16 %v297
    %v993 = vunpack.c.l.b16 %v298
    %v994 = vunpack.c.h.b16 %v298
    %v995 = vunpack.c.l.b16 %v299
    %v996 = vunpack.c.h.b16 %v299
    %v997 = vunpack.c.l.b16 %v300
    %v998 = vunpack.c.h.b16 %v300
    %v999 = vunpack.c.l.b16 %v301
    %v1000 = vunpack.c.h.b16 %v301
    %v1001 = vunpack.c.l.b16 %v302
    %v1002 = vunpack.c.h.b16 %v302
    %v1003 = vunpack.c.l.b16 %v303
    %v1004 = vunpack.c.h.b16 %v303
    %v1005 = vunpack.c.l.b16 %v304
    %v1006 = vunpack.c.h.b16 %v304
    %v1007 = vunpack.c.l.b16 %v305
    %v1008 = vunpack.c.h.b16 %v305
    %v1009 = vunpack.c.l.b16 %v306
    %v1010 = vunpack.c.h.b16 %v306
    %v1011 = vunpack.c.l.b16 %v307
    %v1012 = vunpack.c.h.b16 %v307
    %v1013 = vunpack.c.l.b16 %v308
    %v1014 = vunpack.c.h.b16 %v308
    %v1015 = vunpack.c.l.b16 %v309
    %v1016 = vunpack.c.h.b16 %v309
    %v1017 = vunpack.c.l.b16 %v310
    %v1018 = vunpack.c.h.b16 %v310
    %v1019 = vunpack.c.l.b16 %v311
    %v1020 = vunpack.c.h.b16 %v311
    %v1021 = vunpack.c.l.b16 %v312
    %v1022 = vunpack.c.h.b16 %v312
    %v1023 = vunpack.c.l.b16 %v313
    %v1024 = vunpack.c.h.b16 %v313
    %v1025 = vunpack.c.l.b16 %v314
    %v1026 = vunpack.c.h.b16 %v314
    %v1027 = vunpack.c.l.b16 %v315
    %v1028 = vunpack.c.h.b16 %v315
    %v1029 = vunpack.c.l.b16 %v316
    %v1030 = vunpack.c.h.b16 %v316
    %v1031 = vunpack.c.l.b16 %v317
    %v1032 = vunpack.c.h.b16 %v317
    %v1033 = vunpack.c.l.b16 %v318
    %v1034 = vunpack.c.h.b16 %v318
    %v1035 = vunpack.c.l.b16 %v319
    %v1036 = vunpack.c.h.b16 %v319
    %v1037 = vunpack.c.l.b16 %v320
    %v1038 = vunpack.c.h.b16 %v320
    %v1039 = vunpack.c.l.b16 %v321
    %v1040 = vunpack.c.h.b16 %v321
    %v1041 = vunpack.c.l.b16 %v322
    %v1042 = vunpack.c.h.b16 %v322
    %v1043 = vunpack.c.l.b16 %v323
    %v1044 = vunpack.c.h.b16 %v323
    %v1045 = vunpack.c.l.b16 %v324
    %v1046 = vunpack.c.h.b16 %v324
    %v1047 = vunpack.c.l.b16 %v325
    %v1048 = vunpack.c.h.b16 %v325
    %v1049 = vunpack.c.l.b16 %v326
    %v1050 = vunpack.c.h.b16 %v326
    %v1051 = vunpack.c.l.b16 %v327
    %v1052 = vunpack.c.h.b16 %v327
    %v1053 = vunpack.c.l.b16 %v328
    %v1054 = vunpack.c.h.b16 %v328
    %v1055 = vunpack.c.l.b16 %v329
    %v1056 = vunpack.c.h.b16 %v329
    %v1057 = vunpack.c.l.b16 %v330
    %v1058 = vunpack.c.h.b16 %v330
    %v1059 = vunpack.c.l.b16 %v331
    %v1060 = vunpack.c.h.b16 %v331
    %v1061 = vunpack.c.l.b16 %v332
    %v1062 = vunpack.c.h.b16 %v332
    %v1063 = vunpack.c.l.b16 %v333
    %v1064 = vunpack.c.h.b16 %v333
    %v1065 = vunpack.c.l.b16 %v334
    %v1066 = vunpack.c.h.b16 %v334
    %v1067 = vunpack.c.l.b16 %v335
    %v1068 = vunpack.c.h.b16 %v335
    %v1069 = vunpack.c.l.b16 %v336
    %v1070 = vunpack.c.h.b16 %v336
    %v1071 = vunpack.c.l.b16 %v337
    %v1072 = vunpack.c.h.b16 %v337
    %v1073 = vunpack.c.l.b16 %v338
    %v1074 = vunpack.c.h.b16 %v338
    %v1075 = vunpack.c.l.b16 %v339
    %v1076 = vunpack.c.h.b16 %v339
    %v1077 = vunpack.c.l.b16 %v340
    %v1078 = vunpack.c.h.b16 %v340
    %v1079 = vunpack.c.l.b16 %v341
    %v1080 = vunpack.c.h.b16 %v341
    %v1081 = vunpack.c.l.b16 %v342
    %v1082 = vunpack.c.h.b16 %v342
    %v1083 = vunpack.c.l.b16 %v343
    %v1084 = vunpack.c.h.b16 %v343
    %v1085 = vunpack.c.l.b16 %v344
    %v1086 = vunpack.c.h.b16 %v344
    %v1087 = vunpack.c.l.b16 %v345
    %v1088 = vunpack.c.h.b16 %v345
    %v1089 = vunpack.c.l.b16 %v346
    %v1090 = vunpack.c.h.b16 %v346
    %v1091 = vunpack.c.l.b16 %v347
    %v1092 = vunpack.c.h.b16 %v347
    %v1093 = vunpack.c.l.b16 %v348
    %v1094 = vunpack.c.h.b16 %v348
    %v1095 = vunpack.c.l.b16 %v349
    %v1096 = vunpack.c.h.b16 %v349
    %v1097 = vunpack.c.l.b16 %v350
    %v1098 = vunpack.c.h.b16 %v350
    %v1099 = vunpack.c.l.b16 %v351
    %v1100 = vunpack.c.h.b16 %v351
    %v1101 = vunpack.c.l.b16 %v352
    %v1102 = vunpack.c.h.b16 %v352
    %v1103 = vunpack.c.l.b16 %v353
    %v1104 = vunpack.c.h.b16 %v353
    %v1105 = vunpack.c.l.b16 %v354
    %v1106 = vunpack.c.h.b16 %v354
    %v1107 = vunpack.c.l.b16 %v355
    %v1108 = vunpack.c.h.b16 %v355
    %v1109 = vunpack.c.l.b16 %v356
    %v1110 = vunpack.c.h.b16 %v356
    %v1111 = vunpack.c.l.b16 %v357
    %v1112 = vunpack.c.h.b16 %v357
    %v1113 = vunpack.c.l.b16 %v358
    %v1114 = vunpack.c.h.b16 %v358
    %v1115 = vunpack.c.l.b16 %v359
    %v1116 = vunpack.c.h.b16 %v359
    %v1117 = vunpack.c.l.b16 %v360
    %v1118 = vunpack.c.h.b16 %v360
    %v1119 = vunpack.c.l.b16 %v361
    %v1120 = vunpack.c.h.b16 %v361
    %v1121 = vunpack.c.l.b16 %v362
    %v1122 = vunpack.c.h.b16 %v362
    %v1123 = vunpack.c.l.b16 %v363
    %v1124 = vunpack.c.h.b16 %v363
    %v1125 = vunpack.c.l.b16 %v364
    %v1126 = vunpack.c.h.b16 %v364
    %v1127 = vunpack.c.l.b16 %v365
    %v1128 = vunpack.c.h.b16 %v365
    %v1129 = vunpack.c.l.b16 %v366
    %v1130 = vunpack.c.h.b16 %v366
    %v1131 = vunpack.c.l.b16 %v367
    %v1132 = vunpack.c.h.b16 %v367
    %v1133 = vunpack.c.l.b16 %v368
    %v1134 = vunpack.c.h.b16 %v368
    %v1135 = vunpack.c.l.b16 %v369
    %v1136 = vunpack.c.h.b16 %v369
    %v1137 = vunpack.c.l.b16 %v370
    %v1138 = vunpack.c.h.b16 %v370
    %v1139 = vpack.c.b16 %v631, %v627
    %v1140 = vpack.c.b16 %v632, %v628
    %v1141 = vpack.c.b16 %v633, %v629
    %v1142 = vpack.c.b16 %v634, %v630
    %v1143 = vpack.c.b16 %v639, %v635
    %v1144 = vpack.c.b16 %v640, %v636
    %v1145 = vpack.c.b16 %v641, %v637
    %v1146 = vpack.c.b16 %v642, %v638
    %v1147 = vpack.c.b16 %v647, %v643
    %v1148 = vpack.c.b16 %v648, %v644
    %v1149 = vpack.c.b16 %v649, %v645
    %v1150 = vpack.c.b16 %v650, %v646
    %v1151 = vpack.c.b16 %v655, %v651
    %v1152 = vpack.c.b16 %v656, %v652
    %v1153 = vpack.c.b16 %v657, %v653
    %v1154 = vpack.c.b16 %v658, %v654
    %v1155 = vpack.c.b16 %v663, %v659
    %v1156 = vpack.c.b16 %v664, %v660
    %v1157 = vpack.c.b16 %v665, %v661
    %v1158 = vpack.c.b16 %v666, %v662
    %v1159 = vpack.c.b16 %v671, %v667
    %v1160 = vpack.c.b16 %v672, %v668
    %v1161 = vpack.c.b16 %v673, %v669
    %v1162 = vpack.c.b16 %v674, %v670
    %v1163 = vpack.c.b16 %v679, %v675
    %v1164 = vpack.c.b16 %v680, %v676
    %v1165 = vpack.c.b16 %v681, %v677
    %v1166 = vpack.c.b16 %v682, %v678
    %v1167 = vpack.c.b16 %v687, %v683
    %v1168 = vpack.c.b16 %v688, %v684
    %v1169 = vpack.c.b16 %v689, %v685
    %v1170 = vpack.c.b16 %v690, %v686
    %v1171 = vpack.c.b16 %v695, %v691
    %v1172 = vpack.c.b16 %v696, %v692
    %v1173 = vpack.c.b16 %v697, %v693
    %v1174 = vpack.c.b16 %v698, %v694
    %v1175 = vpack.c.b16 %v703, %v699
    %v1176 = vpack.c.b16 %v704, %v700
    %v1177 = vpack.c.b16 %v705, %v701
    %v1178 = vpack.c.b16 %v706, %v702
    %v1179 = vpack.c.b16 %v711, %v707
    %v1180 = vpack.c.b16 %v712, %v708
    %v1181 = vpack.c.b16 %v713, %v709
    %v1182 = vpack.c.b16 %v714, %v710
    %v1183 = vpack.c.b16 %v719, %v715
    %v1184 = vpack.c.b16 %v720, %v716
    %v1185 = vpack.c.b16 %v721, %v717
    %v1186 = vpack.c.b16 %v722, %v718
    %v1187 = vpack.c.b16 %v727, %v723
    %v1188 = vpack.c.b16 %v728, %v724
    %v1189 = vpack.c.b16 %v729, %v725
    %v1190 = vpack.c.b16 %v730, %v726
    %v1191 = vpack.c.b16 %v735, %v731
    %v1192 = vpack.c.b16 %v736, %v732
    %v1193 = vpack.c.b16 %v737, %v733
    %v1194 = vpack.c.b16 %v738, %v734
    %v1195 = vpack.c.b16 %v743, %v739
    %v1196 = vpack.c.b16 %v744, %v740
    %v1197 = vpack.c.b16 %v745, %v741
    %v1198 = vpack.c.b16 %v746, %v742
    %v1199 = vpack.c.b16 %v751, %v747
    %v1200 = vpack.c.b16 %v752, %v748
    %v1201 = vpack.c.b16 %v753, %v749
    %v1202 = vpack.c.b16 %v754, %v750
    %v1203 = vpack.c.b16 %v759, %v755
    %v1204 = vpack.c.b16 %v760, %v756
    %v1205 = vpack.c.b16 %v761, %v757
    %v1206 = vpack.c.b16 %v762, %v758
    %v1207 = vpack.c.b16 %v767, %v763
    %v1208 = vpack.c.b16 %v768, %v764
    %v1209 = vpack.c.b16 %v769, %v765
    %v1210 = vpack.c.b16 %v770, %v766
    %v1211 = vpack.c.b16 %v775, %v771
    %v1212 = vpack.c.b16 %v776, %v772
    %v1213 = vpack.c.b16 %v777, %v773
    %v1214 = vpack.c.b16 %v778, %v774
    %v1215 = vpack.c.b16 %v783, %v779
    %v1216 = vpack.c.b16 %v784, %v780
    %v1217 = vpack.c.b16 %v785, %v781
    %v1218 = vpack.c.b16 %v786, %v782
    %v1219 = vpack.c.b16 %v791, %v787
    %v1220 = vpack.c.b16 %v792, %v788
    %v1221 = vpack.c.b16 %v793, %v789
    %v1222 = vpack.c.b16 %v794, %v790
    %v1223 = vpack.c.b16 %v799, %v795
    %v1224 = vpack.c.b16 %v800, %v796
    %v1225 = vpack.c.b16 %v801, %v797
    %v1226 = vpack.c.b16 %v802, %v798
    %v1227 = vpack.c.b16 %v807, %v803
    %v1228 = vpack.c.b16 %v808, %v804
    %v1229 = vpack.c.b16 %v809, %v805
    %v1230 = vpack.c.b16 %v810, %v806
    %v1231 = vpack.c.b16 %v815, %v811
    %v1232 = vpack.c.b16 %v816, %v812
    %v1233 = vpack.c.b16 %v817, %v813
    %v1234 = vpack.c.b16 %v818, %v814
    %v1235 = vpack.c.b16 %v823, %v819
    %v1236 = vpack.c.b16 %v824, %v820
    %v1237 = vpack.c.b16 %v825, %v821
    %v1238 = vpack.c.b16 %v826, %v822
    %v1239 = vpack.c.b16 %v831, %v827
    %v1240 = vpack.c.b16 %v832, %v828
    %v1241 = vpack.c.b16 %v833, %v829
    %v1242 = vpack.c.b16 %v834, %v830
    %v1243 = vpack.c.b16 %v839, %v835
    %v1244 = vpack.c.b16 %v840, %v836
    %v1245 = vpack.c.b16 %v841, %v837
    %v1246 = vpack.c.b16 %v842, %v838
    %v1247 = vpack.c.b16 %v847, %v843
    %v1248 = vpack.c.b16 %v848, %v844
    %v1249 = vpack.c.b16 %v849, %v845
    %v1250 = vpack.c.b16 %v850, %v846
    %v1251 = vpack.c.b16 %v855, %v851
    %v1252 = vpack.c.b16 %v856, %v852
    %v1253 = vpack.c.b16 %v857, %v853
    %v1254 = vpack.c.b16 %v858, %v854
    %v1255 = vpack.c.b16 %v863, %v859
    %v1256 = vpack.c.b16 %v864, %v860
    %v1257 = vpack.c.b16 %v865, %v861
    %v1258 = vpack.c.b16 %v866, %v862
    %v1259 = vpack.c.b16 %v871, %v867
    %v1260 = vpack.c.b16 %v872, %v868
    %v1261 = vpack.c.b16 %v873, %v869
    %v1262 = vpack.c.b16 %v874, %v870
    %v1263 = vpack.c.b16 %v879, %v875
    %v1264 = vpack.c.b16 %v880, %v876
    %v1265 = vpack.c.b16 %v881, %v877
    %v1266 = vpack.c.b16 %v882, %v878
    %v1267 = vpack.c.b16 %v887, %v883
    %v1268 = vpack.c.b16 %v888, %v884
    %v1269 = vpack.c.b16 %v889, %v885
    %v1270 = vpack.c.b16 %v890, %v886
    %v1271 = vpack.c.b16 %v895, %v891
    %v1272 = vpack.c.b16 %v896, %v892
    %v1273 = vpack.c.b16 %v897, %v893
    %v1274 = vpack.c.b16 %v898, %v894
    %v1275 = vpack.c.b16 %v903, %v899
    %v1276 = vpack.c.b16 %v904, %v900
    %v1277 = vpack.c.b16 %v905, %v901
    %v1278 = vpack.c.b16 %v906, %v902
    %v1279 = vpack.c.b16 %v911, %v907
    %v1280 = vpack.c.b16 %v912, %v908
    %v1281 = vpack.c.b16 %v913, %v909
    %v1282 = vpack.c.b16 %v914, %v910
    %v1283 = vpack.c.b16 %v919, %v915
    %v1284 = vpack.c.b16 %v920, %v916
    %v1285 = vpack.c.b16 %v921, %v917
    %v1286 = vpack.c.b16 %v922, %v918
    %v1287 = vpack.c.b16 %v927, %v923
    %v1288 = vpack.c.b16 %v928, %v924
    %v1289 = vpack.c.b16 %v929, %v925
    %v1290 = vpack.c.b16 %v930, %v926
    %v1291 = vpack.c.b16 %v935, %v931
    %v1292 = vpack.c.b16 %v936, %v932
    %v1293 = vpack.c.b16 %v937, %v933
    %v1294 = vpack.c.b16 %v938, %v934
    %v1295 = vpack.c.b16 %v943, %v939
    %v1296 = vpack.c.b16 %v944, %v940
    %v1297 = vpack.c.b16 %v945, %v941
    %v1298 = vpack.c.b16 %v946, %v942
    %v1299 = vpack.c.b16 %v951, %v947
    %v1300 = vpack.c.b16 %v952, %v948
    %v1301 = vpack.c.b16 %v953, %v949
    %v1302 = vpack.c.b16 %v954, %v950
    %v1303 = vpack.c.b16 %v959, %v955
    %v1304 = vpack.c.b16 %v960, %v956
    %v1305 = vpack.c.b16 %v961, %v957
    %v1306 = vpack.c.b16 %v962, %v958
    %v1307 = vpack.c.b16 %v967, %v963
    %v1308 = vpack.c.b16 %v968, %v964
    %v1309 = vpack.c.b16 %v969, %v965
    %v1310 = vpack.c.b16 %v970, %v966
    %v1311 = vpack.c.b16 %v975, %v971
    %v1312 = vpack.c.b16 %v976, %v972
    %v1313 = vpack.c.b16 %v977, %v973
    %v1314 = vpack.c.b16 %v978, %v974
    %v1315 = vpack.c.b16 %v983, %v979
    %v1316 = vpack.c.b16 %v984, %v980
    %v1317 = vpack.c.b16 %v985, %v981
    %v1318 = vpack.c.b16 %v986, %v982
    %v1319 = vpack.c.b16 %v991, %v987
    %v1320 = vpack.c.b16 %v992, %v988
    %v1321 = vpack.c.b16 %v993, %v989
    %v1322 = vpack.c.b16 %v994, %v990
    %v1323 = vpack.c.b16 %v999, %v995
    %v1324 = vpack.c.b16 %v1000, %v996
    %v1325 = vpack.c.b16 %v1001, %v997
    %v1326 = vpack.c.b16 %v1002, %v998
    %v1327 = vpack.c.b16 %v1007, %v1003
    %v1328 = vpack.c.b16 %v1008, %v1004
    %v1329 = vpack.c.b16 %v1009, %v1005
    %v1330 = vpack.c.b16 %v1010, %v1006
    %v1331 = vpack.c.b16 %v1015, %v1011
    %v1332 = vpack.c.b16 %v1016, %v1012
    %v1333 = vpack.c.b16 %v1017, %v1013
    %v1334 = vpack.c.b16 %v1018, %v1014
    %v1335 = vpack.c.b16 %v1023, %v1019
    %v1336 = vpack.c.b16 %v1024, %v1020
    %v1337 = vpack.c.b16 %v1025, %v1021
    %v1338 = vpack.c.b16 %v1026, %v1022
    %v1339 = vpack.c.b16 %v1031, %v1027
    %v1340 = vpack.c.b16 %v1032, %v1028
    %v1341 = vpack.c.b16 %v1033, %v1029
    %v1342 = vpack.c.b16 %v1034, %v1030
    %v1343 = vpack.c.b16 %v1039, %v1035
    %v1344 = vpack.c.b16 %v1040, %v1036
    %v1345 = vpack.c.b16 %v1041, %v1037
    %v1346 = vpack.c.b16 %v1042, %v1038
    %v1347 = vpack.c.b16 %v1047, %v1043
    %v1348 = vpack.c.b16 %v1048, %v1044
    %v1349 = vpack.c.b16 %v1049, %v1045
    %v1350 = vpack.c.b16 %v1050, %v1046
    %v1351 = vpack.c.b16 %v1055, %v1051
    %v1352 = vpack.c.b16 %v1056, %v1052
    %v1353 = vpack.c.b16 %v1057, %v1053
    %v1354 = vpack.c.b16 %v1058, %v1054
    %v1355 = vpack.c.b16 %v1063, %v1059
    %v1356 = vpack.c.b16 %v1064, %v1060
    %v1357 = vpack.c.b16 %v1065, %v1061
    %v1358 = vpack.c.b16 %v1066, %v1062
    %v1359 = vpack.c.b16 %v1071, %v1067
    %v1360 = vpack.c.b16 %v1072, %v1068
    %v1361 = vpack.c.b16 %v1073, %v1069
    %v1362 = vpack.c.b16 %v1074, %v1070
    %v1363 = vpack.c.b16 %v1079, %v1075
    %v1364 = vpack.c.b16 %v1080, %v1076
    %v1365 = vpack.c.b16 %v1081, %v1077
    %v1366 = vpack.c.b16 %v1082, %v1078
    %v1367 = vpack.c.b16 %v1087, %v1083
    %v1368 = vpack.c.b16 %v1088, %v1084
    %v1369 = vpack.c.b16 %v1089, %v1085
    %v1370 = vpack.c.b16 %v1090, %v1086
    %v1371 = vpack.c.b16 %v1095, %v1091
    %v1372 = vpack.c.b16 %v1096, %v1092
    %v1373 = vpack.c.b16 %v1097, %v1093
    %v1374 = vpack.c.b16 %v1098, %v1094
    %v1375 = vpack.c.b16 %v1103, %v1099
    %v1376 = vpack.c.b16 %v1104, %v1100
    %v1377 = vpack.c.b16 %v1105, %v1101
    %v1378 = vpack.c.b16 %v1106, %v1102
    %v1379 = vpack.c.b16 %v1111, %v1107
    %v1380 = vpack.c.b16 %v1112, %v1108
    %v1381 = vpack.c.b16 %v1113, %v1109
    %v1382 = vpack.c.b16 %v1114, %v1110
    %v1383 = vpack.c.b16 %v1119, %v1115
    %v1384 = vpack.c.b16 %v1120, %v1116
    %v1385 = vpack.c.b16 %v1121, %v1117
    %v1386 = vpack.c.b16 %v1122, %v1118
    %v1387 = vpack.c.b16 %v1127, %v1123
    %v1388 = vpack.c.b16 %v1128, %v1124
    %v1389 = vpack.c.b16 %v1129, %v1125
    %v1390 = vpack.c.b16 %v1130, %v1126
    %v1391 = vpack.c.b16 %v1135, %v1131
    %v1392 = vpack.c.b16 %v1136, %v1132
    %v1393 = vpack.c.b16 %v1137, %v1133
    %v1394 = vpack.c.b16 %v1138, %v1134
    %1651 = vmatprep.subr.bf16.mxu0 %v1168
    %1652 = vmatpush1.bf16.msra.mxu0 %v1167
    %1653 = vmatprep.subr.bf16.mxu0 %v1164
    %1654 = vmatpush1.bf16.msra.mxu0 %v1163
    %1655 = vmatprep.subr.bf16.mxu0 %v1160
    %1656 = vmatpush1.bf16.msra.mxu0 %v1159
    %1657 = vmatprep.subr.bf16.mxu0 %v1156
    %1658 = vmatpush1.bf16.msra.mxu0 %v1155
    %1659 = vmatprep.subr.bf16.mxu0 %v1152
    %1660 = vmatpush1.bf16.msra.mxu0 %v1151
    %1661 = vmatprep.subr.bf16.mxu0 %v1148
    %1662 = vmatpush1.bf16.msra.mxu0 %v1147
    %1663 = vmatprep.subr.bf16.mxu0 %v1144
    %1664 = vmatpush1.bf16.msra.mxu0 %v1143
    %1665 = vmatprep.subr.bf16.mxu0 %v1140
    %1666 = vmatpush1.bf16.msra.mxu0 %v1139
    %1667 = vmatprep.subr.bf16.mxu0 %v1200
    %1668 = vmatpush2.bf16.msra.mxu0 %v1199
    %1669 = vmatprep.subr.bf16.mxu0 %v1196
    %1670 = vmatpush2.bf16.msra.mxu0 %v1195
    %1671 = vmatprep.subr.bf16.mxu0 %v1192
    %1672 = vmatpush2.bf16.msra.mxu0 %v1191
    %1673 = vmatprep.subr.bf16.mxu0 %v1188
    %1674 = vmatpush2.bf16.msra.mxu0 %v1187
    %1675 = vmatprep.subr.bf16.mxu0 %v1184
    %1676 = vmatpush2.bf16.msra.mxu0 %v1183
    %1677 = vmatprep.subr.bf16.mxu0 %v1180
    %1678 = vmatpush2.bf16.msra.mxu0 %v1179
    %1679 = vmatprep.subr.bf16.mxu0 %v1176
    %1680 = vmatpush2.bf16.msra.mxu0 %v1175
    %1681 = vmatprep.subr.bf16.mxu0 %v1172
    %1682 = vmatpush2.bf16.msra.mxu0 %v1171
    %1683 = vmatprep.mubr.bf16.mxu0 %v108
    %1684 = vmatmul.mubr.bf16.gmra.mxu0 %v107
    %v1685 = vpop.f32.mrf.mxu0
    %v1686 = vadd.f32 0.0, %v1685
    %v1687 = vpop.f32.mrf.mxu0
    %v1688 = vadd.f32 0.0, %v1687
    %v1689 = vpop.f32.mrf.mxu0
    %v1690 = vpop.f32.mrf.mxu0
    %1691 = vdwg.mxu0
    %1692 = vmatprep.subr.bf16.mxu0 %v1232
    %1693 = vmatpush1.bf16.msra.mxu0 %v1231
    %1694 = vmatprep.subr.bf16.mxu0 %v1228
    %1695 = vmatpush1.bf16.msra.mxu0 %v1227
    %1696 = vmatprep.subr.bf16.mxu0 %v1224
    %1697 = vmatpush1.bf16.msra.mxu0 %v1223
    %1698 = vmatprep.subr.bf16.mxu0 %v1220
    %1699 = vmatpush1.bf16.msra.mxu0 %v1219
    %1700 = vmatprep.subr.bf16.mxu0 %v1216
    %1701 = vmatpush1.bf16.msra.mxu0 %v1215
    %1702 = vmatprep.subr.bf16.mxu0 %v1212
    %1703 = vmatpush1.bf16.msra.mxu0 %v1211
    %1704 = vmatprep.subr.bf16.mxu0 %v1208
    %1705 = vmatpush1.bf16.msra.mxu0 %v1207
    %1706 = vmatprep.subr.bf16.mxu0 %v1204
    %1707 = vmatpush1.bf16.msra.mxu0 %v1203
    %1708 = vmatprep.subr.bf16.mxu0 %v1264
    %1709 = vmatpush2.bf16.msra.mxu0 %v1263
    %1710 = vmatprep.subr.bf16.mxu0 %v1260
    %1711 = vmatpush2.bf16.msra.mxu0 %v1259
    %1712 = vmatprep.subr.bf16.mxu0 %v1256
    %1713 = vmatpush2.bf16.msra.mxu0 %v1255
    %1714 = vmatprep.subr.bf16.mxu0 %v1252
    %1715 = vmatpush2.bf16.msra.mxu0 %v1251
    %1716 = vmatprep.subr.bf16.mxu0 %v1248
    %1717 = vmatpush2.bf16.msra.mxu0 %v1247
    %1718 = vmatprep.subr.bf16.mxu0 %v1244
    %1719 = vmatpush2.bf16.msra.mxu0 %v1243
    %1720 = vmatprep.subr.bf16.mxu0 %v1240
    %1721 = vmatpush2.bf16.msra.mxu0 %v1239
    %1722 = vmatprep.subr.bf16.mxu0 %v1236
    %1723 = vmatpush2.bf16.msra.mxu0 %v1235
    %1724 = vmatprep.mubr.bf16.mxu0 %v110
    %1725 = vmatmul.mubr.bf16.gmra.mxu0 %v109
    %v1726 = vpop.f32.mrf.mxu0
    %v1727 = vadd.f32 %v1686, %v1726
    %v1728 = vpop.f32.mrf.mxu0
    %v1729 = vadd.f32 %v1688, %v1728
    %v1730 = vpop.f32.mrf.mxu0
    %v1731 = vpop.f32.mrf.mxu0
    %1732 = vdwg.mxu0
    %1733 = vmatprep.subr.bf16.mxu0 %v1296
    %1734 = vmatpush1.bf16.msra.mxu0 %v1295
    %1735 = vmatprep.subr.bf16.mxu0 %v1292
    %1736 = vmatpush1.bf16.msra.mxu0 %v1291
    %1737 = vmatprep.subr.bf16.mxu0 %v1288
    %1738 = vmatpush1.bf16.msra.mxu0 %v1287
    %1739 = vmatprep.subr.bf16.mxu0 %v1284
    %1740 = vmatpush1.bf16.msra.mxu0 %v1283
    %1741 = vmatprep.subr.bf16.mxu0 %v1280
    %1742 = vmatpush1.bf16.msra.mxu0 %v1279
    %1743 = vmatprep.subr.bf16.mxu0 %v1276
    %1744 = vmatpush1.bf16.msra.mxu0 %v1275
    %1745 = vmatprep.subr.bf16.mxu0 %v1272
    %1746 = vmatpush1.bf16.msra.mxu0 %v1271
    %1747 = vmatprep.subr.bf16.mxu0 %v1268
    %1748 = vmatpush1.bf16.msra.mxu0 %v1267
    %1749 = vmatprep.subr.bf16.mxu0 %v1328
    %1750 = vmatpush2.bf16.msra.mxu0 %v1327
    %1751 = vmatprep.subr.bf16.mxu0 %v1324
    %1752 = vmatpush2.bf16.msra.mxu0 %v1323
    %1753 = vmatprep.subr.bf16.mxu0 %v1320
    %1754 = vmatpush2.bf16.msra.mxu0 %v1319
    %1755 = vmatprep.subr.bf16.mxu0 %v1316
    %1756 = vmatpush2.bf16.msra.mxu0 %v1315
    %1757 = vmatprep.subr.bf16.mxu0 %v1312
    %1758 = vmatpush2.bf16.msra.mxu0 %v1311
    %1759 = vmatprep.subr.bf16.mxu0 %v1308
    %1760 = vmatpush2.bf16.msra.mxu0 %v1307
    %1761 = vmatprep.subr.bf16.mxu0 %v1304
    %1762 = vmatpush2.bf16.msra.mxu0 %v1303
    %1763 = vmatprep.subr.bf16.mxu0 %v1300
    %1764 = vmatpush2.bf16.msra.mxu0 %v1299
    %1765 = vmatprep.mubr.bf16.mxu0 %v112
    %1766 = vmatmul.mubr.bf16.gmra.mxu0 %v111
    %v1767 = vpop.f32.mrf.mxu0
    %v1768 = vadd.f32 %v1727, %v1767
    %v1769 = vpop.f32.mrf.mxu0
    %v1770 = vadd.f32 %v1729, %v1769
    %v1771 = vpop.f32.mrf.mxu0
    %v1772 = vpop.f32.mrf.mxu0
    %1773 = vdwg.mxu0
    %1774 = vmatprep.subr.bf16.mxu0 %v1360
    %1775 = vmatpush1.bf16.msra.mxu0 %v1359
    %1776 = vmatprep.subr.bf16.mxu0 %v1356
    %1777 = vmatpush1.bf16.msra.mxu0 %v1355
    %1778 = vmatprep.subr.bf16.mxu0 %v1352
    %1779 = vmatpush1.bf16.msra.mxu0 %v1351
    %1780 = vmatprep.subr.bf16.mxu0 %v1348
    %1781 = vmatpush1.bf16.msra.mxu0 %v1347
    %1782 = vmatprep.subr.bf16.mxu0 %v1344
    %1783 = vmatpush1.bf16.msra.mxu0 %v1343
    %1784 = vmatprep.subr.bf16.mxu0 %v1340
    %1785 = vmatpush1.bf16.msra.mxu0 %v1339
    %1786 = vmatprep.subr.bf16.mxu0 %v1336
    %1787 = vmatpush1.bf16.msra.mxu0 %v1335
    %1788 = vmatprep.subr.bf16.mxu0 %v1332
    %1789 = vmatpush1.bf16.msra.mxu0 %v1331
    %1790 = vmatprep.subr.bf16.mxu0 %v1392
    %1791 = vmatpush2.bf16.msra.mxu0 %v1391
    %1792 = vmatprep.subr.bf16.mxu0 %v1388
    %1793 = vmatpush2.bf16.msra.mxu0 %v1387
    %1794 = vmatprep.subr.bf16.mxu0 %v1384
    %1795 = vmatpush2.bf16.msra.mxu0 %v1383
    %1796 = vmatprep.subr.bf16.mxu0 %v1380
    %1797 = vmatpush2.bf16.msra.mxu0 %v1379
    %1798 = vmatprep.subr.bf16.mxu0 %v1376
    %1799 = vmatpush2.bf16.msra.mxu0 %v1375
    %1800 = vmatprep.subr.bf16.mxu0 %v1372
    %1801 = vmatpush2.bf16.msra.mxu0 %v1371
    %1802 = vmatprep.subr.bf16.mxu0 %v1368
    %1803 = vmatpush2.bf16.msra.mxu0 %v1367
    %1804 = vmatprep.subr.bf16.mxu0 %v1364
    %1805 = vmatpush2.bf16.msra.mxu0 %v1363
    %1806 = vmatprep.mubr.bf16.mxu0 %v114
    %1807 = vmatmul.mubr.bf16.gmra.mxu0 %v113
    %v1808 = vpop.f32.mrf.mxu0
    %v1809 = vadd.f32 %v1768, %v1808
    %v1810 = vpop.f32.mrf.mxu0
    %v1811 = vadd.f32 %v1770, %v1810
    %v1812 = vpop.f32.mrf.mxu0
    %v1813 = vpop.f32.mrf.mxu0
    %1814 = vdwg.mxu0
    %1815 = vmatprep.subr.bf16.mxu0 %v1170
    %1816 = vmatpush1.bf16.msra.mxu0 %v1169
    %1817 = vmatprep.subr.bf16.mxu0 %v1166
    %1818 = vmatpush1.bf16.msra.mxu0 %v1165
    %1819 = vmatprep.subr.bf16.mxu0 %v1162
    %1820 = vmatpush1.bf16.msra.mxu0 %v1161
    %1821 = vmatprep.subr.bf16.mxu0 %v1158
    %1822 = vmatpush1.bf16.msra.mxu0 %v1157
    %1823 = vmatprep.subr.bf16.mxu0 %v1154
    %1824 = vmatpush1.bf16.msra.mxu0 %v1153
    %1825 = vmatprep.subr.bf16.mxu0 %v1150
    %1826 = vmatpush1.bf16.msra.mxu0 %v1149
    %1827 = vmatprep.subr.bf16.mxu0 %v1146
    %1828 = vmatpush1.bf16.msra.mxu0 %v1145
    %1829 = vmatprep.subr.bf16.mxu0 %v1142
    %1830 = vmatpush1.bf16.msra.mxu0 %v1141
    %1831 = vmatprep.subr.bf16.mxu0 %v1202
    %1832 = vmatpush2.bf16.msra.mxu0 %v1201
    %1833 = vmatprep.subr.bf16.mxu0 %v1198
    %1834 = vmatpush2.bf16.msra.mxu0 %v1197
    %1835 = vmatprep.subr.bf16.mxu0 %v1194
    %1836 = vmatpush2.bf16.msra.mxu0 %v1193
    %1837 = vmatprep.subr.bf16.mxu0 %v1190
    %1838 = vmatpush2.bf16.msra.mxu0 %v1189
    %1839 = vmatprep.subr.bf16.mxu0 %v1186
    %1840 = vmatpush2.bf16.msra.mxu0 %v1185
    %1841 = vmatprep.subr.bf16.mxu0 %v1182
    %1842 = vmatpush2.bf16.msra.mxu0 %v1181
    %1843 = vmatprep.subr.bf16.mxu0 %v1178
    %1844 = vmatpush2.bf16.msra.mxu0 %v1177
    %1845 = vmatprep.subr.bf16.mxu0 %v1174
    %1846 = vmatpush2.bf16.msra.mxu0 %v1173
    %1847 = vmatprep.mubr.bf16.mxu0 %v108
    %1848 = vmatmul.mubr.bf16.gmra.mxu0 %v107
    %v1849 = vpop.f32.mrf.mxu0
    %v1850 = vadd.f32 0.0, %v1849
    %v1851 = vpop.f32.mrf.mxu0
    %v1852 = vadd.f32 0.0, %v1851
    %v1853 = vpop.f32.mrf.mxu0
    %v1854 = vpop.f32.mrf.mxu0
    %1855 = vdwg.mxu0
    %1856 = vmatprep.subr.bf16.mxu0 %v1234
    %1857 = vmatpush1.bf16.msra.mxu0 %v1233
    %1858 = vmatprep.subr.bf16.mxu0 %v1230
    %1859 = vmatpush1.bf16.msra.mxu0 %v1229
    %1860 = vmatprep.subr.bf16.mxu0 %v1226
    %1861 = vmatpush1.bf16.msra.mxu0 %v1225
    %1862 = vmatprep.subr.bf16.mxu0 %v1222
    %1863 = vmatpush1.bf16.msra.mxu0 %v1221
    %1864 = vmatprep.subr.bf16.mxu0 %v1218
    %1865 = vmatpush1.bf16.msra.mxu0 %v1217
    %1866 = vmatprep.subr.bf16.mxu0 %v1214
    %1867 = vmatpush1.bf16.msra.mxu0 %v1213
    %1868 = vmatprep.subr.bf16.mxu0 %v1210
    %1869 = vmatpush1.bf16.msra.mxu0 %v1209
    %1870 = vmatprep.subr.bf16.mxu0 %v1206
    %1871 = vmatpush1.bf16.msra.mxu0 %v1205
    %1872 = vmatprep.subr.bf16.mxu0 %v1266
    %1873 = vmatpush2.bf16.msra.mxu0 %v1265
    %1874 = vmatprep.subr.bf16.mxu0 %v1262
    %1875 = vmatpush2.bf16.msra.mxu0 %v1261
    %1876 = vmatprep.subr.bf16.mxu0 %v1258
    %1877 = vmatpush2.bf16.msra.mxu0 %v1257
    %1878 = vmatprep.subr.bf16.mxu0 %v1254
    %1879 = vmatpush2.bf16.msra.mxu0 %v1253
    %1880 = vmatprep.subr.bf16.mxu0 %v1250
    %1881 = vmatpush2.bf16.msra.mxu0 %v1249
    %1882 = vmatprep.subr.bf16.mxu0 %v1246
    %1883 = vmatpush2.bf16.msra.mxu0 %v1245
    %1884 = vmatprep.subr.bf16.mxu0 %v1242
    %1885 = vmatpush2.bf16.msra.mxu0 %v1241
    %1886 = vmatprep.subr.bf16.mxu0 %v1238
    %1887 = vmatpush2.bf16.msra.mxu0 %v1237
    %1888 = vmatprep.mubr.bf16.mxu0 %v110
    %1889 = vmatmul.mubr.bf16.gmra.mxu0 %v109
    %v1890 = vpop.f32.mrf.mxu0
    %v1891 = vadd.f32 %v1850, %v1890
    %v1892 = vpop.f32.mrf.mxu0
    %v1893 = vadd.f32 %v1852, %v1892
    %v1894 = vpop.f32.mrf.mxu0
    %v1895 = vpop.f32.mrf.mxu0
    %1896 = vdwg.mxu0
    %1897 = vmatprep.subr.bf16.mxu0 %v1298
    %1898 = vmatpush1.bf16.msra.mxu0 %v1297
    %1899 = vmatprep.subr.bf16.mxu0 %v1294
    %1900 = vmatpush1.bf16.msra.mxu0 %v1293
    %1901 = vmatprep.subr.bf16.mxu0 %v1290
    %1902 = vmatpush1.bf16.msra.mxu0 %v1289
    %1903 = vmatprep.subr.bf16.mxu0 %v1286
    %1904 = vmatpush1.bf16.msra.mxu0 %v1285
    %1905 = vmatprep.subr.bf16.mxu0 %v1282
    %1906 = vmatpush1.bf16.msra.mxu0 %v1281
    %1907 = vmatprep.subr.bf16.mxu0 %v1278
    %1908 = vmatpush1.bf16.msra.mxu0 %v1277
    %1909 = vmatprep.subr.bf16.mxu0 %v1274
    %1910 = vmatpush1.bf16.msra.mxu0 %v1273
    %1911 = vmatprep.subr.bf16.mxu0 %v1270
    %1912 = vmatpush1.bf16.msra.mxu0 %v1269
    %1913 = vmatprep.subr.bf16.mxu0 %v1330
    %1914 = vmatpush2.bf16.msra.mxu0 %v1329
    %1915 = vmatprep.subr.bf16.mxu0 %v1326
    %1916 = vmatpush2.bf16.msra.mxu0 %v1325
    %1917 = vmatprep.subr.bf16.mxu0 %v1322
    %1918 = vmatpush2.bf16.msra.mxu0 %v1321
    %1919 = vmatprep.subr.bf16.mxu0 %v1318
    %1920 = vmatpush2.bf16.msra.mxu0 %v1317
    %1921 = vmatprep.subr.bf16.mxu0 %v1314
    %1922 = vmatpush2.bf16.msra.mxu0 %v1313
    %1923 = vmatprep.subr.bf16.mxu0 %v1310
    %1924 = vmatpush2.bf16.msra.mxu0 %v1309
    %1925 = vmatprep.subr.bf16.mxu0 %v1306
    %1926 = vmatpush2.bf16.msra.mxu0 %v1305
    %1927 = vmatprep.subr.bf16.mxu0 %v1302
    %1928 = vmatpush2.bf16.msra.mxu0 %v1301
    %1929 = vmatprep.mubr.bf16.mxu0 %v112
    %1930 = vmatmul.mubr.bf16.gmra.mxu0 %v111
    %v1931 = vpop.f32.mrf.mxu0
    %v1932 = vadd.f32 %v1891, %v1931
    %v1933 = vpop.f32.mrf.mxu0
    %v1934 = vadd.f32 %v1893, %v1933
    %v1935 = vpop.f32.mrf.mxu0
    %v1936 = vpop.f32.mrf.mxu0
    %1937 = vdwg.mxu0
    %1938 = vmatprep.subr.bf16.mxu0 %v1362
    %1939 = vmatpush1.bf16.msra.mxu0 %v1361
    %1940 = vmatprep.subr.bf16.mxu0 %v1358
    %1941 = vmatpush1.bf16.msra.mxu0 %v1357
    %1942 = vmatprep.subr.bf16.mxu0 %v1354
    %1943 = vmatpush1.bf16.msra.mxu0 %v1353
    %1944 = vmatprep.subr.bf16.mxu0 %v1350
    %1945 = vmatpush1.bf16.msra.mxu0 %v1349
    %1946 = vmatprep.subr.bf16.mxu0 %v1346
    %1947 = vmatpush1.bf16.msra.mxu0 %v1345
    %1948 = vmatprep.subr.bf16.mxu0 %v1342
    %1949 = vmatpush1.bf16.msra.mxu0 %v1341
    %1950 = vmatprep.subr.bf16.mxu0 %v1338
    %1951 = vmatpush1.bf16.msra.mxu0 %v1337
    %1952 = vmatprep.subr.bf16.mxu0 %v1334
    %1953 = vmatpush1.bf16.msra.mxu0 %v1333
    %1954 = vmatprep.subr.bf16.mxu0 %v1394
    %1955 = vmatpush2.bf16.msra.mxu0 %v1393
    %1956 = vmatprep.subr.bf16.mxu0 %v1390
    %1957 = vmatpush2.bf16.msra.mxu0 %v1389
    %1958 = vmatprep.subr.bf16.mxu0 %v1386
    %1959 = vmatpush2.bf16.msra.mxu0 %v1385
    %1960 = vmatprep.subr.bf16.mxu0 %v1382
    %1961 = vmatpush2.bf16.msra.mxu0 %v1381
    %1962 = vmatprep.subr.bf16.mxu0 %v1378
    %1963 = vmatpush2.bf16.msra.mxu0 %v1377
    %1964 = vmatprep.subr.bf16.mxu0 %v1374
    %1965 = vmatpush2.bf16.msra.mxu0 %v1373
    %1966 = vmatprep.subr.bf16.mxu0 %v1370
    %1967 = vmatpush2.bf16.msra.mxu0 %v1369
    %1968 = vmatprep.subr.bf16.mxu0 %v1366
    %1969 = vmatpush2.bf16.msra.mxu0 %v1365
    %1970 = vmatprep.mubr.bf16.mxu0 %v114
    %1971 = vmatmul.mubr.bf16.gmra.mxu0 %v113
    %v1972 = vpop.f32.mrf.mxu0
    %v1973 = vadd.f32 %v1932, %v1972
    %v1974 = vpop.f32.mrf.mxu0
    %v1975 = vadd.f32 %v1934, %v1974
    %v1976 = vpop.f32.mrf.mxu0
    %v1977 = vpop.f32.mrf.mxu0
    %1978 = vdwg.mxu0
    %vm1979 = vcmask 1041408
    %v1980 = vsel %vm1979, %v1809, 0.0
    %v1981 = vrot.slane %v1980, 4
    %v1982 = vadd.f32 %v1980, %v1981
    %v1983 = vrot.slane %v1982, 2
    %v1984 = vadd.f32 %v1982, %v1983
    %v1985 = vrot.slane %v1984, 1
    %v1986 = vadd.f32 %v1984, %v1985
    %v1987 = vsel %vm1979, %v1811, 0.0
    %v1988 = vrot.slane %v1987, 4
    %v1989 = vadd.f32 %v1987, %v1988
    %v1990 = vrot.slane %v1989, 2
    %v1991 = vadd.f32 %v1989, %v1990
    %v1992 = vrot.slane %v1991, 1
    %v1993 = vadd.f32 %v1991, %v1992
    %v1994 = vsel %vm1979, %v1973, 0.0
    %v1995 = vrot.slane %v1994, 4
    %v1996 = vadd.f32 %v1994, %v1995
    %v1997 = vrot.slane %v1996, 2
    %v1998 = vadd.f32 %v1996, %v1997
    %v1999 = vrot.slane %v1998, 1
    %v2000 = vadd.f32 %v1998, %v1999
    %v2001 = vsel %vm1979, %v1975, 0.0
    %v2002 = vrot.slane %v2001, 4
    %v2003 = vadd.f32 %v2001, %v2002
    %v2004 = vrot.slane %v2003, 2
    %v2005 = vadd.f32 %v2003, %v2004
    %v2006 = vrot.slane %v2005, 1
    %v2007 = vadd.f32 %v2005, %v2006
    %v2008 = vrcp.pop 2.0
    %v2009 = vmul.f32 %v1986, %v2008
    %v2010 = vmul.f32 %v1993, %v2008
    %v2011 = vmul.f32 %v2000, %v2008
    %v2012 = vmul.f32 %v2007, %v2008
    %v2013 = vmul.f32 %v1809, %v1809
    %v2014 = vmul.f32 %v1811, %v1811
    %v2015 = vmul.f32 %v1973, %v1973
    %v2016 = vmul.f32 %v1975, %v1975
    %v2017 = vsel %vm1979, %v2013, 0.0
    %v2018 = vrot.slane %v2017, 4
    %v2019 = vadd.f32 %v2017, %v2018
    %v2020 = vrot.slane %v2019, 2
    %v2021 = vadd.f32 %v2019, %v2020
    %v2022 = vrot.slane %v2021, 1
    %v2023 = vadd.f32 %v2021, %v2022
    %v2024 = vsel %vm1979, %v2014, 0.0
    %v2025 = vrot.slane %v2024, 4
    %v2026 = vadd.f32 %v2024, %v2025
    %v2027 = vrot.slane %v2026, 2
    %v2028 = vadd.f32 %v2026, %v2027
    %v2029 = vrot.slane %v2028, 1
    %v2030 = vadd.f32 %v2028, %v2029
    %v2031 = vsel %vm1979, %v2015, 0.0
    %v2032 = vrot.slane %v2031, 4
    %v2033 = vadd.f32 %v2031, %v2032
    %v2034 = vrot.slane %v2033, 2
    %v2035 = vadd.f32 %v2033, %v2034
    %v2036 = vrot.slane %v2035, 1
    %v2037 = vadd.f32 %v2035, %v2036
    %v2038 = vsel %vm1979, %v2016, 0.0
    %v2039 = vrot.slane %v2038, 4
    %v2040 = vadd.f32 %v2038, %v2039
    %v2041 = vrot.slane %v2040, 2
    %v2042 = vadd.f32 %v2040, %v2041
    %v2043 = vrot.slane %v2042, 1
    %v2044 = vadd.f32 %v2042, %v2043
    %v2045 = vmul.f32 %v2023, %v2008
    %v2046 = vmul.f32 %v2030, %v2008
    %v2047 = vmul.f32 %v2037, %v2008
    %v2048 = vmul.f32 %v2044, %v2008
    %v2049 = vmul.f32 %v2009, %v2009
    %v2050 = vmul.f32 %v2010, %v2010
    %v2051 = vmul.f32 %v2011, %v2011
    %v2052 = vmul.f32 %v2012, %v2012
    %v2053 = vsub.f32 %v2045, %v2049
    %v2054 = vsub.f32 %v2046, %v2050
    %v2055 = vsub.f32 %v2047, %v2051
    %v2056 = vsub.f32 %v2048, %v2052
    %v2057 = vmax.f32 %v2053, 0.0
    %v2058 = vmax.f32 %v2054, 0.0
    %v2059 = vmax.f32 %v2055, 0.0
    %v2060 = vmax.f32 %v2056, 0.0
    %v2061 = vsub.f32 %v1809, %v2009
    %v2062 = vsub.f32 %v1811, %v2010
    %v2063 = vsub.f32 %v1973, %v2011
    %v2064 = vsub.f32 %v1975, %v2012
    %v2065 = vadd.f32 %v2057, 1e-05
    %v2066 = vadd.f32 %v2058, 1e-05
    %v2067 = vadd.f32 %v2059, 1e-05
    %v2068 = vadd.f32 %v2060, 1e-05
    %v2069 = vrsqrt.pop %v2065
    %v2070 = vrsqrt.pop %v2066
    %v2071 = vrsqrt.pop %v2067
    %v2072 = vrsqrt.pop %v2068
    %v2073 = vmul.f32 %v2061, %v2069
    %v2074 = vmul.f32 %v2062, %v2070
    %v2075 = vmul.f32 %v2063, %v2071
    %v2076 = vmul.f32 %v2064, %v2072
    %v2077 = vmax.f32 %v2073, 0.0
    %v2078 = vmax.f32 %v2074, 0.0
    %v2079 = vmax.f32 %v2075, 0.0
    %v2080 = vmax.f32 %v2076, 0.0
    %v2081 = vpack.c.bf16 %v2077, %v2077
    %v2082 = vpack.c.bf16 %v2078, %v2078
    %v2083 = vpack.c.bf16 %v2079, %v2079
    %v2084 = vpack.c.bf16 %v2080, %v2080
    %v2085 = vld [vmem:[%s3] sm:$0xff]
    %v2086 = vld [vmem:[%s3 + $0x8] sm:$0xff]
    %v2087 = vld [vmem:[%s3 + $0x10] sm:$0xff]
    %v2088 = vld [vmem:[%s3 + $0x18] sm:$0xff]
    %v2089 = vld [vmem:[%s3 + $0x20] sm:$0xff]
    %v2090 = vld [vmem:[%s3 + $0x28] sm:$0xff]
    %v2091 = vld [vmem:[%s3 + $0x30] sm:$0xff]
    %v2092 = vld [vmem:[%s3 + $0x38] sm:$0xff]
    %v2093 = vld [vmem:[%s3 + $0x40] sm:$0xff]
    %v2094 = vld [vmem:[%s3 + $0x48] sm:$0xff]
    %v2095 = vld [vmem:[%s3 + $0x50] sm:$0xff]
    %v2096 = vld [vmem:[%s3 + $0x58] sm:$0xff]
    %v2097 = vld [vmem:[%s3 + $0x60] sm:$0xff]
    %v2098 = vld [vmem:[%s3 + $0x68] sm:$0xff]
    %v2099 = vld [vmem:[%s3 + $0x70] sm:$0xff]
    %v2100 = vld [vmem:[%s3 + $0x78] sm:$0xff]
    %v2101 = vld [vmem:[%s3 + $0x80] sm:$0xff]
    %v2102 = vld [vmem:[%s3 + $0x88] sm:$0xff]
    %v2103 = vld [vmem:[%s3 + $0x90] sm:$0xff]
    %v2104 = vld [vmem:[%s3 + $0x98] sm:$0xff]
    %v2105 = vld [vmem:[%s3 + $0xa0] sm:$0xff]
    %v2106 = vld [vmem:[%s3 + $0xa8] sm:$0xff]
    %v2107 = vld [vmem:[%s3 + $0xb0] sm:$0xff]
    %v2108 = vld [vmem:[%s3 + $0xb8] sm:$0xff]
    %v2109 = vld [vmem:[%s3 + $0xc0] sm:$0xff]
    %v2110 = vld [vmem:[%s3 + $0xc8] sm:$0xff]
    %v2111 = vld [vmem:[%s3 + $0xd0] sm:$0xff]
    %v2112 = vld [vmem:[%s3 + $0xd8] sm:$0xff]
    %v2113 = vld [vmem:[%s3 + $0xe0] sm:$0xff]
    %v2114 = vld [vmem:[%s3 + $0xe8] sm:$0xff]
    %v2115 = vld [vmem:[%s3 + $0xf0] sm:$0xff]
    %v2116 = vld [vmem:[%s3 + $0xf8] sm:$0xff]
    %v2117 = vld [vmem:[%s3 + $0x100] sm:$0xff]
    %v2118 = vld [vmem:[%s3 + $0x108] sm:$0xff]
    %v2119 = vld [vmem:[%s3 + $0x110] sm:$0xff]
    %v2120 = vld [vmem:[%s3 + $0x118] sm:$0xff]
    %v2121 = vld [vmem:[%s3 + $0x120] sm:$0xff]
    %v2122 = vld [vmem:[%s3 + $0x128] sm:$0xff]
    %v2123 = vld [vmem:[%s3 + $0x130] sm:$0xff]
    %v2124 = vld [vmem:[%s3 + $0x138] sm:$0xff]
    %v2125 = vld [vmem:[%s3 + $0x140] sm:$0xff]
    %v2126 = vld [vmem:[%s3 + $0x148] sm:$0xff]
    %v2127 = vld [vmem:[%s3 + $0x150] sm:$0xff]
    %v2128 = vld [vmem:[%s3 + $0x158] sm:$0xff]
    %v2129 = vld [vmem:[%s3 + $0x160] sm:$0xff]
    %v2130 = vld [vmem:[%s3 + $0x168] sm:$0xff]
    %v2131 = vld [vmem:[%s3 + $0x170] sm:$0xff]
    %v2132 = vld [vmem:[%s3 + $0x178] sm:$0xff]
    %v2133 = vld [vmem:[%s3 + $0x180] sm:$0xff]
    %v2134 = vld [vmem:[%s3 + $0x188] sm:$0xff]
    %v2135 = vld [vmem:[%s3 + $0x190] sm:$0xff]
    %v2136 = vld [vmem:[%s3 + $0x198] sm:$0xff]
    %v2137 = vld [vmem:[%s3 + $0x1a0] sm:$0xff]
    %v2138 = vld [vmem:[%s3 + $0x1a8] sm:$0xff]
    %v2139 = vld [vmem:[%s3 + $0x1b0] sm:$0xff]
    %v2140 = vld [vmem:[%s3 + $0x1b8] sm:$0xff]
    %v2141 = vld [vmem:[%s3 + $0x1c0] sm:$0xff]
    %v2142 = vld [vmem:[%s3 + $0x1c8] sm:$0xff]
    %v2143 = vld [vmem:[%s3 + $0x1d0] sm:$0xff]
    %v2144 = vld [vmem:[%s3 + $0x1d8] sm:$0xff]
    %v2145 = vld [vmem:[%s3 + $0x1e0] sm:$0xff]
    %v2146 = vld [vmem:[%s3 + $0x1e8] sm:$0xff]
    %v2147 = vld [vmem:[%s3 + $0x1f0] sm:$0xff]
    %v2148 = vld [vmem:[%s3 + $0x1f8] sm:$0xff]
    %v2213 = vunpack.c.l.b16 %v2085
    %v2214 = vunpack.c.h.b16 %v2085
    %v2215 = vunpack.c.l.b16 %v2086
    %v2216 = vunpack.c.h.b16 %v2086
    %v2217 = vunpack.c.l.b16 %v2087
    %v2218 = vunpack.c.h.b16 %v2087
    %v2219 = vunpack.c.l.b16 %v2088
    %v2220 = vunpack.c.h.b16 %v2088
    %v2221 = vunpack.c.l.b16 %v2089
    %v2222 = vunpack.c.h.b16 %v2089
    %v2223 = vunpack.c.l.b16 %v2090
    %v2224 = vunpack.c.h.b16 %v2090
    %v2225 = vunpack.c.l.b16 %v2091
    %v2226 = vunpack.c.h.b16 %v2091
    %v2227 = vunpack.c.l.b16 %v2092
    %v2228 = vunpack.c.h.b16 %v2092
    %v2229 = vunpack.c.l.b16 %v2093
    %v2230 = vunpack.c.h.b16 %v2093
    %v2231 = vunpack.c.l.b16 %v2094
    %v2232 = vunpack.c.h.b16 %v2094
    %v2233 = vunpack.c.l.b16 %v2095
    %v2234 = vunpack.c.h.b16 %v2095
    %v2235 = vunpack.c.l.b16 %v2096
    %v2236 = vunpack.c.h.b16 %v2096
    %v2237 = vunpack.c.l.b16 %v2097
    %v2238 = vunpack.c.h.b16 %v2097
    %v2239 = vunpack.c.l.b16 %v2098
    %v2240 = vunpack.c.h.b16 %v2098
    %v2241 = vunpack.c.l.b16 %v2099
    %v2242 = vunpack.c.h.b16 %v2099
    %v2243 = vunpack.c.l.b16 %v2100
    %v2244 = vunpack.c.h.b16 %v2100
    %v2245 = vunpack.c.l.b16 %v2101
    %v2246 = vunpack.c.h.b16 %v2101
    %v2247 = vunpack.c.l.b16 %v2102
    %v2248 = vunpack.c.h.b16 %v2102
    %v2249 = vunpack.c.l.b16 %v2103
    %v2250 = vunpack.c.h.b16 %v2103
    %v2251 = vunpack.c.l.b16 %v2104
    %v2252 = vunpack.c.h.b16 %v2104
    %v2253 = vunpack.c.l.b16 %v2105
    %v2254 = vunpack.c.h.b16 %v2105
    %v2255 = vunpack.c.l.b16 %v2106
    %v2256 = vunpack.c.h.b16 %v2106
    %v2257 = vunpack.c.l.b16 %v2107
    %v2258 = vunpack.c.h.b16 %v2107
    %v2259 = vunpack.c.l.b16 %v2108
    %v2260 = vunpack.c.h.b16 %v2108
    %v2261 = vunpack.c.l.b16 %v2109
    %v2262 = vunpack.c.h.b16 %v2109
    %v2263 = vunpack.c.l.b16 %v2110
    %v2264 = vunpack.c.h.b16 %v2110
    %v2265 = vunpack.c.l.b16 %v2111
    %v2266 = vunpack.c.h.b16 %v2111
    %v2267 = vunpack.c.l.b16 %v2112
    %v2268 = vunpack.c.h.b16 %v2112
    %v2269 = vunpack.c.l.b16 %v2113
    %v2270 = vunpack.c.h.b16 %v2113
    %v2271 = vunpack.c.l.b16 %v2114
    %v2272 = vunpack.c.h.b16 %v2114
    %v2273 = vunpack.c.l.b16 %v2115
    %v2274 = vunpack.c.h.b16 %v2115
    %v2275 = vunpack.c.l.b16 %v2116
    %v2276 = vunpack.c.h.b16 %v2116
    %v2277 = vunpack.c.l.b16 %v2117
    %v2278 = vunpack.c.h.b16 %v2117
    %v2279 = vunpack.c.l.b16 %v2118
    %v2280 = vunpack.c.h.b16 %v2118
    %v2281 = vunpack.c.l.b16 %v2119
    %v2282 = vunpack.c.h.b16 %v2119
    %v2283 = vunpack.c.l.b16 %v2120
    %v2284 = vunpack.c.h.b16 %v2120
    %v2285 = vunpack.c.l.b16 %v2121
    %v2286 = vunpack.c.h.b16 %v2121
    %v2287 = vunpack.c.l.b16 %v2122
    %v2288 = vunpack.c.h.b16 %v2122
    %v2289 = vunpack.c.l.b16 %v2123
    %v2290 = vunpack.c.h.b16 %v2123
    %v2291 = vunpack.c.l.b16 %v2124
    %v2292 = vunpack.c.h.b16 %v2124
    %v2293 = vunpack.c.l.b16 %v2125
    %v2294 = vunpack.c.h.b16 %v2125
    %v2295 = vunpack.c.l.b16 %v2126
    %v2296 = vunpack.c.h.b16 %v2126
    %v2297 = vunpack.c.l.b16 %v2127
    %v2298 = vunpack.c.h.b16 %v2127
    %v2299 = vunpack.c.l.b16 %v2128
    %v2300 = vunpack.c.h.b16 %v2128
    %v2301 = vunpack.c.l.b16 %v2129
    %v2302 = vunpack.c.h.b16 %v2129
    %v2303 = vunpack.c.l.b16 %v2130
    %v2304 = vunpack.c.h.b16 %v2130
    %v2305 = vunpack.c.l.b16 %v2131
    %v2306 = vunpack.c.h.b16 %v2131
    %v2307 = vunpack.c.l.b16 %v2132
    %v2308 = vunpack.c.h.b16 %v2132
    %v2309 = vunpack.c.l.b16 %v2133
    %v2310 = vunpack.c.h.b16 %v2133
    %v2311 = vunpack.c.l.b16 %v2134
    %v2312 = vunpack.c.h.b16 %v2134
    %v2313 = vunpack.c.l.b16 %v2135
    %v2314 = vunpack.c.h.b16 %v2135
    %v2315 = vunpack.c.l.b16 %v2136
    %v2316 = vunpack.c.h.b16 %v2136
    %v2317 = vunpack.c.l.b16 %v2137
    %v2318 = vunpack.c.h.b16 %v2137
    %v2319 = vunpack.c.l.b16 %v2138
    %v2320 = vunpack.c.h.b16 %v2138
    %v2321 = vunpack.c.l.b16 %v2139
    %v2322 = vunpack.c.h.b16 %v2139
    %v2323 = vunpack.c.l.b16 %v2140
    %v2324 = vunpack.c.h.b16 %v2140
    %v2325 = vunpack.c.l.b16 %v2141
    %v2326 = vunpack.c.h.b16 %v2141
    %v2327 = vunpack.c.l.b16 %v2142
    %v2328 = vunpack.c.h.b16 %v2142
    %v2329 = vunpack.c.l.b16 %v2143
    %v2330 = vunpack.c.h.b16 %v2143
    %v2331 = vunpack.c.l.b16 %v2144
    %v2332 = vunpack.c.h.b16 %v2144
    %v2333 = vunpack.c.l.b16 %v2145
    %v2334 = vunpack.c.h.b16 %v2145
    %v2335 = vunpack.c.l.b16 %v2146
    %v2336 = vunpack.c.h.b16 %v2146
    %v2337 = vunpack.c.l.b16 %v2147
    %v2338 = vunpack.c.h.b16 %v2147
    %v2339 = vunpack.c.l.b16 %v2148
    %v2340 = vunpack.c.h.b16 %v2148
    %v2341 = vpack.c.b16 %v2215, %v2213
    %v2342 = vpack.c.b16 %v2216, %v2214
    %v2343 = vpack.c.b16 %v2219, %v2217
    %v2344 = vpack.c.b16 %v2220, %v2218
    %v2345 = vpack.c.b16 %v2223, %v2221
    %v2346 = vpack.c.b16 %v2224, %v2222
    %v2347 = vpack.c.b16 %v2227, %v2225
    %v2348 = vpack.c.b16 %v2228, %v2226
    %v2349 = vpack.c.b16 %v2231, %v2229
    %v2350 = vpack.c.b16 %v2232, %v2230
    %v2351 = vpack.c.b16 %v2235, %v2233
    %v2352 = vpack.c.b16 %v2236, %v2234
    %v2353 = vpack.c.b16 %v2239, %v2237
    %v2354 = vpack.c.b16 %v2240, %v2238
    %v2355 = vpack.c.b16 %v2243, %v2241
    %v2356 = vpack.c.b16 %v2244, %v2242
    %v2357 = vpack.c.b16 %v2247, %v2245
    %v2358 = vpack.c.b16 %v2248, %v2246
    %v2359 = vpack.c.b16 %v2251, %v2249
    %v2360 = vpack.c.b16 %v2252, %v2250
    %v2361 = vpack.c.b16 %v2255, %v2253
    %v2362 = vpack.c.b16 %v2256, %v2254
    %v2363 = vpack.c.b16 %v2259, %v2257
    %v2364 = vpack.c.b16 %v2260, %v2258
    %v2365 = vpack.c.b16 %v2263, %v2261
    %v2366 = vpack.c.b16 %v2264, %v2262
    %v2367 = vpack.c.b16 %v2267, %v2265
    %v2368 = vpack.c.b16 %v2268, %v2266
    %v2369 = vpack.c.b16 %v2271, %v2269
    %v2370 = vpack.c.b16 %v2272, %v2270
    %v2371 = vpack.c.b16 %v2275, %v2273
    %v2372 = vpack.c.b16 %v2276, %v2274
    %v2373 = vpack.c.b16 %v2279, %v2277
    %v2374 = vpack.c.b16 %v2280, %v2278
    %v2375 = vpack.c.b16 %v2283, %v2281
    %v2376 = vpack.c.b16 %v2284, %v2282
    %v2377 = vpack.c.b16 %v2287, %v2285
    %v2378 = vpack.c.b16 %v2288, %v2286
    %v2379 = vpack.c.b16 %v2291, %v2289
    %v2380 = vpack.c.b16 %v2292, %v2290
    %v2381 = vpack.c.b16 %v2295, %v2293
    %v2382 = vpack.c.b16 %v2296, %v2294
    %v2383 = vpack.c.b16 %v2299, %v2297
    %v2384 = vpack.c.b16 %v2300, %v2298
    %v2385 = vpack.c.b16 %v2303, %v2301
    %v2386 = vpack.c.b16 %v2304, %v2302
    %v2387 = vpack.c.b16 %v2307, %v2305
    %v2388 = vpack.c.b16 %v2308, %v2306
    %v2389 = vpack.c.b16 %v2311, %v2309
    %v2390 = vpack.c.b16 %v2312, %v2310
    %v2391 = vpack.c.b16 %v2315, %v2313
    %v2392 = vpack.c.b16 %v2316, %v2314
    %v2393 = vpack.c.b16 %v2319, %v2317
    %v2394 = vpack.c.b16 %v2320, %v2318
    %v2395 = vpack.c.b16 %v2323, %v2321
    %v2396 = vpack.c.b16 %v2324, %v2322
    %v2397 = vpack.c.b16 %v2327, %v2325
    %v2398 = vpack.c.b16 %v2328, %v2326
    %v2399 = vpack.c.b16 %v2331, %v2329
    %v2400 = vpack.c.b16 %v2332, %v2330
    %v2401 = vpack.c.b16 %v2335, %v2333
    %v2402 = vpack.c.b16 %v2336, %v2334
    %v2403 = vpack.c.b16 %v2339, %v2337
    %v2404 = vpack.c.b16 %v2340, %v2338
    %2469 = vmatprep.subr.bf16.mxu0 %v2356
    %2470 = vmatpush1.bf16.msra.mxu0 %v2355
    %2471 = vmatprep.subr.bf16.mxu0 %v2354
    %2472 = vmatpush1.bf16.msra.mxu0 %v2353
    %2473 = vmatprep.subr.bf16.mxu0 %v2352
    %2474 = vmatpush1.bf16.msra.mxu0 %v2351
    %2475 = vmatprep.subr.bf16.mxu0 %v2350
    %2476 = vmatpush1.bf16.msra.mxu0 %v2349
    %2477 = vmatprep.subr.bf16.mxu0 %v2348
    %2478 = vmatpush1.bf16.msra.mxu0 %v2347
    %2479 = vmatprep.subr.bf16.mxu0 %v2346
    %2480 = vmatpush1.bf16.msra.mxu0 %v2345
    %2481 = vmatprep.subr.bf16.mxu0 %v2344
    %2482 = vmatpush1.bf16.msra.mxu0 %v2343
    %2483 = vmatprep.subr.bf16.mxu0 %v2342
    %2484 = vmatpush1.bf16.msra.mxu0 %v2341
    %2485 = vmatprep.subr.bf16.mxu0 %v2372
    %2486 = vmatpush2.bf16.msra.mxu0 %v2371
    %2487 = vmatprep.subr.bf16.mxu0 %v2370
    %2488 = vmatpush2.bf16.msra.mxu0 %v2369
    %2489 = vmatprep.subr.bf16.mxu0 %v2368
    %2490 = vmatpush2.bf16.msra.mxu0 %v2367
    %2491 = vmatprep.subr.bf16.mxu0 %v2366
    %2492 = vmatpush2.bf16.msra.mxu0 %v2365
    %2493 = vmatprep.subr.bf16.mxu0 %v2364
    %2494 = vmatpush2.bf16.msra.mxu0 %v2363
    %2495 = vmatprep.subr.bf16.mxu0 %v2362
    %2496 = vmatpush2.bf16.msra.mxu0 %v2361
    %2497 = vmatprep.subr.bf16.mxu0 %v2360
    %2498 = vmatpush2.bf16.msra.mxu0 %v2359
    %2499 = vmatprep.subr.bf16.mxu0 %v2358
    %2500 = vmatpush2.bf16.msra.mxu0 %v2357
    %2501 = vmatprep.mubr.bf16.mxu0 %v2082
    %2502 = vmatmul.mubr.bf16.gmra.mxu0 %v2081
    %v2503 = vpop.f32.mrf.mxu0
    %v2504 = vadd.f32 0.0, %v2503
    %v2505 = vpop.f32.mrf.mxu0
    %v2506 = vadd.f32 0.0, %v2505
    %v2507 = vpop.f32.mrf.mxu0
    %v2508 = vpop.f32.mrf.mxu0
    %2509 = vdwg.mxu0
    %2510 = vmatprep.subr.bf16.mxu0 %v2388
    %2511 = vmatpush1.bf16.msra.mxu0 %v2387
    %2512 = vmatprep.subr.bf16.mxu0 %v2386
    %2513 = vmatpush1.bf16.msra.mxu0 %v2385
    %2514 = vmatprep.subr.bf16.mxu0 %v2384
    %2515 = vmatpush1.bf16.msra.mxu0 %v2383
    %2516 = vmatprep.subr.bf16.mxu0 %v2382
    %2517 = vmatpush1.bf16.msra.mxu0 %v2381
    %2518 = vmatprep.subr.bf16.mxu0 %v2380
    %2519 = vmatpush1.bf16.msra.mxu0 %v2379
    %2520 = vmatprep.subr.bf16.mxu0 %v2378
    %2521 = vmatpush1.bf16.msra.mxu0 %v2377
    %2522 = vmatprep.subr.bf16.mxu0 %v2376
    %2523 = vmatpush1.bf16.msra.mxu0 %v2375
    %2524 = vmatprep.subr.bf16.mxu0 %v2374
    %2525 = vmatpush1.bf16.msra.mxu0 %v2373
    %2526 = vmatprep.subr.bf16.mxu0 %v2404
    %2527 = vmatpush2.bf16.msra.mxu0 %v2403
    %2528 = vmatprep.subr.bf16.mxu0 %v2402
    %2529 = vmatpush2.bf16.msra.mxu0 %v2401
    %2530 = vmatprep.subr.bf16.mxu0 %v2400
    %2531 = vmatpush2.bf16.msra.mxu0 %v2399
    %2532 = vmatprep.subr.bf16.mxu0 %v2398
    %2533 = vmatpush2.bf16.msra.mxu0 %v2397
    %2534 = vmatprep.subr.bf16.mxu0 %v2396
    %2535 = vmatpush2.bf16.msra.mxu0 %v2395
    %2536 = vmatprep.subr.bf16.mxu0 %v2394
    %2537 = vmatpush2.bf16.msra.mxu0 %v2393
    %2538 = vmatprep.subr.bf16.mxu0 %v2392
    %2539 = vmatpush2.bf16.msra.mxu0 %v2391
    %2540 = vmatprep.subr.bf16.mxu0 %v2390
    %2541 = vmatpush2.bf16.msra.mxu0 %v2389
    %2542 = vmatprep.mubr.bf16.mxu0 %v2084
    %2543 = vmatmul.mubr.bf16.gmra.mxu0 %v2083
    %v2544 = vpop.f32.mrf.mxu0
    %v2545 = vadd.f32 %v2504, %v2544
    %v2546 = vpop.f32.mrf.mxu0
    %v2547 = vadd.f32 %v2506, %v2546
    %v2548 = vpop.f32.mrf.mxu0
    %v2549 = vpop.f32.mrf.mxu0
    %2550 = vdwg.mxu0
    %v2551 = vsel %vm1979, %v2545, 0.0
    %v2552 = vrot.slane %v2551, 4
    %v2553 = vadd.f32 %v2551, %v2552
    %v2554 = vrot.slane %v2553, 2
    %v2555 = vadd.f32 %v2553, %v2554
    %v2556 = vrot.slane %v2555, 1
    %v2557 = vadd.f32 %v2555, %v2556
    %v2558 = vsel %vm1979, %v2547, 0.0
    %v2559 = vrot.slane %v2558, 4
    %v2560 = vadd.f32 %v2558, %v2559
    %v2561 = vrot.slane %v2560, 2
    %v2562 = vadd.f32 %v2560, %v2561
    %v2563 = vrot.slane %v2562, 1
    %v2564 = vadd.f32 %v2562, %v2563
    %v2565 = vmul.f32 %v2557, %v2008
    %v2566 = vmul.f32 %v2564, %v2008
    %v2567 = vmul.f32 %v2545, %v2545
    %v2568 = vmul.f32 %v2547, %v2547
    %v2569 = vsel %vm1979, %v2567, 0.0
    %v2570 = vrot.slane %v2569, 4
    %v2571 = vadd.f32 %v2569, %v2570
    %v2572 = vrot.slane %v2571, 2
    %v2573 = vadd.f32 %v2571, %v2572
    %v2574 = vrot.slane %v2573, 1
    %v2575 = vadd.f32 %v2573, %v2574
    %v2576 = vsel %vm1979, %v2568, 0.0
    %v2577 = vrot.slane %v2576, 4
    %v2578 = vadd.f32 %v2576, %v2577
    %v2579 = vrot.slane %v2578, 2
    %v2580 = vadd.f32 %v2578, %v2579
    %v2581 = vrot.slane %v2580, 1
    %v2582 = vadd.f32 %v2580, %v2581
    %v2583 = vmul.f32 %v2575, %v2008
    %v2584 = vmul.f32 %v2582, %v2008
    %v2585 = vmul.f32 %v2565, %v2565
    %v2586 = vmul.f32 %v2566, %v2566
    %v2587 = vsub.f32 %v2583, %v2585
    %v2588 = vsub.f32 %v2584, %v2586
    %v2589 = vmax.f32 %v2587, 0.0
    %v2590 = vmax.f32 %v2588, 0.0
    %v2591 = vsub.f32 %v2545, %v2565
    %v2592 = vsub.f32 %v2547, %v2566
    %v2593 = vadd.f32 %v2589, 1e-05
    %v2594 = vadd.f32 %v2590, 1e-05
    %v2595 = vrsqrt.pop %v2593
    %v2596 = vrsqrt.pop %v2594
    %v2597 = vmul.f32 %v2591, %v2595
    %v2598 = vmul.f32 %v2592, %v2596
    %v2599 = vmax.f32 %v2597, 0.0
    %v2600 = vmax.f32 %v2598, 0.0
    %v2601 = vpack.c.bf16 %v2599, %v2599
    %v2602 = vpack.c.bf16 %v2600, %v2600
    %v2603 = vld [vmem:[%s4] sm:$0xf]
    %v2604 = vld [vmem:[%s4 + $0x4] sm:$0xf]
    %v2605 = vld [vmem:[%s4 + $0x8] sm:$0xf]
    %v2606 = vld [vmem:[%s4 + $0xc] sm:$0xf]
    %v2607 = vld [vmem:[%s4 + $0x10] sm:$0xf]
    %v2608 = vld [vmem:[%s4 + $0x14] sm:$0xf]
    %v2609 = vld [vmem:[%s4 + $0x18] sm:$0xf]
    %v2610 = vld [vmem:[%s4 + $0x1c] sm:$0xf]
    %v2611 = vld [vmem:[%s4 + $0x20] sm:$0xf]
    %v2612 = vld [vmem:[%s4 + $0x24] sm:$0xf]
    %v2613 = vld [vmem:[%s4 + $0x28] sm:$0xf]
    %v2614 = vld [vmem:[%s4 + $0x2c] sm:$0xf]
    %v2615 = vld [vmem:[%s4 + $0x30] sm:$0xf]
    %v2616 = vld [vmem:[%s4 + $0x34] sm:$0xf]
    %v2617 = vld [vmem:[%s4 + $0x38] sm:$0xf]
    %v2618 = vld [vmem:[%s4 + $0x3c] sm:$0xf]
    %v2619 = vld [vmem:[%s4 + $0x40] sm:$0xf]
    %v2620 = vld [vmem:[%s4 + $0x44] sm:$0xf]
    %v2621 = vld [vmem:[%s4 + $0x48] sm:$0xf]
    %v2622 = vld [vmem:[%s4 + $0x4c] sm:$0xf]
    %v2623 = vld [vmem:[%s4 + $0x50] sm:$0xf]
    %v2624 = vld [vmem:[%s4 + $0x54] sm:$0xf]
    %v2625 = vld [vmem:[%s4 + $0x58] sm:$0xf]
    %v2626 = vld [vmem:[%s4 + $0x5c] sm:$0xf]
    %v2627 = vld [vmem:[%s4 + $0x60] sm:$0xf]
    %v2628 = vld [vmem:[%s4 + $0x64] sm:$0xf]
    %v2629 = vld [vmem:[%s4 + $0x68] sm:$0xf]
    %v2630 = vld [vmem:[%s4 + $0x6c] sm:$0xf]
    %v2631 = vld [vmem:[%s4 + $0x70] sm:$0xf]
    %v2632 = vld [vmem:[%s4 + $0x74] sm:$0xf]
    %v2633 = vld [vmem:[%s4 + $0x78] sm:$0xf]
    %v2634 = vld [vmem:[%s4 + $0x7c] sm:$0xf]
    %v2635 = vld [vmem:[%s5] sm:$0x1]
    %v2637 = vlaneseq
    %v2638 = vshrl.u32 %v2637, 7
    %v2639 = vsub.s32 0, %v2638
    %v2640 = vrot.slane %v2635, %v2639
    %v2674 = vunpack.c.l.b16 %v2603
    %v2675 = vunpack.c.l.b16 %v2604
    %v2676 = vunpack.c.l.b16 %v2605
    %v2677 = vunpack.c.l.b16 %v2606
    %v2678 = vunpack.c.l.b16 %v2607
    %v2679 = vunpack.c.l.b16 %v2608
    %v2680 = vunpack.c.l.b16 %v2609
    %v2681 = vunpack.c.l.b16 %v2610
    %v2682 = vunpack.c.l.b16 %v2611
    %v2683 = vunpack.c.l.b16 %v2612
    %v2684 = vunpack.c.l.b16 %v2613
    %v2685 = vunpack.c.l.b16 %v2614
    %v2686 = vunpack.c.l.b16 %v2615
    %v2687 = vunpack.c.l.b16 %v2616
    %v2688 = vunpack.c.l.b16 %v2617
    %v2689 = vunpack.c.l.b16 %v2618
    %v2690 = vunpack.c.l.b16 %v2619
    %v2691 = vunpack.c.l.b16 %v2620
    %v2692 = vunpack.c.l.b16 %v2621
    %v2693 = vunpack.c.l.b16 %v2622
    %v2694 = vunpack.c.l.b16 %v2623
    %v2695 = vunpack.c.l.b16 %v2624
    %v2696 = vunpack.c.l.b16 %v2625
    %v2697 = vunpack.c.l.b16 %v2626
    %v2698 = vunpack.c.l.b16 %v2627
    %v2699 = vunpack.c.l.b16 %v2628
    %v2700 = vunpack.c.l.b16 %v2629
    %v2701 = vunpack.c.l.b16 %v2630
    %v2702 = vunpack.c.l.b16 %v2631
    %v2703 = vunpack.c.l.b16 %v2632
    %v2704 = vunpack.c.l.b16 %v2633
    %v2705 = vunpack.c.l.b16 %v2634
    %v2706 = vpack.c.b16 %v2675, %v2674
    %v2707 = vpack.c.b16 %v2677, %v2676
    %v2708 = vpack.c.b16 %v2679, %v2678
    %v2709 = vpack.c.b16 %v2681, %v2680
    %v2710 = vpack.c.b16 %v2683, %v2682
    %v2711 = vpack.c.b16 %v2685, %v2684
    %v2712 = vpack.c.b16 %v2687, %v2686
    %v2713 = vpack.c.b16 %v2689, %v2688
    %v2714 = vpack.c.b16 %v2691, %v2690
    %v2715 = vpack.c.b16 %v2693, %v2692
    %v2716 = vpack.c.b16 %v2695, %v2694
    %v2717 = vpack.c.b16 %v2697, %v2696
    %v2718 = vpack.c.b16 %v2699, %v2698
    %v2719 = vpack.c.b16 %v2701, %v2700
    %v2720 = vpack.c.b16 %v2703, %v2702
    %v2721 = vpack.c.b16 %v2705, %v2704
    %2738 = vmatprep.subr.bf16.mxu0 0
    %2739 = vmatpush1.bf16.msra.mxu0 %v2713
    %2740 = vmatprep.subr.bf16.mxu0 0
    %2741 = vmatpush1.bf16.msra.mxu0 %v2712
    %2742 = vmatprep.subr.bf16.mxu0 0
    %2743 = vmatpush1.bf16.msra.mxu0 %v2711
    %2744 = vmatprep.subr.bf16.mxu0 0
    %2745 = vmatpush1.bf16.msra.mxu0 %v2710
    %2746 = vmatprep.subr.bf16.mxu0 0
    %2747 = vmatpush1.bf16.msra.mxu0 %v2709
    %2748 = vmatprep.subr.bf16.mxu0 0
    %2749 = vmatpush1.bf16.msra.mxu0 %v2708
    %2750 = vmatprep.subr.bf16.mxu0 0
    %2751 = vmatpush1.bf16.msra.mxu0 %v2707
    %2752 = vmatprep.subr.bf16.mxu0 0
    %2753 = vmatpush1.bf16.msra.mxu0 %v2706
    %2754 = vmatprep.subr.bf16.mxu0 0
    %2755 = vmatpush2.bf16.msra.mxu0 %v2721
    %2756 = vmatprep.subr.bf16.mxu0 0
    %2757 = vmatpush2.bf16.msra.mxu0 %v2720
    %2758 = vmatprep.subr.bf16.mxu0 0
    %2759 = vmatpush2.bf16.msra.mxu0 %v2719
    %2760 = vmatprep.subr.bf16.mxu0 0
    %2761 = vmatpush2.bf16.msra.mxu0 %v2718
    %2762 = vmatprep.subr.bf16.mxu0 0
    %2763 = vmatpush2.bf16.msra.mxu0 %v2717
    %2764 = vmatprep.subr.bf16.mxu0 0
    %2765 = vmatpush2.bf16.msra.mxu0 %v2716
    %2766 = vmatprep.subr.bf16.mxu0 0
    %2767 = vmatpush2.bf16.msra.mxu0 %v2715
    %2768 = vmatprep.subr.bf16.mxu0 0
    %2769 = vmatpush2.bf16.msra.mxu0 %v2714
    %2770 = vmatprep.mubr.bf16.mxu0 %v2602
    %2771 = vmatmul.mubr.bf16.gmra.mxu0 %v2601
    %v2772 = vpop.f32.mrf.mxu0
    %v2773 = vadd.f32 %v2640, %v2772
    %v2774 = vpop.f32.mrf.mxu0
    %v2775 = vpop.f32.mrf.mxu0
    %v2776 = vpop.f32.mrf.mxu0
    %2777 = vdwg.mxu0
    %2778 = vst [vmem:[%s6] sm:$0x3] %v2773
    // Predicated region
    $region34: #{t_net_forward.7} parent=1 // pred_check
      _
    $region35: #{t_net_forward.7} parent=1 // pred_check_branch
      %2780 = sbr.rel (0) target = $region37
    $region36: #{t_net_forward.7} parent=1 // pred_region
      _
    $region37: #{t_net_forward.7} parent=1 // pred_fallthru
      _
    // Predicated region
    $region38: #{t_net_forward.7} parent=1 // pred_check
      _
    $region39: #{t_net_forward.7} parent=1 // pred_check_branch
      %2782 = sbr.rel (0) target = $region41
    $region40: #{t_net_forward.7} parent=1 // pred_region
      _
    $region41: #{t_net_forward.7} parent=1 // pred_fallthru
      _
    %2783 = vsyncpa [#allocation3], 1
    %2784 = vsyncpa [#allocation4], 1

</llo_original>
